<compile_context>
chip_gen: v5e
topology: v5e:2x2
jax: 0.10.0
libtpu: 0.0.40
codegen_flags: <defaults>
</compile_context>

<pallas_src>
import jax
import jax.numpy as jnp
from jax.experimental import pallas as pl
from jax.experimental.pallas import tpu as pltpu

K = 3         # conv kernel size used by the placeholder CNN feature extractors
F_RAW = 450   # per-CNN feature width (450 + 450 = 900 == MLP.l0 in_features)
F_PAD = 512   # 450 padded to a lane multiple of 128
H_RAW = 300   # MLP hidden width
H_PAD = 384   # 300 padded to a lane multiple of 128


# ---------------------------------------------------------------------------
# Fused forward kernel: CNN_b + CNN_gc (placeholder Conv1d-valid + ReLU +
# global max pool) -> concat -> Linear+sigmoid x3. All operands VMEM-resident.
# TODO(synk): CNN_BERT / CNN_GC class definitions are missing from the reference
#             module; swap the conv+relu+maxpool placeholder once they are known.
# TODO(synk): original MLP.forward contains print(x)/quit() debug statements;
#             they are omitted and the intended sigmoid MLP path is implemented.
# TODO(synk): at realistic batch sizes, add a leading batch grid axis marked
#             "parallel" (2 TCs on v7x); at B=2 full fusion is faster.
# ---------------------------------------------------------------------------
def _fused_kernel(xb_ref, xg_ref,
                  wb_ref, bb_ref, wg_ref, bg_ref,
                  w0_ref, b0_ref, w1_ref, b1_ref, w3_ref, b3_ref,
                  o_ref):
    B = xb_ref.shape[0]

    def cnn_block(x_ref, w_ref, b_ref):
        # x_ref: (B, L, C) bf16; w_ref: (K, C, F_PAD) bf16; b_ref: (1, F_PAD) f32
        Lo = x_ref.shape[1] - K + 1
        rows = []
        for b in range(B):                        # static python loop, B tiny
            acc = None
            for k in range(K):                    # valid conv == sum of K shifted matmuls
                xk = x_ref[b, k:k + Lo, :]        # (Lo, C) bf16
                wk = w_ref[k]                     # (C, F_PAD) bf16
                d = jnp.dot(xk, wk, preferred_element_type=jnp.float32)
                acc = d if acc is None else acc + d
            h = jnp.maximum(acc + b_ref[...], 0.0)           # ReLU in f32 (VPU)
            rows.append(jnp.max(h, axis=0, keepdims=True))   # global max pool over time
        return jnp.concatenate(rows, axis=0)                 # (B, F_PAD) f32

    feat_b = cnn_block(xb_ref, wb_ref, bb_ref)               # (B, 512)
    feat_g = cnn_block(xg_ref, wg_ref, bg_ref)               # (B, 512)
    feat = jnp.concatenate([feat_b, feat_g], axis=1)         # (B, 1024), torch.cat dim=1

    # MLP. Padded lanes carry zero weights/biases, so the sigmoid(0)=0.5 values in
    # padded hidden lanes never leak into real outputs (next-layer rows are zero).
    h0 = jax.nn.sigmoid(
        jnp.dot(feat.astype(jnp.bfloat16), w0_ref[...],
                preferred_element_type=jnp.float32) + b0_ref[...])
    h1 = jax.nn.sigmoid(
        jnp.dot(h0.astype(jnp.bfloat16), w1_ref[...],
                preferred_element_type=jnp.float32) + b1_ref[...])
    # Final Linear(300, 1): VPU broadcast-mul + lane reduce instead of an N=1 MXU pass.
    logit = jnp.sum(h1 * w3_ref[...], axis=-1, keepdims=True) + b3_ref[...]
    o_ref[...] = jax.nn.sigmoid(logit)


def _pad_to(a, shape):
    return jnp.pad(a, [(0, t - s) for s, t in zip(a.shape, shape)])


# ---------------------------------------------------------------------------
# SuggestionClassifier.forward
# ---------------------------------------------------------------------------
def suggestion_classifier(x, y, params):
    """x: (B, C_b, L_b), y: (B, C_g, L_g) in PyTorch NCW layout -> (B, 1) float32."""
    B = x.shape[0]
    # NCW -> NWC (time on sublanes, channels on lanes); bf16 inputs for the MXU.
    xb = jnp.transpose(x, (0, 2, 1)).astype(jnp.bfloat16)
    xg = jnp.transpose(y, (0, 2, 1)).astype(jnp.bfloat16)

    kb, cb, fb = params["cnn_b_w"].shape
    kg, cg, fg = params["cnn_gc_w"].shape
    assert kb == K and kg == K and fb == F_RAW and fg == F_RAW

    # --- zero-pad every lane-facing dim to a multiple of 128 (bf16 for MXU inputs,
    #     f32 for biases / the VPU final layer) ---
    wb = _pad_to(params["cnn_b_w"], (K, cb, F_PAD)).astype(jnp.bfloat16)
    wg = _pad_to(params["cnn_gc_w"], (K, cg, F_PAD)).astype(jnp.bfloat16)
    bb = _pad_to(params["cnn_b_b"].reshape(1, F_RAW), (1, F_PAD))
    bg = _pad_to(params["cnn_gc_b"].reshape(1, F_RAW), (1, F_PAD))

    # l0 rows must follow the padded concat layout [bert(450) | pad | gc(450) | pad].
    w0 = params["w0"]
    assert w0.shape == (2 * F_RAW, H_RAW)
    w0p = jnp.zeros((2 * F_PAD, H_PAD), jnp.float32)
    w0p = w0p.at[:F_RAW, :H_RAW].set(w0[:F_RAW])
    w0p = w0p.at[F_PAD:F_PAD + F_RAW, :H_RAW].set(w0[F_RAW:])
    w0p = w0p.astype(jnp.bfloat16)
    b0p = _pad_to(params["b0"].reshape(1, H_RAW), (1, H_PAD))

    w1p = _pad_to(params["w1"], (H_PAD, H_PAD)).astype(jnp.bfloat16)
    b1p = _pad_to(params["b1"].reshape(1, H_RAW), (1, H_PAD))

    w3p = _pad_to(params["w3"].reshape(1, H_RAW), (1, H_PAD))   # f32, VPU path
    b3p = params["b3"].reshape(1, 1)

    in_specs = [pl.BlockSpec(memory_space=pltpu.MemorySpace.VMEM) for _ in range(12)]
    return pl.pallas_call(
        _fused_kernel,
        out_shape=jax.ShapeDtypeStruct((B, 1), jnp.float32),
        in_specs=in_specs,
        out_specs=pl.BlockSpec(memory_space=pltpu.MemorySpace.VMEM),
    )(xb, xg, wb, bb, wg, bg, w0p, b0p, w1p, b1p, w3p, b3p)


if __name__ == "__main__":
    key = jax.random.PRNGKey(0)
    ks = jax.random.split(key, 12)

    B = 2
    C_b, L_b = 32, 16   # BERT-embedding-like channels / sequence length
    C_g, L_g = 16, 16   # GC-feature-like channels / sequence length

    x = jax.random.normal(ks[0], (B, C_b, L_b), jnp.float32)
    y = jax.random.normal(ks[1], (B, C_g, L_g), jnp.float32)

    params = {
        # Placeholder CNN weights stored as (K, C_in, F_out); if later imported from
        # PyTorch Conv1d (out, in, k), transpose to (k, in, out) to match this layout.
        "cnn_b_w": 0.10 * jax.random.normal(ks[2], (K, C_b, F_RAW), jnp.float32),
        "cnn_b_b": 0.10 * jax.random.normal(ks[3], (F_RAW,), jnp.float32),
        "cnn_gc_w": 0.10 * jax.random.normal(ks[4], (K, C_g, F_RAW), jnp.float32),
        "cnn_gc_b": 0.10 * jax.random.normal(ks[5], (F_RAW,), jnp.float32),
        # Linear weights stored as (in, out); biases 1-D.
        "w0": 0.05 * jax.random.normal(ks[6], (2 * F_RAW, H_RAW), jnp.float32),
        "b0": 0.05 * jax.random.normal(ks[7], (H_RAW,), jnp.float32),
        "w1": 0.05 * jax.random.normal(ks[8], (H_RAW, H_RAW), jnp.float32),
        "b1": 0.05 * jax.random.normal(ks[9], (H_RAW,), jnp.float32),
        "w3": 0.05 * jax.random.normal(ks[10], (H_RAW,), jnp.float32),
        "b3": 0.05 * jax.random.normal(ks[11], (1,), jnp.float32),
    }

    out = jax.jit(suggestion_classifier)(x, y, params)
    jax.block_until_ready(out)
    assert out.shape == (B, 1) and out.dtype == jnp.float32
    assert bool(jnp.all(jnp.isfinite(out)))
    print("KERNEL_OK")
</pallas_src>

<mosaic_0001>
module attributes {stable_mosaic.version = 11 : i64} {
  func.func @_fused_kernel(%arg0: memref<2x16x32xbf16, #tpu.memory_space<vmem>>, %arg1: memref<2x16x16xbf16, #tpu.memory_space<vmem>>, %arg2: memref<3x32x512xbf16, #tpu.memory_space<vmem>>, %arg3: memref<1x512xf32, #tpu.memory_space<vmem>>, %arg4: memref<3x16x512xbf16, #tpu.memory_space<vmem>>, %arg5: memref<1x512xf32, #tpu.memory_space<vmem>>, %arg6: memref<1024x384xbf16, #tpu.memory_space<vmem>>, %arg7: memref<1x384xf32, #tpu.memory_space<vmem>>, %arg8: memref<384x384xbf16, #tpu.memory_space<vmem>>, %arg9: memref<1x384xf32, #tpu.memory_space<vmem>>, %arg10: memref<1x384xf32, #tpu.memory_space<vmem>>, %arg11: memref<1x1xf32, #tpu.memory_space<vmem>>, %arg12: memref<2x1xf32, #tpu.memory_space<vmem>>) attributes {dimension_semantics = [], scalar_prefetch = 0 : i64, scratch_operands = 0 : i64, tpu.core_type = #tpu.core_type<tc>} {
    %c0 = arith.constant 0 : index
    %c0_0 = arith.constant 0 : index
    %c0_1 = arith.constant 0 : index
    %0 = vector.load %arg0[%c0, %c0_0, %c0_1] : memref<2x16x32xbf16, #tpu.memory_space<vmem>>, vector<1x14x32xbf16>
    %1 = vector.shape_cast %0 : vector<1x14x32xbf16> to vector<14x32xbf16>
    %c0_2 = arith.constant 0 : index
    %c0_3 = arith.constant 0 : index
    %c0_4 = arith.constant 0 : index
    %2 = vector.load %arg2[%c0_2, %c0_3, %c0_4] : memref<3x32x512xbf16, #tpu.memory_space<vmem>>, vector<1x32x512xbf16>
    %3 = vector.shape_cast %2 : vector<1x32x512xbf16> to vector<32x512xbf16>
    %cst = arith.constant dense<0.000000e+00> : vector<14x512xf32>
    %4 = tpu.matmul %1, %3, %cst {dimension_numbers = #tpu.dot_dimension_numbers<[1], [0], [0], [1], [0, 0, 1, 1], [], []>} : vector<14x32xbf16>, vector<32x512xbf16>, vector<14x512xf32> -> vector<14x512xf32>
    %c0_5 = arith.constant 0 : index
    %c1 = arith.constant 1 : index
    %c0_6 = arith.constant 0 : index
    %5 = vector.load %arg0[%c0_5, %c1, %c0_6] : memref<2x16x32xbf16, #tpu.memory_space<vmem>>, vector<1x14x32xbf16>
    %6 = vector.shape_cast %5 : vector<1x14x32xbf16> to vector<14x32xbf16>
    %c1_7 = arith.constant 1 : index
    %c0_8 = arith.constant 0 : index
    %c0_9 = arith.constant 0 : index
    %7 = vector.load %arg2[%c1_7, %c0_8, %c0_9] : memref<3x32x512xbf16, #tpu.memory_space<vmem>>, vector<1x32x512xbf16>
    %8 = vector.shape_cast %7 : vector<1x32x512xbf16> to vector<32x512xbf16>
    %cst_10 = arith.constant dense<0.000000e+00> : vector<14x512xf32>
    %9 = tpu.matmul %6, %8, %cst_10 {dimension_numbers = #tpu.dot_dimension_numbers<[1], [0], [0], [1], [0, 0, 1, 1], [], []>} : vector<14x32xbf16>, vector<32x512xbf16>, vector<14x512xf32> -> vector<14x512xf32>
    %10 = arith.addf %4, %9 : vector<14x512xf32>
    %c0_11 = arith.constant 0 : index
    %c2 = arith.constant 2 : index
    %c0_12 = arith.constant 0 : index
    %11 = vector.load %arg0[%c0_11, %c2, %c0_12] : memref<2x16x32xbf16, #tpu.memory_space<vmem>>, vector<1x14x32xbf16>
    %12 = vector.shape_cast %11 : vector<1x14x32xbf16> to vector<14x32xbf16>
    %c2_13 = arith.constant 2 : index
    %c0_14 = arith.constant 0 : index
    %c0_15 = arith.constant 0 : index
    %13 = vector.load %arg2[%c2_13, %c0_14, %c0_15] : memref<3x32x512xbf16, #tpu.memory_space<vmem>>, vector<1x32x512xbf16>
    %14 = vector.shape_cast %13 : vector<1x32x512xbf16> to vector<32x512xbf16>
    %cst_16 = arith.constant dense<0.000000e+00> : vector<14x512xf32>
    %15 = tpu.matmul %12, %14, %cst_16 {dimension_numbers = #tpu.dot_dimension_numbers<[1], [0], [0], [1], [0, 0, 1, 1], [], []>} : vector<14x32xbf16>, vector<32x512xbf16>, vector<14x512xf32> -> vector<14x512xf32>
    %16 = arith.addf %10, %15 : vector<14x512xf32>
    %c0_17 = arith.constant 0 : index
    %c0_18 = arith.constant 0 : index
    %17 = vector.load %arg3[%c0_17, %c0_18] : memref<1x512xf32, #tpu.memory_space<vmem>>, vector<1x512xf32>
    %18 = vector.broadcast %17 : vector<1x512xf32> to vector<14x512xf32>
    %19 = arith.addf %16, %18 : vector<14x512xf32>
    %cst_19 = arith.constant 0.000000e+00 : f32
    %20 = vector.broadcast %cst_19 : f32 to vector<14x512xf32>
    %21 = arith.maximumf %19, %20 : vector<14x512xf32>
    %cst_20 = arith.constant dense<0xFF800000> : vector<512xf32>
    %22 = vector.multi_reduction <maximumf>, %21, %cst_20 [0] : vector<14x512xf32> to vector<512xf32>
    %23 = vector.shape_cast %22 : vector<512xf32> to vector<1x512xf32>
    %c1_21 = arith.constant 1 : index
    %c0_22 = arith.constant 0 : index
    %c0_23 = arith.constant 0 : index
    %24 = vector.load %arg0[%c1_21, %c0_22, %c0_23] : memref<2x16x32xbf16, #tpu.memory_space<vmem>>, vector<1x14x32xbf16>
    %25 = vector.shape_cast %24 : vector<1x14x32xbf16> to vector<14x32xbf16>
    %c0_24 = arith.constant 0 : index
    %c0_25 = arith.constant 0 : index
    %c0_26 = arith.constant 0 : index
    %26 = vector.load %arg2[%c0_24, %c0_25, %c0_26] : memref<3x32x512xbf16, #tpu.memory_space<vmem>>, vector<1x32x512xbf16>
    %27 = vector.shape_cast %26 : vector<1x32x512xbf16> to vector<32x512xbf16>
    %cst_27 = arith.constant dense<0.000000e+00> : vector<14x512xf32>
    %28 = tpu.matmul %25, %27, %cst_27 {dimension_numbers = #tpu.dot_dimension_numbers<[1], [0], [0], [1], [0, 0, 1, 1], [], []>} : vector<14x32xbf16>, vector<32x512xbf16>, vector<14x512xf32> -> vector<14x512xf32>
    %c1_28 = arith.constant 1 : index
    %c1_29 = arith.constant 1 : index
    %c0_30 = arith.constant 0 : index
    %29 = vector.load %arg0[%c1_28, %c1_29, %c0_30] : memref<2x16x32xbf16, #tpu.memory_space<vmem>>, vector<1x14x32xbf16>
    %30 = vector.shape_cast %29 : vector<1x14x32xbf16> to vector<14x32xbf16>
    %c1_31 = arith.constant 1 : index
    %c0_32 = arith.constant 0 : index
    %c0_33 = arith.constant 0 : index
    %31 = vector.load %arg2[%c1_31, %c0_32, %c0_33] : memref<3x32x512xbf16, #tpu.memory_space<vmem>>, vector<1x32x512xbf16>
    %32 = vector.shape_cast %31 : vector<1x32x512xbf16> to vector<32x512xbf16>
    %cst_34 = arith.constant dense<0.000000e+00> : vector<14x512xf32>
    %33 = tpu.matmul %30, %32, %cst_34 {dimension_numbers = #tpu.dot_dimension_numbers<[1], [0], [0], [1], [0, 0, 1, 1], [], []>} : vector<14x32xbf16>, vector<32x512xbf16>, vector<14x512xf32> -> vector<14x512xf32>
    %34 = arith.addf %28, %33 : vector<14x512xf32>
    %c1_35 = arith.constant 1 : index
    %c2_36 = arith.constant 2 : index
    %c0_37 = arith.constant 0 : index
    %35 = vector.load %arg0[%c1_35, %c2_36, %c0_37] : memref<2x16x32xbf16, #tpu.memory_space<vmem>>, vector<1x14x32xbf16>
    %36 = vector.shape_cast %35 : vector<1x14x32xbf16> to vector<14x32xbf16>
    %c2_38 = arith.constant 2 : index
    %c0_39 = arith.constant 0 : index
    %c0_40 = arith.constant 0 : index
    %37 = vector.load %arg2[%c2_38, %c0_39, %c0_40] : memref<3x32x512xbf16, #tpu.memory_space<vmem>>, vector<1x32x512xbf16>
    %38 = vector.shape_cast %37 : vector<1x32x512xbf16> to vector<32x512xbf16>
    %cst_41 = arith.constant dense<0.000000e+00> : vector<14x512xf32>
    %39 = tpu.matmul %36, %38, %cst_41 {dimension_numbers = #tpu.dot_dimension_numbers<[1], [0], [0], [1], [0, 0, 1, 1], [], []>} : vector<14x32xbf16>, vector<32x512xbf16>, vector<14x512xf32> -> vector<14x512xf32>
    %40 = arith.addf %34, %39 : vector<14x512xf32>
    %c0_42 = arith.constant 0 : index
    %c0_43 = arith.constant 0 : index
    %41 = vector.load %arg3[%c0_42, %c0_43] : memref<1x512xf32, #tpu.memory_space<vmem>>, vector<1x512xf32>
    %42 = vector.broadcast %41 : vector<1x512xf32> to vector<14x512xf32>
    %43 = arith.addf %40, %42 : vector<14x512xf32>
    %cst_44 = arith.constant 0.000000e+00 : f32
    %44 = vector.broadcast %cst_44 : f32 to vector<14x512xf32>
    %45 = arith.maximumf %43, %44 : vector<14x512xf32>
    %cst_45 = arith.constant dense<0xFF800000> : vector<512xf32>
    %46 = vector.multi_reduction <maximumf>, %45, %cst_45 [0] : vector<14x512xf32> to vector<512xf32>
    %47 = vector.shape_cast %46 : vector<512xf32> to vector<1x512xf32>
    %48 = tpu.concatenate %23, %47 in 0 : vector<1x512xf32>, vector<1x512xf32> -> vector<2x512xf32>
    %c0_46 = arith.constant 0 : index
    %c0_47 = arith.constant 0 : index
    %c0_48 = arith.constant 0 : index
    %49 = vector.load %arg1[%c0_46, %c0_47, %c0_48] : memref<2x16x16xbf16, #tpu.memory_space<vmem>>, vector<1x14x16xbf16>
    %50 = vector.shape_cast %49 : vector<1x14x16xbf16> to vector<14x16xbf16>
    %c0_49 = arith.constant 0 : index
    %c0_50 = arith.constant 0 : index
    %c0_51 = arith.constant 0 : index
    %51 = vector.load %arg4[%c0_49, %c0_50, %c0_51] : memref<3x16x512xbf16, #tpu.memory_space<vmem>>, vector<1x16x512xbf16>
    %52 = vector.shape_cast %51 : vector<1x16x512xbf16> to vector<16x512xbf16>
    %cst_52 = arith.constant dense<0.000000e+00> : vector<14x512xf32>
    %53 = tpu.matmul %50, %52, %cst_52 {dimension_numbers = #tpu.dot_dimension_numbers<[1], [0], [0], [1], [0, 0, 1, 1], [], []>} : vector<14x16xbf16>, vector<16x512xbf16>, vector<14x512xf32> -> vector<14x512xf32>
    %c0_53 = arith.constant 0 : index
    %c1_54 = arith.constant 1 : index
    %c0_55 = arith.constant 0 : index
    %54 = vector.load %arg1[%c0_53, %c1_54, %c0_55] : memref<2x16x16xbf16, #tpu.memory_space<vmem>>, vector<1x14x16xbf16>
    %55 = vector.shape_cast %54 : vector<1x14x16xbf16> to vector<14x16xbf16>
    %c1_56 = arith.constant 1 : index
    %c0_57 = arith.constant 0 : index
    %c0_58 = arith.constant 0 : index
    %56 = vector.load %arg4[%c1_56, %c0_57, %c0_58] : memref<3x16x512xbf16, #tpu.memory_space<vmem>>, vector<1x16x512xbf16>
    %57 = vector.shape_cast %56 : vector<1x16x512xbf16> to vector<16x512xbf16>
    %cst_59 = arith.constant dense<0.000000e+00> : vector<14x512xf32>
    %58 = tpu.matmul %55, %57, %cst_59 {dimension_numbers = #tpu.dot_dimension_numbers<[1], [0], [0], [1], [0, 0, 1, 1], [], []>} : vector<14x16xbf16>, vector<16x512xbf16>, vector<14x512xf32> -> vector<14x512xf32>
    %59 = arith.addf %53, %58 : vector<14x512xf32>
    %c0_60 = arith.constant 0 : index
    %c2_61 = arith.constant 2 : index
    %c0_62 = arith.constant 0 : index
    %60 = vector.load %arg1[%c0_60, %c2_61, %c0_62] : memref<2x16x16xbf16, #tpu.memory_space<vmem>>, vector<1x14x16xbf16>
    %61 = vector.shape_cast %60 : vector<1x14x16xbf16> to vector<14x16xbf16>
    %c2_63 = arith.constant 2 : index
    %c0_64 = arith.constant 0 : index
    %c0_65 = arith.constant 0 : index
    %62 = vector.load %arg4[%c2_63, %c0_64, %c0_65] : memref<3x16x512xbf16, #tpu.memory_space<vmem>>, vector<1x16x512xbf16>
    %63 = vector.shape_cast %62 : vector<1x16x512xbf16> to vector<16x512xbf16>
    %cst_66 = arith.constant dense<0.000000e+00> : vector<14x512xf32>
    %64 = tpu.matmul %61, %63, %cst_66 {dimension_numbers = #tpu.dot_dimension_numbers<[1], [0], [0], [1], [0, 0, 1, 1], [], []>} : vector<14x16xbf16>, vector<16x512xbf16>, vector<14x512xf32> -> vector<14x512xf32>
    %65 = arith.addf %59, %64 : vector<14x512xf32>
    %c0_67 = arith.constant 0 : index
    %c0_68 = arith.constant 0 : index
    %66 = vector.load %arg5[%c0_67, %c0_68] : memref<1x512xf32, #tpu.memory_space<vmem>>, vector<1x512xf32>
    %67 = vector.broadcast %66 : vector<1x512xf32> to vector<14x512xf32>
    %68 = arith.addf %65, %67 : vector<14x512xf32>
    %cst_69 = arith.constant 0.000000e+00 : f32
    %69 = vector.broadcast %cst_69 : f32 to vector<14x512xf32>
    %70 = arith.maximumf %68, %69 : vector<14x512xf32>
    %cst_70 = arith.constant dense<0xFF800000> : vector<512xf32>
    %71 = vector.multi_reduction <maximumf>, %70, %cst_70 [0] : vector<14x512xf32> to vector<512xf32>
    %72 = vector.shape_cast %71 : vector<512xf32> to vector<1x512xf32>
    %c1_71 = arith.constant 1 : index
    %c0_72 = arith.constant 0 : index
    %c0_73 = arith.constant 0 : index
    %73 = vector.load %arg1[%c1_71, %c0_72, %c0_73] : memref<2x16x16xbf16, #tpu.memory_space<vmem>>, vector<1x14x16xbf16>
    %74 = vector.shape_cast %73 : vector<1x14x16xbf16> to vector<14x16xbf16>
    %c0_74 = arith.constant 0 : index
    %c0_75 = arith.constant 0 : index
    %c0_76 = arith.constant 0 : index
    %75 = vector.load %arg4[%c0_74, %c0_75, %c0_76] : memref<3x16x512xbf16, #tpu.memory_space<vmem>>, vector<1x16x512xbf16>
    %76 = vector.shape_cast %75 : vector<1x16x512xbf16> to vector<16x512xbf16>
    %cst_77 = arith.constant dense<0.000000e+00> : vector<14x512xf32>
    %77 = tpu.matmul %74, %76, %cst_77 {dimension_numbers = #tpu.dot_dimension_numbers<[1], [0], [0], [1], [0, 0, 1, 1], [], []>} : vector<14x16xbf16>, vector<16x512xbf16>, vector<14x512xf32> -> vector<14x512xf32>
    %c1_78 = arith.constant 1 : index
    %c1_79 = arith.constant 1 : index
    %c0_80 = arith.constant 0 : index
    %78 = vector.load %arg1[%c1_78, %c1_79, %c0_80] : memref<2x16x16xbf16, #tpu.memory_space<vmem>>, vector<1x14x16xbf16>
    %79 = vector.shape_cast %78 : vector<1x14x16xbf16> to vector<14x16xbf16>
    %c1_81 = arith.constant 1 : index
    %c0_82 = arith.constant 0 : index
    %c0_83 = arith.constant 0 : index
    %80 = vector.load %arg4[%c1_81, %c0_82, %c0_83] : memref<3x16x512xbf16, #tpu.memory_space<vmem>>, vector<1x16x512xbf16>
    %81 = vector.shape_cast %80 : vector<1x16x512xbf16> to vector<16x512xbf16>
    %cst_84 = arith.constant dense<0.000000e+00> : vector<14x512xf32>
    %82 = tpu.matmul %79, %81, %cst_84 {dimension_numbers = #tpu.dot_dimension_numbers<[1], [0], [0], [1], [0, 0, 1, 1], [], []>} : vector<14x16xbf16>, vector<16x512xbf16>, vector<14x512xf32> -> vector<14x512xf32>
    %83 = arith.addf %77, %82 : vector<14x512xf32>
    %c1_85 = arith.constant 1 : index
    %c2_86 = arith.constant 2 : index
    %c0_87 = arith.constant 0 : index
    %84 = vector.load %arg1[%c1_85, %c2_86, %c0_87] : memref<2x16x16xbf16, #tpu.memory_space<vmem>>, vector<1x14x16xbf16>
    %85 = vector.shape_cast %84 : vector<1x14x16xbf16> to vector<14x16xbf16>
    %c2_88 = arith.constant 2 : index
    %c0_89 = arith.constant 0 : index
    %c0_90 = arith.constant 0 : index
    %86 = vector.load %arg4[%c2_88, %c0_89, %c0_90] : memref<3x16x512xbf16, #tpu.memory_space<vmem>>, vector<1x16x512xbf16>
    %87 = vector.shape_cast %86 : vector<1x16x512xbf16> to vector<16x512xbf16>
    %cst_91 = arith.constant dense<0.000000e+00> : vector<14x512xf32>
    %88 = tpu.matmul %85, %87, %cst_91 {dimension_numbers = #tpu.dot_dimension_numbers<[1], [0], [0], [1], [0, 0, 1, 1], [], []>} : vector<14x16xbf16>, vector<16x512xbf16>, vector<14x512xf32> -> vector<14x512xf32>
    %89 = arith.addf %83, %88 : vector<14x512xf32>
    %c0_92 = arith.constant 0 : index
    %c0_93 = arith.constant 0 : index
    %90 = vector.load %arg5[%c0_92, %c0_93] : memref<1x512xf32, #tpu.memory_space<vmem>>, vector<1x512xf32>
    %91 = vector.broadcast %90 : vector<1x512xf32> to vector<14x512xf32>
    %92 = arith.addf %89, %91 : vector<14x512xf32>
    %cst_94 = arith.constant 0.000000e+00 : f32
    %93 = vector.broadcast %cst_94 : f32 to vector<14x512xf32>
    %94 = arith.maximumf %92, %93 : vector<14x512xf32>
    %cst_95 = arith.constant dense<0xFF800000> : vector<512xf32>
    %95 = vector.multi_reduction <maximumf>, %94, %cst_95 [0] : vector<14x512xf32> to vector<512xf32>
    %96 = vector.shape_cast %95 : vector<512xf32> to vector<1x512xf32>
    %97 = tpu.concatenate %72, %96 in 0 : vector<1x512xf32>, vector<1x512xf32> -> vector<2x512xf32>
    %98 = tpu.concatenate %48, %97 in 1 : vector<2x512xf32>, vector<2x512xf32> -> vector<2x1024xf32>
    %99 = arith.truncf %98 : vector<2x1024xf32> to vector<2x1024xbf16>
    %c0_96 = arith.constant 0 : index
    %c0_97 = arith.constant 0 : index
    %100 = vector.load %arg6[%c0_96, %c0_97] : memref<1024x384xbf16, #tpu.memory_space<vmem>>, vector<1024x384xbf16>
    %cst_98 = arith.constant dense<0.000000e+00> : vector<2x384xf32>
    %101 = tpu.matmul %99, %100, %cst_98 {dimension_numbers = #tpu.dot_dimension_numbers<[1], [0], [0], [1], [0, 0, 1, 1], [], []>} : vector<2x1024xbf16>, vector<1024x384xbf16>, vector<2x384xf32> -> vector<2x384xf32>
    %c0_99 = arith.constant 0 : index
    %c0_100 = arith.constant 0 : index
    %102 = vector.load %arg7[%c0_99, %c0_100] : memref<1x384xf32, #tpu.memory_space<vmem>>, vector<1x384xf32>
    %103 = vector.broadcast %102 : vector<1x384xf32> to vector<2x384xf32>
    %104 = arith.addf %101, %103 : vector<2x384xf32>
    %105 = arith.negf %104 : vector<2x384xf32>
    %106 = math.exp %105 : vector<2x384xf32>
    %cst_101 = arith.constant 1.000000e+00 : f32
    %107 = vector.broadcast %cst_101 : f32 to vector<2x384xf32>
    %108 = arith.addf %107, %106 : vector<2x384xf32>
    %109 = arith.divf %107, %108 : vector<2x384xf32>
    %110 = arith.truncf %109 : vector<2x384xf32> to vector<2x384xbf16>
    %c0_102 = arith.constant 0 : index
    %c0_103 = arith.constant 0 : index
    %111 = vector.load %arg8[%c0_102, %c0_103] : memref<384x384xbf16, #tpu.memory_space<vmem>>, vector<384x384xbf16>
    %cst_104 = arith.constant dense<0.000000e+00> : vector<2x384xf32>
    %112 = tpu.matmul %110, %111, %cst_104 {dimension_numbers = #tpu.dot_dimension_numbers<[1], [0], [0], [1], [0, 0, 1, 1], [], []>} : vector<2x384xbf16>, vector<384x384xbf16>, vector<2x384xf32> -> vector<2x384xf32>
    %c0_105 = arith.constant 0 : index
    %c0_106 = arith.constant 0 : index
    %113 = vector.load %arg9[%c0_105, %c0_106] : memref<1x384xf32, #tpu.memory_space<vmem>>, vector<1x384xf32>
    %114 = vector.broadcast %113 : vector<1x384xf32> to vector<2x384xf32>
    %115 = arith.addf %112, %114 : vector<2x384xf32>
    %116 = arith.negf %115 : vector<2x384xf32>
    %117 = math.exp %116 : vector<2x384xf32>
    %cst_107 = arith.constant 1.000000e+00 : f32
    %118 = vector.broadcast %cst_107 : f32 to vector<2x384xf32>
    %119 = arith.addf %118, %117 : vector<2x384xf32>
    %120 = arith.divf %118, %119 : vector<2x384xf32>
    %c0_108 = arith.constant 0 : index
    %c0_109 = arith.constant 0 : index
    %121 = vector.load %arg10[%c0_108, %c0_109] : memref<1x384xf32, #tpu.memory_space<vmem>>, vector<1x384xf32>
    %122 = vector.broadcast %121 : vector<1x384xf32> to vector<2x384xf32>
    %123 = arith.mulf %120, %122 : vector<2x384xf32>
    %cst_110 = arith.constant dense<0.000000e+00> : vector<2xf32>
    %124 = vector.multi_reduction <add>, %123, %cst_110 [1] : vector<2x384xf32> to vector<2xf32>
    %125 = vector.shape_cast %124 : vector<2xf32> to vector<2x1xf32>
    %c0_111 = arith.constant 0 : index
    %c0_112 = arith.constant 0 : index
    %126 = vector.load %arg11[%c0_111, %c0_112] : memref<1x1xf32, #tpu.memory_space<vmem>>, vector<1x1xf32>
    %127 = vector.broadcast %126 : vector<1x1xf32> to vector<2x1xf32>
    %128 = arith.addf %125, %127 : vector<2x1xf32>
    %129 = arith.negf %128 : vector<2x1xf32>
    %130 = math.exp %129 : vector<2x1xf32>
    %cst_113 = arith.constant 1.000000e+00 : f32
    %131 = vector.broadcast %cst_113 : f32 to vector<2x1xf32>
    %132 = arith.addf %131, %130 : vector<2x1xf32>
    %133 = arith.divf %131, %132 : vector<2x1xf32>
    %c0_114 = arith.constant 0 : index
    %c0_115 = arith.constant 0 : index
    %134 = vector.load %arg12[%c0_114, %c0_115] : memref<2x1xf32, #tpu.memory_space<vmem>>, vector<2x1xf32>
    tpu.vector_store %arg12[%c0_114, %c0_115], %133 {strides = array<i32>} : memref<2x1xf32, #tpu.memory_space<vmem>>, vector<2x1xf32>,
    return
  }
}

</mosaic_0001>

<llo_original>
// kernel: suggestion_classifier.1
$region0: #{suggestion_classifier.1}
  #allocation0 [shape = 'u32[]', space=smem, size = 0x4, offset = 0x4, fixed_abs, tag = 'smem constant byte address 0x4 - core index']
  #allocation1 [shape = 'u32[72,128]{1,0:T(1,128)}', space=vmem, size = 0x9000, scoped, tag = 'internal scratch']
  #allocation2 [shape = 'f32[1,1]{1,0:T(1,128)S(1)}', space=vmem, size = 0x200, scoped, tag = 'scoped memory for suggestion_classifier.1']
  %s0 = inlined_call_operand.vmem [shape: bf16[2,16,32], index: 0, kind: input, shape index: {}]
  %s1 = inlined_call_operand.vmem [shape: bf16[2,16,16], index: 1, kind: input, shape index: {}]
  %s2 = inlined_call_operand.vmem [shape: bf16[3,32,512], index: 2, kind: input, shape index: {}]
  %s3 = inlined_call_operand.vmem [shape: f32[1,512], index: 3, kind: input, shape index: {}]
  %s4 = inlined_call_operand.vmem [shape: bf16[3,16,512], index: 4, kind: input, shape index: {}]
  %s5 = inlined_call_operand.vmem [shape: f32[1,512], index: 5, kind: input, shape index: {}]
  %s6 = inlined_call_operand.vmem [shape: bf16[1024,384], index: 6, kind: input, shape index: {}]
  %s7 = inlined_call_operand.vmem [shape: f32[1,384], index: 7, kind: input, shape index: {}]
  %s8 = inlined_call_operand.vmem [shape: bf16[384,384], index: 8, kind: input, shape index: {}]
  %s9 = inlined_call_operand.vmem [shape: f32[1,384], index: 9, kind: input, shape index: {}]
  %s10 = inlined_call_operand.vmem [shape: f32[1,384], index: 10, kind: input, shape index: {}]
  %s11 = inlined_call_operand.<no memory space> [shape: f32[1,1], index: 11, kind: input, shape index: {}]
  %s12 = inlined_call_operand.vmem [shape: f32[2,1], index: 12, kind: output, shape index: {}]
  %s13 = sld [smem:[#allocation0]]
  $region58: #{suggestion_classifier.1} parent=0
    _
  %s15 = ssub.s32 1, %s13
  %s16 = scalar_select 0, %s15, %s13
  %v17 = vstv %s11
  %18 = vst [vmem:[#allocation2] sm:$0x1] %v17
  // Predicated region
  $region2: #{suggestion_classifier.1} parent=0 // pred_check
    _
  $region3: #{suggestion_classifier.1} parent=0 // pred_check_branch
    %20 = sbr.rel (0) target = $region5
  $region4: #{suggestion_classifier.1} parent=0 // pred_region
    _
  $region5: #{suggestion_classifier.1} parent=0 // pred_fallthru
    _
  // Predicated region
  $region6: #{suggestion_classifier.1} parent=0 // pred_check
    _
  $region7: #{suggestion_classifier.1} parent=0 // pred_check_branch
    %22 = sbr.rel (0) target = $region9
  $region8: #{suggestion_classifier.1} parent=0 // pred_region
    _
  $region9: #{suggestion_classifier.1} parent=0 // pred_fallthru
    _
  // Predicated region
  $region10: #{suggestion_classifier.1} parent=0 // pred_check
    _
  $region11: #{suggestion_classifier.1} parent=0 // pred_check_branch
    %24 = sbr.rel (0) target = $region13
  $region12: #{suggestion_classifier.1} parent=0 // pred_region
    _
  $region13: #{suggestion_classifier.1} parent=0 // pred_fallthru
    _
  // Predicated region
  $region14: #{suggestion_classifier.1} parent=0 // pred_check
    _
  $region15: #{suggestion_classifier.1} parent=0 // pred_check_branch
    %26 = sbr.rel (0) target = $region17
  $region16: #{suggestion_classifier.1} parent=0 // pred_region
    _
  $region17: #{suggestion_classifier.1} parent=0 // pred_fallthru
    _
  // Predicated region
  $region18: #{suggestion_classifier.1} parent=0 // pred_check
    _
  $region19: #{suggestion_classifier.1} parent=0 // pred_check_branch
    %28 = sbr.rel (0) target = $region21
  $region20: #{suggestion_classifier.1} parent=0 // pred_region
    _
  $region21: #{suggestion_classifier.1} parent=0 // pred_fallthru
    _
  // Predicated region
  $region22: #{suggestion_classifier.1} parent=0 // pred_check
    _
  $region23: #{suggestion_classifier.1} parent=0 // pred_check_branch
    %30 = sbr.rel (0) target = $region25
  $region24: #{suggestion_classifier.1} parent=0 // pred_region
    _
  $region25: #{suggestion_classifier.1} parent=0 // pred_fallthru
    _
  // Predicated region
  $region26: #{suggestion_classifier.1} parent=0 // pred_check
    _
  $region27: #{suggestion_classifier.1} parent=0 // pred_check_branch
    %32 = sbr.rel (0) target = $region29
  $region28: #{suggestion_classifier.1} parent=0 // pred_region
    _
  $region29: #{suggestion_classifier.1} parent=0 // pred_fallthru
    _
  // Predicated region
  $region30: #{suggestion_classifier.1} parent=0 // pred_check
    _
  $region31: #{suggestion_classifier.1} parent=0 // pred_check_branch
    %34 = sbr.rel (0) target = $region33
  $region32: #{suggestion_classifier.1} parent=0 // pred_region
    _
  $region33: #{suggestion_classifier.1} parent=0 // pred_fallthru
    _
  // Predicated region
  $region34: #{suggestion_classifier.1} parent=0 // pred_check
    _
  $region35: #{suggestion_classifier.1} parent=0 // pred_check_branch
    %36 = sbr.rel (0) target = $region37
  $region36: #{suggestion_classifier.1} parent=0 // pred_region
    _
  $region37: #{suggestion_classifier.1} parent=0 // pred_fallthru
    _
  // Predicated region
  $region38: #{suggestion_classifier.1} parent=0 // pred_check
    _
  $region39: #{suggestion_classifier.1} parent=0 // pred_check_branch
    %38 = sbr.rel (0) target = $region41
  $region40: #{suggestion_classifier.1} parent=0 // pred_region
    _
  $region41: #{suggestion_classifier.1} parent=0 // pred_fallthru
    _
  // Predicated region
  $region42: #{suggestion_classifier.1} parent=0 // pred_check
    _
  $region43: #{suggestion_classifier.1} parent=0 // pred_check_branch
    %40 = sbr.rel (0) target = $region45
  $region44: #{suggestion_classifier.1} parent=0 // pred_region
    _
  $region45: #{suggestion_classifier.1} parent=0 // pred_fallthru
    _
  // Predicated region
  $region46: #{suggestion_classifier.1} parent=0 // pred_check
    _
  $region47: #{suggestion_classifier.1} parent=0 // pred_check_branch
    %42 = sbr.rel (0) target = $region49
  $region48: #{suggestion_classifier.1} parent=0 // pred_region
    _
  $region49: #{suggestion_classifier.1} parent=0 // pred_fallthru
    _
  %v44 = vld [vmem:[%s0] sm:$0xf]
  %v45 = vld [vmem:[%s0 + $0x4] sm:$0x7]
  %v46 = vld [vmem:[%s2] sm:$0xff]
  %v47 = vld [vmem:[%s2 + $0x8] sm:$0xff]
  %v48 = vld [vmem:[%s2 + $0x10] sm:$0xff]
  %v49 = vld [vmem:[%s2 + $0x18] sm:$0xff]
  %v50 = vld [vmem:[%s2 + $0x20] sm:$0xff]
  %v51 = vld [vmem:[%s2 + $0x28] sm:$0xff]
  %v52 = vld [vmem:[%s2 + $0x30] sm:$0xff]
  %v53 = vld [vmem:[%s2 + $0x38] sm:$0xff]
  %v54 = vld [vmem:[%s0 + $0x4] sm:$0xf]
  %s55 = scalar_lea.vmem %s2, 64
  %v56 = vld [vmem:[%s55] sm:$0xff]
  %v57 = vld [vmem:[%s55 + $0x8] sm:$0xff]
  %v58 = vld [vmem:[%s55 + $0x10] sm:$0xff]
  %v59 = vld [vmem:[%s55 + $0x18] sm:$0xff]
  %v60 = vld [vmem:[%s55 + $0x20] sm:$0xff]
  %v61 = vld [vmem:[%s55 + $0x28] sm:$0xff]
  %v62 = vld [vmem:[%s55 + $0x30] sm:$0xff]
  %v63 = vld [vmem:[%s55 + $0x38] sm:$0xff]
  %v66 = vunpack.c.l.b16 %v44
  %v67 = vunpack.c.l.b16 %v54
  %v68 = vpack.c.b16 %v67, %v66
  %v70 = vshrl.u32 %v68, 16
  %v72 = vshll.u32 %v68, 16
  %v74 = vrot.slane %v72, 1
  %v75 = vor.u32 %v70, %v74
  %v84 = vunpack.c.l.b16 %v56
  %v85 = vunpack.c.h.b16 %v56
  %v86 = vunpack.c.l.b16 %v57
  %v87 = vunpack.c.h.b16 %v57
  %v88 = vunpack.c.l.b16 %v58
  %v89 = vunpack.c.h.b16 %v58
  %v90 = vunpack.c.l.b16 %v59
  %v91 = vunpack.c.h.b16 %v59
  %v92 = vunpack.c.l.b16 %v60
  %v93 = vunpack.c.h.b16 %v60
  %v94 = vunpack.c.l.b16 %v61
  %v95 = vunpack.c.h.b16 %v61
  %v96 = vunpack.c.l.b16 %v62
  %v97 = vunpack.c.h.b16 %v62
  %v98 = vunpack.c.l.b16 %v63
  %v99 = vunpack.c.h.b16 %v63
  %v100 = vpack.c.b16 %v88, %v84
  %v101 = vpack.c.b16 %v89, %v85
  %v102 = vpack.c.b16 %v90, %v86
  %v103 = vpack.c.b16 %v91, %v87
  %v104 = vpack.c.b16 %v96, %v92
  %v105 = vpack.c.b16 %v97, %v93
  %v106 = vpack.c.b16 %v98, %v94
  %v107 = vpack.c.b16 %v99, %v95
  %vm116 = vcmask 261120
  %v118 = vsel %vm116, %v75, 0
  %120 = vmatpush.bf16.msra.mxu0 0
  %121 = vmatpush.bf16.msra.mxu0 0
  %122 = vmatpush.bf16.msra.mxu0 0
  %123 = vmatpush.bf16.msra.mxu0 0
  %124 = vmatpush.bf16.msra.mxu0 0
  %125 = vmatpush.bf16.msra.mxu0 0
  %126 = vmatpush.bf16.msra.mxu0 %v104
  %127 = vmatpush.bf16.msra.mxu0 %v100
  %128 = vmatmul.bf16.gmra.mxu0 %v118
  %v129 = vpop.f32.mrf.mxu0
  %v130 = vadd.f32 0.0, %v129
  %v131 = vpop.f32.mrf.mxu0
  %v132 = vadd.f32 0.0, %v131
  %133 = vdwg.mxu0
  %134 = vmatpush.bf16.msra.mxu0 0
  %135 = vmatpush.bf16.msra.mxu0 0
  %136 = vmatpush.bf16.msra.mxu0 0
  %137 = vmatpush.bf16.msra.mxu0 0
  %138 = vmatpush.bf16.msra.mxu0 0
  %139 = vmatpush.bf16.msra.mxu0 0
  %140 = vmatpush.bf16.msra.mxu0 %v105
  %141 = vmatpush.bf16.msra.mxu0 %v101
  %142 = vmatmul.bf16.gmra.mxu0 %v118
  %v143 = vpop.f32.mrf.mxu0
  %v144 = vadd.f32 0.0, %v143
  %v145 = vpop.f32.mrf.mxu0
  %v146 = vadd.f32 0.0, %v145
  %147 = vdwg.mxu0
  %148 = vmatpush.bf16.msra.mxu0 0
  %149 = vmatpush.bf16.msra.mxu0 0
  %150 = vmatpush.bf16.msra.mxu0 0
  %151 = vmatpush.bf16.msra.mxu0 0
  %152 = vmatpush.bf16.msra.mxu0 0
  %153 = vmatpush.bf16.msra.mxu0 0
  %154 = vmatpush.bf16.msra.mxu0 %v106
  %155 = vmatpush.bf16.msra.mxu0 %v102
  %156 = vmatmul.bf16.gmra.mxu0 %v118
  %v157 = vpop.f32.mrf.mxu0
  %v158 = vadd.f32 0.0, %v157
  %v159 = vpop.f32.mrf.mxu0
  %v160 = vadd.f32 0.0, %v159
  %161 = vdwg.mxu0
  %162 = vmatpush.bf16.msra.mxu0 0
  %163 = vmatpush.bf16.msra.mxu0 0
  %164 = vmatpush.bf16.msra.mxu0 0
  %165 = vmatpush.bf16.msra.mxu0 0
  %166 = vmatpush.bf16.msra.mxu0 0
  %167 = vmatpush.bf16.msra.mxu0 0
  %168 = vmatpush.bf16.msra.mxu0 %v107
  %169 = vmatpush.bf16.msra.mxu0 %v103
  %170 = vmatmul.bf16.gmra.mxu0 %v118
  %v171 = vpop.f32.mrf.mxu0
  %v172 = vadd.f32 0.0, %v171
  %v173 = vpop.f32.mrf.mxu0
  %v174 = vadd.f32 0.0, %v173
  %175 = vdwg.mxu0
  %v177 = vunpack.c.l.b16 %v45
  %v178 = vpack.c.b16 %v177, %v66
  %v187 = vunpack.c.l.b16 %v46
  %v188 = vunpack.c.h.b16 %v46
  %v189 = vunpack.c.l.b16 %v47
  %v190 = vunpack.c.h.b16 %v47
  %v191 = vunpack.c.l.b16 %v48
  %v192 = vunpack.c.h.b16 %v48
  %v193 = vunpack.c.l.b16 %v49
  %v194 = vunpack.c.h.b16 %v49
  %v195 = vunpack.c.l.b16 %v50
  %v196 = vunpack.c.h.b16 %v50
  %v197 = vunpack.c.l.b16 %v51
  %v198 = vunpack.c.h.b16 %v51
  %v199 = vunpack.c.l.b16 %v52
  %v200 = vunpack.c.h.b16 %v52
  %v201 = vunpack.c.l.b16 %v53
  %v202 = vunpack.c.h.b16 %v53
  %v203 = vpack.c.b16 %v191, %v187
  %v204 = vpack.c.b16 %v192, %v188
  %v205 = vpack.c.b16 %v193, %v189
  %v206 = vpack.c.b16 %v194, %v190
  %v207 = vpack.c.b16 %v199, %v195
  %v208 = vpack.c.b16 %v200, %v196
  %v209 = vpack.c.b16 %v201, %v197
  %v210 = vpack.c.b16 %v202, %v198
  %v220 = vsel %vm116, %v178, 0
  %222 = vmatpush.bf16.msra.mxu0 0
  %223 = vmatpush.bf16.msra.mxu0 0
  %224 = vmatpush.bf16.msra.mxu0 0
  %225 = vmatpush.bf16.msra.mxu0 0
  %226 = vmatpush.bf16.msra.mxu0 0
  %227 = vmatpush.bf16.msra.mxu0 0
  %228 = vmatpush.bf16.msra.mxu0 %v207
  %229 = vmatpush.bf16.msra.mxu0 %v203
  %230 = vmatmul.bf16.gmra.mxu0 %v220
  %v231 = vpop.f32.mrf.mxu0
  %v232 = vadd.f32 %v130, %v231
  %v233 = vpop.f32.mrf.mxu0
  %v234 = vadd.f32 %v132, %v233
  %235 = vdwg.mxu0
  %236 = vmatpush.bf16.msra.mxu0 0
  %237 = vmatpush.bf16.msra.mxu0 0
  %238 = vmatpush.bf16.msra.mxu0 0
  %239 = vmatpush.bf16.msra.mxu0 0
  %240 = vmatpush.bf16.msra.mxu0 0
  %241 = vmatpush.bf16.msra.mxu0 0
  %242 = vmatpush.bf16.msra.mxu0 %v208
  %243 = vmatpush.bf16.msra.mxu0 %v204
  %244 = vmatmul.bf16.gmra.mxu0 %v220
  %v245 = vpop.f32.mrf.mxu0
  %v246 = vadd.f32 %v144, %v245
  %v247 = vpop.f32.mrf.mxu0
  %v248 = vadd.f32 %v146, %v247
  %249 = vdwg.mxu0
  %250 = vmatpush.bf16.msra.mxu0 0
  %251 = vmatpush.bf16.msra.mxu0 0
  %252 = vmatpush.bf16.msra.mxu0 0
  %253 = vmatpush.bf16.msra.mxu0 0
  %254 = vmatpush.bf16.msra.mxu0 0
  %255 = vmatpush.bf16.msra.mxu0 0
  %256 = vmatpush.bf16.msra.mxu0 %v209
  %257 = vmatpush.bf16.msra.mxu0 %v205
  %258 = vmatmul.bf16.gmra.mxu0 %v220
  %v259 = vpop.f32.mrf.mxu0
  %v260 = vadd.f32 %v158, %v259
  %v261 = vpop.f32.mrf.mxu0
  %v262 = vadd.f32 %v160, %v261
  %263 = vdwg.mxu0
  %264 = vmatpush.bf16.msra.mxu0 0
  %265 = vmatpush.bf16.msra.mxu0 0
  %266 = vmatpush.bf16.msra.mxu0 0
  %267 = vmatpush.bf16.msra.mxu0 0
  %268 = vmatpush.bf16.msra.mxu0 0
  %269 = vmatpush.bf16.msra.mxu0 0
  %270 = vmatpush.bf16.msra.mxu0 %v210
  %271 = vmatpush.bf16.msra.mxu0 %v206
  %272 = vmatmul.bf16.gmra.mxu0 %v220
  %v273 = vpop.f32.mrf.mxu0
  %v274 = vadd.f32 %v172, %v273
  %v275 = vpop.f32.mrf.mxu0
  %v276 = vadd.f32 %v174, %v275
  %277 = vdwg.mxu0
  %v278 = vld [vmem:[%s0] sm:$0xe]
  %s279 = scalar_lea.vmem %s2, 128
  %v280 = vld [vmem:[%s279] sm:$0xff]
  %v281 = vld [vmem:[%s279 + $0x8] sm:$0xff]
  %v282 = vld [vmem:[%s279 + $0x10] sm:$0xff]
  %v283 = vld [vmem:[%s279 + $0x18] sm:$0xff]
  %v284 = vld [vmem:[%s279 + $0x20] sm:$0xff]
  %v285 = vld [vmem:[%s279 + $0x28] sm:$0xff]
  %v286 = vld [vmem:[%s279 + $0x30] sm:$0xff]
  %v287 = vld [vmem:[%s279 + $0x38] sm:$0xff]
  %v289 = vunpack.c.l.b16 %v278
  %v290 = vpack.c.b16 %v67, %v289
  %v291 = vrot.slane %v290, 1
  %v300 = vunpack.c.l.b16 %v280
  %v301 = vunpack.c.h.b16 %v280
  %v302 = vunpack.c.l.b16 %v281
  %v303 = vunpack.c.h.b16 %v281
  %v304 = vunpack.c.l.b16 %v282
  %v305 = vunpack.c.h.b16 %v282
  %v306 = vunpack.c.l.b16 %v283
  %v307 = vunpack.c.h.b16 %v283
  %v308 = vunpack.c.l.b16 %v284
  %v309 = vunpack.c.h.b16 %v284
  %v310 = vunpack.c.l.b16 %v285
  %v311 = vunpack.c.h.b16 %v285
  %v312 = vunpack.c.l.b16 %v286
  %v313 = vunpack.c.h.b16 %v286
  %v314 = vunpack.c.l.b16 %v287
  %v315 = vunpack.c.h.b16 %v287
  %v316 = vpack.c.b16 %v304, %v300
  %v317 = vpack.c.b16 %v305, %v301
  %v318 = vpack.c.b16 %v306, %v302
  %v319 = vpack.c.b16 %v307, %v303
  %v320 = vpack.c.b16 %v312, %v308
  %v321 = vpack.c.b16 %v313, %v309
  %v322 = vpack.c.b16 %v314, %v310
  %v323 = vpack.c.b16 %v315, %v311
  %v333 = vsel %vm116, %v291, 0
  %335 = vmatpush.bf16.msra.mxu0 0
  %336 = vmatpush.bf16.msra.mxu0 0
  %337 = vmatpush.bf16.msra.mxu0 0
  %338 = vmatpush.bf16.msra.mxu0 0
  %339 = vmatpush.bf16.msra.mxu0 0
  %340 = vmatpush.bf16.msra.mxu0 0
  %341 = vmatpush.bf16.msra.mxu0 %v320
  %342 = vmatpush.bf16.msra.mxu0 %v316
  %343 = vmatmul.bf16.gmra.mxu0 %v333
  %v344 = vpop.f32.mrf.mxu0
  %v345 = vadd.f32 0.0, %v344
  %v346 = vpop.f32.mrf.mxu0
  %v347 = vadd.f32 0.0, %v346
  %348 = vdwg.mxu0
  %349 = vmatpush.bf16.msra.mxu0 0
  %350 = vmatpush.bf16.msra.mxu0 0
  %351 = vmatpush.bf16.msra.mxu0 0
  %352 = vmatpush.bf16.msra.mxu0 0
  %353 = vmatpush.bf16.msra.mxu0 0
  %354 = vmatpush.bf16.msra.mxu0 0
  %355 = vmatpush.bf16.msra.mxu0 %v321
  %356 = vmatpush.bf16.msra.mxu0 %v317
  %357 = vmatmul.bf16.gmra.mxu0 %v333
  %v358 = vpop.f32.mrf.mxu0
  %v359 = vadd.f32 0.0, %v358
  %v360 = vpop.f32.mrf.mxu0
  %v361 = vadd.f32 0.0, %v360
  %362 = vdwg.mxu0
  %363 = vmatpush.bf16.msra.mxu0 0
  %364 = vmatpush.bf16.msra.mxu0 0
  %365 = vmatpush.bf16.msra.mxu0 0
  %366 = vmatpush.bf16.msra.mxu0 0
  %367 = vmatpush.bf16.msra.mxu0 0
  %368 = vmatpush.bf16.msra.mxu0 0
  %369 = vmatpush.bf16.msra.mxu0 %v322
  %370 = vmatpush.bf16.msra.mxu0 %v318
  %371 = vmatmul.bf16.gmra.mxu0 %v333
  %v372 = vpop.f32.mrf.mxu0
  %v373 = vadd.f32 0.0, %v372
  %v374 = vpop.f32.mrf.mxu0
  %v375 = vadd.f32 0.0, %v374
  %376 = vdwg.mxu0
  %377 = vmatpush.bf16.msra.mxu0 0
  %378 = vmatpush.bf16.msra.mxu0 0
  %379 = vmatpush.bf16.msra.mxu0 0
  %380 = vmatpush.bf16.msra.mxu0 0
  %381 = vmatpush.bf16.msra.mxu0 0
  %382 = vmatpush.bf16.msra.mxu0 0
  %383 = vmatpush.bf16.msra.mxu0 %v323
  %384 = vmatpush.bf16.msra.mxu0 %v319
  %385 = vmatmul.bf16.gmra.mxu0 %v333
  %v386 = vpop.f32.mrf.mxu0
  %v387 = vadd.f32 0.0, %v386
  %v388 = vpop.f32.mrf.mxu0
  %v389 = vadd.f32 0.0, %v388
  %390 = vdwg.mxu0
  %v391 = vadd.f32 %v232, %v345
  %v392 = vadd.f32 %v246, %v359
  %v393 = vadd.f32 %v260, %v373
  %v394 = vadd.f32 %v274, %v387
  %v395 = vadd.f32 %v234, %v347
  %v396 = vadd.f32 %v248, %v361
  %v397 = vadd.f32 %v262, %v375
  %v398 = vadd.f32 %v276, %v389
  %v399 = vld [vmem:[%s3] sm:$0xf]
  %v401 = vperm.slane %v399, 0
  %v402 = vperm.slane %v399, 1
  %v403 = vperm.slane %v399, 2
  %v404 = vperm.slane %v399, 3
  %v409 = vadd.f32 %v391, %v401
  %v410 = vadd.f32 %v392, %v402
  %v411 = vadd.f32 %v393, %v403
  %v412 = vadd.f32 %v394, %v404
  %v413 = vadd.f32 %v395, %v401
  %v414 = vadd.f32 %v396, %v402
  %v415 = vadd.f32 %v397, %v403
  %v416 = vadd.f32 %v398, %v404
  %v417 = vmax.f32 %v409, 0.0
  %v418 = vmax.f32 %v410, 0.0
  %v419 = vmax.f32 %v411, 0.0
  %v420 = vmax.f32 %v412, 0.0
  %v421 = vmax.f32 %v413, 0.0
  %v422 = vmax.f32 %v414, 0.0
  %v423 = vmax.f32 %v415, 0.0
  %v424 = vmax.f32 %v416, 0.0
  %vm425 = vcmask 1045504
  %v426 = vsel %vm425, %v421, -inf
  %v427 = vmax.f32 %v417, %v426
  %v428 = vrot.slane %v427, 4
  %v429 = vmax.f32 %v427, %v428
  %v430 = vrot.slane %v429, 2
  %v431 = vmax.f32 %v429, %v430
  %v432 = vrot.slane %v431, 1
  %v433 = vmax.f32 %v431, %v432
  %v434 = vsel %vm425, %v422, -inf
  %v435 = vmax.f32 %v418, %v434
  %v436 = vrot.slane %v435, 4
  %v437 = vmax.f32 %v435, %v436
  %v438 = vrot.slane %v437, 2
  %v439 = vmax.f32 %v437, %v438
  %v440 = vrot.slane %v439, 1
  %v441 = vmax.f32 %v439, %v440
  %v442 = vsel %vm425, %v423, -inf
  %v443 = vmax.f32 %v419, %v442
  %v444 = vrot.slane %v443, 4
  %v445 = vmax.f32 %v443, %v444
  %v446 = vrot.slane %v445, 2
  %v447 = vmax.f32 %v445, %v446
  %v448 = vrot.slane %v447, 1
  %v449 = vmax.f32 %v447, %v448
  %v450 = vsel %vm425, %v424, -inf
  %v451 = vmax.f32 %v420, %v450
  %v452 = vrot.slane %v451, 4
  %v453 = vmax.f32 %v451, %v452
  %v454 = vrot.slane %v453, 2
  %v455 = vmax.f32 %v453, %v454
  %v456 = vrot.slane %v455, 1
  %v457 = vmax.f32 %v455, %v456
  %s458 = scalar_lea.vmem %s0, 8
  %v459 = vld [vmem:[%s458] sm:$0xf]
  %v460 = vld [vmem:[%s458 + $0x4] sm:$0x7]
  %v461 = vld [vmem:[%s458 + $0x4] sm:$0xf]
  %v464 = vunpack.c.l.b16 %v459
  %v465 = vunpack.c.l.b16 %v461
  %v466 = vpack.c.b16 %v465, %v464
  %v468 = vshrl.u32 %v466, 16
  %v470 = vshll.u32 %v466, 16
  %v472 = vrot.slane %v470, 1
  %v473 = vor.u32 %v468, %v472
  %v475 = vsel %vm116, %v473, 0
  %477 = vmatpush.bf16.msra.mxu0 0
  %478 = vmatpush.bf16.msra.mxu0 0
  %479 = vmatpush.bf16.msra.mxu0 0
  %480 = vmatpush.bf16.msra.mxu0 0
  %481 = vmatpush.bf16.msra.mxu0 0
  %482 = vmatpush.bf16.msra.mxu0 0
  %483 = vmatpush.bf16.msra.mxu0 %v104
  %484 = vmatpush.bf16.msra.mxu0 %v100
  %485 = vmatmul.bf16.gmra.mxu0 %v475
  %v486 = vpop.f32.mrf.mxu0
  %v487 = vadd.f32 0.0, %v486
  %v488 = vpop.f32.mrf.mxu0
  %v489 = vadd.f32 0.0, %v488
  %490 = vdwg.mxu0
  %491 = vmatpush.bf16.msra.mxu0 0
  %492 = vmatpush.bf16.msra.mxu0 0
  %493 = vmatpush.bf16.msra.mxu0 0
  %494 = vmatpush.bf16.msra.mxu0 0
  %495 = vmatpush.bf16.msra.mxu0 0
  %496 = vmatpush.bf16.msra.mxu0 0
  %497 = vmatpush.bf16.msra.mxu0 %v105
  %498 = vmatpush.bf16.msra.mxu0 %v101
  %499 = vmatmul.bf16.gmra.mxu0 %v475
  %v500 = vpop.f32.mrf.mxu0
  %v501 = vadd.f32 0.0, %v500
  %v502 = vpop.f32.mrf.mxu0
  %v503 = vadd.f32 0.0, %v502
  %504 = vdwg.mxu0
  %505 = vmatpush.bf16.msra.mxu0 0
  %506 = vmatpush.bf16.msra.mxu0 0
  %507 = vmatpush.bf16.msra.mxu0 0
  %508 = vmatpush.bf16.msra.mxu0 0
  %509 = vmatpush.bf16.msra.mxu0 0
  %510 = vmatpush.bf16.msra.mxu0 0
  %511 = vmatpush.bf16.msra.mxu0 %v106
  %512 = vmatpush.bf16.msra.mxu0 %v102
  %513 = vmatmul.bf16.gmra.mxu0 %v475
  %v514 = vpop.f32.mrf.mxu0
  %v515 = vadd.f32 0.0, %v514
  %v516 = vpop.f32.mrf.mxu0
  %v517 = vadd.f32 0.0, %v516
  %518 = vdwg.mxu0
  %519 = vmatpush.bf16.msra.mxu0 0
  %520 = vmatpush.bf16.msra.mxu0 0
  %521 = vmatpush.bf16.msra.mxu0 0
  %522 = vmatpush.bf16.msra.mxu0 0
  %523 = vmatpush.bf16.msra.mxu0 0
  %524 = vmatpush.bf16.msra.mxu0 0
  %525 = vmatpush.bf16.msra.mxu0 %v107
  %526 = vmatpush.bf16.msra.mxu0 %v103
  %527 = vmatmul.bf16.gmra.mxu0 %v475
  %v528 = vpop.f32.mrf.mxu0
  %v529 = vadd.f32 0.0, %v528
  %v530 = vpop.f32.mrf.mxu0
  %v531 = vadd.f32 0.0, %v530
  %532 = vdwg.mxu0
  %v534 = vunpack.c.l.b16 %v460
  %v535 = vpack.c.b16 %v534, %v464
  %v537 = vsel %vm116, %v535, 0
  %539 = vmatpush.bf16.msra.mxu0 0
  %540 = vmatpush.bf16.msra.mxu0 0
  %541 = vmatpush.bf16.msra.mxu0 0
  %542 = vmatpush.bf16.msra.mxu0 0
  %543 = vmatpush.bf16.msra.mxu0 0
  %544 = vmatpush.bf16.msra.mxu0 0
  %545 = vmatpush.bf16.msra.mxu0 %v207
  %546 = vmatpush.bf16.msra.mxu0 %v203
  %547 = vmatmul.bf16.gmra.mxu0 %v537
  %v548 = vpop.f32.mrf.mxu0
  %v549 = vadd.f32 %v487, %v548
  %v550 = vpop.f32.mrf.mxu0
  %v551 = vadd.f32 %v489, %v550
  %552 = vdwg.mxu0
  %553 = vmatpush.bf16.msra.mxu0 0
  %554 = vmatpush.bf16.msra.mxu0 0
  %555 = vmatpush.bf16.msra.mxu0 0
  %556 = vmatpush.bf16.msra.mxu0 0
  %557 = vmatpush.bf16.msra.mxu0 0
  %558 = vmatpush.bf16.msra.mxu0 0
  %559 = vmatpush.bf16.msra.mxu0 %v208
  %560 = vmatpush.bf16.msra.mxu0 %v204
  %561 = vmatmul.bf16.gmra.mxu0 %v537
  %v562 = vpop.f32.mrf.mxu0
  %v563 = vadd.f32 %v501, %v562
  %v564 = vpop.f32.mrf.mxu0
  %v565 = vadd.f32 %v503, %v564
  %566 = vdwg.mxu0
  %567 = vmatpush.bf16.msra.mxu0 0
  %568 = vmatpush.bf16.msra.mxu0 0
  %569 = vmatpush.bf16.msra.mxu0 0
  %570 = vmatpush.bf16.msra.mxu0 0
  %571 = vmatpush.bf16.msra.mxu0 0
  %572 = vmatpush.bf16.msra.mxu0 0
  %573 = vmatpush.bf16.msra.mxu0 %v209
  %574 = vmatpush.bf16.msra.mxu0 %v205
  %575 = vmatmul.bf16.gmra.mxu0 %v537
  %v576 = vpop.f32.mrf.mxu0
  %v577 = vadd.f32 %v515, %v576
  %v578 = vpop.f32.mrf.mxu0
  %v579 = vadd.f32 %v517, %v578
  %580 = vdwg.mxu0
  %581 = vmatpush.bf16.msra.mxu0 0
  %582 = vmatpush.bf16.msra.mxu0 0
  %583 = vmatpush.bf16.msra.mxu0 0
  %584 = vmatpush.bf16.msra.mxu0 0
  %585 = vmatpush.bf16.msra.mxu0 0
  %586 = vmatpush.bf16.msra.mxu0 0
  %587 = vmatpush.bf16.msra.mxu0 %v210
  %588 = vmatpush.bf16.msra.mxu0 %v206
  %589 = vmatmul.bf16.gmra.mxu0 %v537
  %v590 = vpop.f32.mrf.mxu0
  %v591 = vadd.f32 %v529, %v590
  %v592 = vpop.f32.mrf.mxu0
  %v593 = vadd.f32 %v531, %v592
  %594 = vdwg.mxu0
  %v595 = vld [vmem:[%s458] sm:$0xe]
  %v597 = vunpack.c.l.b16 %v595
  %v598 = vpack.c.b16 %v465, %v597
  %v599 = vrot.slane %v598, 1
  %v601 = vsel %vm116, %v599, 0
  %603 = vmatpush.bf16.msra.mxu0 0
  %604 = vmatpush.bf16.msra.mxu0 0
  %605 = vmatpush.bf16.msra.mxu0 0
  %606 = vmatpush.bf16.msra.mxu0 0
  %607 = vmatpush.bf16.msra.mxu0 0
  %608 = vmatpush.bf16.msra.mxu0 0
  %609 = vmatpush.bf16.msra.mxu0 %v320
  %610 = vmatpush.bf16.msra.mxu0 %v316
  %611 = vmatmul.bf16.gmra.mxu0 %v601
  %v612 = vpop.f32.mrf.mxu0
  %v613 = vadd.f32 0.0, %v612
  %v614 = vpop.f32.mrf.mxu0
  %v615 = vadd.f32 0.0, %v614
  %616 = vdwg.mxu0
  %617 = vmatpush.bf16.msra.mxu0 0
  %618 = vmatpush.bf16.msra.mxu0 0
  %619 = vmatpush.bf16.msra.mxu0 0
  %620 = vmatpush.bf16.msra.mxu0 0
  %621 = vmatpush.bf16.msra.mxu0 0
  %622 = vmatpush.bf16.msra.mxu0 0
  %623 = vmatpush.bf16.msra.mxu0 %v321
  %624 = vmatpush.bf16.msra.mxu0 %v317
  %625 = vmatmul.bf16.gmra.mxu0 %v601
  %v626 = vpop.f32.mrf.mxu0
  %v627 = vadd.f32 0.0, %v626
  %v628 = vpop.f32.mrf.mxu0
  %v629 = vadd.f32 0.0, %v628
  %630 = vdwg.mxu0
  %631 = vmatpush.bf16.msra.mxu0 0
  %632 = vmatpush.bf16.msra.mxu0 0
  %633 = vmatpush.bf16.msra.mxu0 0
  %634 = vmatpush.bf16.msra.mxu0 0
  %635 = vmatpush.bf16.msra.mxu0 0
  %636 = vmatpush.bf16.msra.mxu0 0
  %637 = vmatpush.bf16.msra.mxu0 %v322
  %638 = vmatpush.bf16.msra.mxu0 %v318
  %639 = vmatmul.bf16.gmra.mxu0 %v601
  %v640 = vpop.f32.mrf.mxu0
  %v641 = vadd.f32 0.0, %v640
  %v642 = vpop.f32.mrf.mxu0
  %v643 = vadd.f32 0.0, %v642
  %644 = vdwg.mxu0
  %645 = vmatpush.bf16.msra.mxu0 0
  %646 = vmatpush.bf16.msra.mxu0 0
  %647 = vmatpush.bf16.msra.mxu0 0
  %648 = vmatpush.bf16.msra.mxu0 0
  %649 = vmatpush.bf16.msra.mxu0 0
  %650 = vmatpush.bf16.msra.mxu0 0
  %651 = vmatpush.bf16.msra.mxu0 %v323
  %652 = vmatpush.bf16.msra.mxu0 %v319
  %653 = vmatmul.bf16.gmra.mxu0 %v601
  %v654 = vpop.f32.mrf.mxu0
  %v655 = vadd.f32 0.0, %v654
  %v656 = vpop.f32.mrf.mxu0
  %v657 = vadd.f32 0.0, %v656
  %658 = vdwg.mxu0
  %v659 = vadd.f32 %v549, %v613
  %v660 = vadd.f32 %v563, %v627
  %v661 = vadd.f32 %v577, %v641
  %v662 = vadd.f32 %v591, %v655
  %v663 = vadd.f32 %v551, %v615
  %v664 = vadd.f32 %v565, %v629
  %v665 = vadd.f32 %v579, %v643
  %v666 = vadd.f32 %v593, %v657
  %v667 = vadd.f32 %v659, %v401
  %v668 = vadd.f32 %v660, %v402
  %v669 = vadd.f32 %v661, %v403
  %v670 = vadd.f32 %v662, %v404
  %v671 = vadd.f32 %v663, %v401
  %v672 = vadd.f32 %v664, %v402
  %v673 = vadd.f32 %v665, %v403
  %v674 = vadd.f32 %v666, %v404
  %v675 = vmax.f32 %v667, 0.0
  %v676 = vmax.f32 %v668, 0.0
  %v677 = vmax.f32 %v669, 0.0
  %v678 = vmax.f32 %v670, 0.0
  %v679 = vmax.f32 %v671, 0.0
  %v680 = vmax.f32 %v672, 0.0
  %v681 = vmax.f32 %v673, 0.0
  %v682 = vmax.f32 %v674, 0.0
  %v683 = vsel %vm425, %v679, -inf
  %v684 = vmax.f32 %v675, %v683
  %v685 = vrot.slane %v684, 4
  %v686 = vmax.f32 %v684, %v685
  %v687 = vrot.slane %v686, 2
  %v688 = vmax.f32 %v686, %v687
  %v689 = vrot.slane %v688, 1
  %v690 = vmax.f32 %v688, %v689
  %v691 = vsel %vm425, %v680, -inf
  %v692 = vmax.f32 %v676, %v691
  %v693 = vrot.slane %v692, 4
  %v694 = vmax.f32 %v692, %v693
  %v695 = vrot.slane %v694, 2
  %v696 = vmax.f32 %v694, %v695
  %v697 = vrot.slane %v696, 1
  %v698 = vmax.f32 %v696, %v697
  %v699 = vsel %vm425, %v681, -inf
  %v700 = vmax.f32 %v677, %v699
  %v701 = vrot.slane %v700, 4
  %v702 = vmax.f32 %v700, %v701
  %v703 = vrot.slane %v702, 2
  %v704 = vmax.f32 %v702, %v703
  %v705 = vrot.slane %v704, 1
  %v706 = vmax.f32 %v704, %v705
  %v707 = vsel %vm425, %v682, -inf
  %v708 = vmax.f32 %v678, %v707
  %v709 = vrot.slane %v708, 4
  %v710 = vmax.f32 %v708, %v709
  %v711 = vrot.slane %v710, 2
  %v712 = vmax.f32 %v710, %v711
  %v713 = vrot.slane %v712, 1
  %v714 = vmax.f32 %v712, %v713
  %vm715 = vcmask 1040384
  %v716 = vsel %vm715, %v433, %v690
  %v717 = vsel %vm715, %v441, %v698
  %v718 = vsel %vm715, %v449, %v706
  %v719 = vsel %vm715, %v457, %v714
  %v720 = vld [vmem:[%s1] sm:$0xf]
  %v721 = vld [vmem:[%s1 + $0x4] sm:$0x7]
  %v722 = vld [vmem:[%s4] sm:$0xff]
  %v723 = vld [vmem:[%s4 + $0x8] sm:$0xff]
  %v724 = vld [vmem:[%s4 + $0x10] sm:$0xff]
  %v725 = vld [vmem:[%s4 + $0x18] sm:$0xff]
  %v726 = vld [vmem:[%s1 + $0x4] sm:$0xf]
  %s727 = scalar_lea.vmem %s4, 32
  %v728 = vld [vmem:[%s727] sm:$0xff]
  %v729 = vld [vmem:[%s727 + $0x8] sm:$0xff]
  %v730 = vld [vmem:[%s727 + $0x10] sm:$0xff]
  %v731 = vld [vmem:[%s727 + $0x18] sm:$0xff]
  %v734 = vunpack.c.l.b16 %v720
  %v735 = vunpack.c.l.b16 %v726
  %v736 = vpack.c.b16 %v735, %v734
  %v738 = vshrl.u32 %v736, 16
  %v740 = vshll.u32 %v736, 16
  %v742 = vrot.slane %v740, 1
  %v743 = vor.u32 %v738, %v742
  %v748 = vunpack.c.l.b16 %v728
  %v749 = vunpack.c.h.b16 %v728
  %v750 = vunpack.c.l.b16 %v729
  %v751 = vunpack.c.h.b16 %v729
  %v752 = vunpack.c.l.b16 %v730
  %v753 = vunpack.c.h.b16 %v730
  %v754 = vunpack.c.l.b16 %v731
  %v755 = vunpack.c.h.b16 %v731
  %v756 = vpack.c.b16 %v752, %v748
  %v757 = vpack.c.b16 %v753, %v749
  %v758 = vpack.c.b16 %v754, %v750
  %v759 = vpack.c.b16 %v755, %v751
  %vm764 = vcmask 130048
  %v766 = vsel %vm764, %v743, 0
  %768 = vmatpush.bf16.msra.mxu0 0
  %769 = vmatpush.bf16.msra.mxu0 0
  %770 = vmatpush.bf16.msra.mxu0 0
  %771 = vmatpush.bf16.msra.mxu0 0
  %772 = vmatpush.bf16.msra.mxu0 0
  %773 = vmatpush.bf16.msra.mxu0 0
  %774 = vmatpush.bf16.msra.mxu0 0
  %775 = vmatpush.bf16.msra.mxu0 %v756
  %776 = vmatmul.bf16.gmra.mxu0 %v766
  %v777 = vpop.f32.mrf.mxu0
  %v778 = vadd.f32 0.0, %v777
  %v779 = vpop.f32.mrf.mxu0
  %v780 = vadd.f32 0.0, %v779
  %781 = vdwg.mxu0
  %782 = vmatpush.bf16.msra.mxu0 0
  %783 = vmatpush.bf16.msra.mxu0 0
  %784 = vmatpush.bf16.msra.mxu0 0
  %785 = vmatpush.bf16.msra.mxu0 0
  %786 = vmatpush.bf16.msra.mxu0 0
  %787 = vmatpush.bf16.msra.mxu0 0
  %788 = vmatpush.bf16.msra.mxu0 0
  %789 = vmatpush.bf16.msra.mxu0 %v757
  %790 = vmatmul.bf16.gmra.mxu0 %v766
  %v791 = vpop.f32.mrf.mxu0
  %v792 = vadd.f32 0.0, %v791
  %v793 = vpop.f32.mrf.mxu0
  %v794 = vadd.f32 0.0, %v793
  %795 = vdwg.mxu0
  %796 = vmatpush.bf16.msra.mxu0 0
  %797 = vmatpush.bf16.msra.mxu0 0
  %798 = vmatpush.bf16.msra.mxu0 0
  %799 = vmatpush.bf16.msra.mxu0 0
  %800 = vmatpush.bf16.msra.mxu0 0
  %801 = vmatpush.bf16.msra.mxu0 0
  %802 = vmatpush.bf16.msra.mxu0 0
  %803 = vmatpush.bf16.msra.mxu0 %v758
  %804 = vmatmul.bf16.gmra.mxu0 %v766
  %v805 = vpop.f32.mrf.mxu0
  %v806 = vadd.f32 0.0, %v805
  %v807 = vpop.f32.mrf.mxu0
  %v808 = vadd.f32 0.0, %v807
  %809 = vdwg.mxu0
  %810 = vmatpush.bf16.msra.mxu0 0
  %811 = vmatpush.bf16.msra.mxu0 0
  %812 = vmatpush.bf16.msra.mxu0 0
  %813 = vmatpush.bf16.msra.mxu0 0
  %814 = vmatpush.bf16.msra.mxu0 0
  %815 = vmatpush.bf16.msra.mxu0 0
  %816 = vmatpush.bf16.msra.mxu0 0
  %817 = vmatpush.bf16.msra.mxu0 %v759
  %818 = vmatmul.bf16.gmra.mxu0 %v766
  %v819 = vpop.f32.mrf.mxu0
  %v820 = vadd.f32 0.0, %v819
  %v821 = vpop.f32.mrf.mxu0
  %v822 = vadd.f32 0.0, %v821
  %823 = vdwg.mxu0
  %v825 = vunpack.c.l.b16 %v721
  %v826 = vpack.c.b16 %v825, %v734
  %v831 = vunpack.c.l.b16 %v722
  %v832 = vunpack.c.h.b16 %v722
  %v833 = vunpack.c.l.b16 %v723
  %v834 = vunpack.c.h.b16 %v723
  %v835 = vunpack.c.l.b16 %v724
  %v836 = vunpack.c.h.b16 %v724
  %v837 = vunpack.c.l.b16 %v725
  %v838 = vunpack.c.h.b16 %v725
  %v839 = vpack.c.b16 %v835, %v831
  %v840 = vpack.c.b16 %v836, %v832
  %v841 = vpack.c.b16 %v837, %v833
  %v842 = vpack.c.b16 %v838, %v834
  %v848 = vsel %vm764, %v826, 0
  %850 = vmatpush.bf16.msra.mxu0 0
  %851 = vmatpush.bf16.msra.mxu0 0
  %852 = vmatpush.bf16.msra.mxu0 0
  %853 = vmatpush.bf16.msra.mxu0 0
  %854 = vmatpush.bf16.msra.mxu0 0
  %855 = vmatpush.bf16.msra.mxu0 0
  %856 = vmatpush.bf16.msra.mxu0 0
  %857 = vmatpush.bf16.msra.mxu0 %v839
  %858 = vmatmul.bf16.gmra.mxu0 %v848
  %v859 = vpop.f32.mrf.mxu0
  %v860 = vadd.f32 %v778, %v859
  %v861 = vpop.f32.mrf.mxu0
  %v862 = vadd.f32 %v780, %v861
  %863 = vdwg.mxu0
  %864 = vmatpush.bf16.msra.mxu0 0
  %865 = vmatpush.bf16.msra.mxu0 0
  %866 = vmatpush.bf16.msra.mxu0 0
  %867 = vmatpush.bf16.msra.mxu0 0
  %868 = vmatpush.bf16.msra.mxu0 0
  %869 = vmatpush.bf16.msra.mxu0 0
  %870 = vmatpush.bf16.msra.mxu0 0
  %871 = vmatpush.bf16.msra.mxu0 %v840
  %872 = vmatmul.bf16.gmra.mxu0 %v848
  %v873 = vpop.f32.mrf.mxu0
  %v874 = vadd.f32 %v792, %v873
  %v875 = vpop.f32.mrf.mxu0
  %v876 = vadd.f32 %v794, %v875
  %877 = vdwg.mxu0
  %878 = vmatpush.bf16.msra.mxu0 0
  %879 = vmatpush.bf16.msra.mxu0 0
  %880 = vmatpush.bf16.msra.mxu0 0
  %881 = vmatpush.bf16.msra.mxu0 0
  %882 = vmatpush.bf16.msra.mxu0 0
  %883 = vmatpush.bf16.msra.mxu0 0
  %884 = vmatpush.bf16.msra.mxu0 0
  %885 = vmatpush.bf16.msra.mxu0 %v841
  %886 = vmatmul.bf16.gmra.mxu0 %v848
  %v887 = vpop.f32.mrf.mxu0
  %v888 = vadd.f32 %v806, %v887
  %v889 = vpop.f32.mrf.mxu0
  %v890 = vadd.f32 %v808, %v889
  %891 = vdwg.mxu0
  %892 = vmatpush.bf16.msra.mxu0 0
  %893 = vmatpush.bf16.msra.mxu0 0
  %894 = vmatpush.bf16.msra.mxu0 0
  %895 = vmatpush.bf16.msra.mxu0 0
  %896 = vmatpush.bf16.msra.mxu0 0
  %897 = vmatpush.bf16.msra.mxu0 0
  %898 = vmatpush.bf16.msra.mxu0 0
  %899 = vmatpush.bf16.msra.mxu0 %v842
  %900 = vmatmul.bf16.gmra.mxu0 %v848
  %v901 = vpop.f32.mrf.mxu0
  %v902 = vadd.f32 %v820, %v901
  %v903 = vpop.f32.mrf.mxu0
  %v904 = vadd.f32 %v822, %v903
  %905 = vdwg.mxu0
  %v906 = vld [vmem:[%s1] sm:$0xe]
  %s907 = scalar_lea.vmem %s4, 64
  %v908 = vld [vmem:[%s907] sm:$0xff]
  %v909 = vld [vmem:[%s907 + $0x8] sm:$0xff]
  %v910 = vld [vmem:[%s907 + $0x10] sm:$0xff]
  %v911 = vld [vmem:[%s907 + $0x18] sm:$0xff]
  %v913 = vunpack.c.l.b16 %v906
  %v914 = vpack.c.b16 %v735, %v913
  %v915 = vrot.slane %v914, 1
  %v920 = vunpack.c.l.b16 %v908
  %v921 = vunpack.c.h.b16 %v908
  %v922 = vunpack.c.l.b16 %v909
  %v923 = vunpack.c.h.b16 %v909
  %v924 = vunpack.c.l.b16 %v910
  %v925 = vunpack.c.h.b16 %v910
  %v926 = vunpack.c.l.b16 %v911
  %v927 = vunpack.c.h.b16 %v911
  %v928 = vpack.c.b16 %v924, %v920
  %v929 = vpack.c.b16 %v925, %v921
  %v930 = vpack.c.b16 %v926, %v922
  %v931 = vpack.c.b16 %v927, %v923
  %v937 = vsel %vm764, %v915, 0
  %939 = vmatpush.bf16.msra.mxu0 0
  %940 = vmatpush.bf16.msra.mxu0 0
  %941 = vmatpush.bf16.msra.mxu0 0
  %942 = vmatpush.bf16.msra.mxu0 0
  %943 = vmatpush.bf16.msra.mxu0 0
  %944 = vmatpush.bf16.msra.mxu0 0
  %945 = vmatpush.bf16.msra.mxu0 0
  %946 = vmatpush.bf16.msra.mxu0 %v928
  %947 = vmatmul.bf16.gmra.mxu0 %v937
  %v948 = vpop.f32.mrf.mxu0
  %v949 = vadd.f32 0.0, %v948
  %v950 = vpop.f32.mrf.mxu0
  %v951 = vadd.f32 0.0, %v950
  %952 = vdwg.mxu0
  %953 = vmatpush.bf16.msra.mxu0 0
  %954 = vmatpush.bf16.msra.mxu0 0
  %955 = vmatpush.bf16.msra.mxu0 0
  %956 = vmatpush.bf16.msra.mxu0 0
  %957 = vmatpush.bf16.msra.mxu0 0
  %958 = vmatpush.bf16.msra.mxu0 0
  %959 = vmatpush.bf16.msra.mxu0 0
  %960 = vmatpush.bf16.msra.mxu0 %v929
  %961 = vmatmul.bf16.gmra.mxu0 %v937
  %v962 = vpop.f32.mrf.mxu0
  %v963 = vadd.f32 0.0, %v962
  %v964 = vpop.f32.mrf.mxu0
  %v965 = vadd.f32 0.0, %v964
  %966 = vdwg.mxu0
  %967 = vmatpush.bf16.msra.mxu0 0
  %968 = vmatpush.bf16.msra.mxu0 0
  %969 = vmatpush.bf16.msra.mxu0 0
  %970 = vmatpush.bf16.msra.mxu0 0
  %971 = vmatpush.bf16.msra.mxu0 0
  %972 = vmatpush.bf16.msra.mxu0 0
  %973 = vmatpush.bf16.msra.mxu0 0
  %974 = vmatpush.bf16.msra.mxu0 %v930
  %975 = vmatmul.bf16.gmra.mxu0 %v937
  %v976 = vpop.f32.mrf.mxu0
  %v977 = vadd.f32 0.0, %v976
  %v978 = vpop.f32.mrf.mxu0
  %v979 = vadd.f32 0.0, %v978
  %980 = vdwg.mxu0
  %981 = vmatpush.bf16.msra.mxu0 0
  %982 = vmatpush.bf16.msra.mxu0 0
  %983 = vmatpush.bf16.msra.mxu0 0
  %984 = vmatpush.bf16.msra.mxu0 0
  %985 = vmatpush.bf16.msra.mxu0 0
  %986 = vmatpush.bf16.msra.mxu0 0
  %987 = vmatpush.bf16.msra.mxu0 0
  %988 = vmatpush.bf16.msra.mxu0 %v931
  %989 = vmatmul.bf16.gmra.mxu0 %v937
  %v990 = vpop.f32.mrf.mxu0
  %v991 = vadd.f32 0.0, %v990
  %v992 = vpop.f32.mrf.mxu0
  %v993 = vadd.f32 0.0, %v992
  %994 = vdwg.mxu0
  %v995 = vadd.f32 %v860, %v949
  %v996 = vadd.f32 %v874, %v963
  %v997 = vadd.f32 %v888, %v977
  %v998 = vadd.f32 %v902, %v991
  %v999 = vadd.f32 %v862, %v951
  %v1000 = vadd.f32 %v876, %v965
  %v1001 = vadd.f32 %v890, %v979
  %v1002 = vadd.f32 %v904, %v993
  %v1003 = vld [vmem:[%s5] sm:$0xf]
  %v1005 = vperm.slane %v1003, 0
  %v1006 = vperm.slane %v1003, 1
  %v1007 = vperm.slane %v1003, 2
  %v1008 = vperm.slane %v1003, 3
  %v1013 = vadd.f32 %v995, %v1005
  %v1014 = vadd.f32 %v996, %v1006
  %v1015 = vadd.f32 %v997, %v1007
  %v1016 = vadd.f32 %v998, %v1008
  %v1017 = vadd.f32 %v999, %v1005
  %v1018 = vadd.f32 %v1000, %v1006
  %v1019 = vadd.f32 %v1001, %v1007
  %v1020 = vadd.f32 %v1002, %v1008
  %v1021 = vmax.f32 %v1013, 0.0
  %v1022 = vmax.f32 %v1014, 0.0
  %v1023 = vmax.f32 %v1015, 0.0
  %v1024 = vmax.f32 %v1016, 0.0
  %v1025 = vmax.f32 %v1017, 0.0
  %v1026 = vmax.f32 %v1018, 0.0
  %v1027 = vmax.f32 %v1019, 0.0
  %v1028 = vmax.f32 %v1020, 0.0
  %v1029 = vsel %vm425, %v1025, -inf
  %v1030 = vmax.f32 %v1021, %v1029
  %v1031 = vrot.slane %v1030, 4
  %v1032 = vmax.f32 %v1030, %v1031
  %v1033 = vrot.slane %v1032, 2
  %v1034 = vmax.f32 %v1032, %v1033
  %v1035 = vrot.slane %v1034, 1
  %v1036 = vmax.f32 %v1034, %v1035
  %v1037 = vsel %vm425, %v1026, -inf
  %v1038 = vmax.f32 %v1022, %v1037
  %v1039 = vrot.slane %v1038, 4
  %v1040 = vmax.f32 %v1038, %v1039
  %v1041 = vrot.slane %v1040, 2
  %v1042 = vmax.f32 %v1040, %v1041
  %v1043 = vrot.slane %v1042, 1
  %v1044 = vmax.f32 %v1042, %v1043
  %v1045 = vsel %vm425, %v1027, -inf
  %v1046 = vmax.f32 %v1023, %v1045
  %v1047 = vrot.slane %v1046, 4
  %v1048 = vmax.f32 %v1046, %v1047
  %v1049 = vrot.slane %v1048, 2
  %v1050 = vmax.f32 %v1048, %v1049
  %v1051 = vrot.slane %v1050, 1
  %v1052 = vmax.f32 %v1050, %v1051
  %v1053 = vsel %vm425, %v1028, -inf
  %v1054 = vmax.f32 %v1024, %v1053
  %v1055 = vrot.slane %v1054, 4
  %v1056 = vmax.f32 %v1054, %v1055
  %v1057 = vrot.slane %v1056, 2
  %v1058 = vmax.f32 %v1056, %v1057
  %v1059 = vrot.slane %v1058, 1
  %v1060 = vmax.f32 %v1058, %v1059
  %s1061 = scalar_lea.vmem %s1, 8
  %v1062 = vld [vmem:[%s1061] sm:$0xf]
  %v1063 = vld [vmem:[%s1061 + $0x4] sm:$0x7]
  %v1064 = vld [vmem:[%s1061 + $0x4] sm:$0xf]
  %v1067 = vunpack.c.l.b16 %v1062
  %v1068 = vunpack.c.l.b16 %v1064
  %v1069 = vpack.c.b16 %v1068, %v1067
  %v1071 = vshrl.u32 %v1069, 16
  %v1073 = vshll.u32 %v1069, 16
  %v1075 = vrot.slane %v1073, 1
  %v1076 = vor.u32 %v1071, %v1075
  %v1078 = vsel %vm764, %v1076, 0
  %1080 = vmatpush.bf16.msra.mxu0 0
  %1081 = vmatpush.bf16.msra.mxu0 0
  %1082 = vmatpush.bf16.msra.mxu0 0
  %1083 = vmatpush.bf16.msra.mxu0 0
  %1084 = vmatpush.bf16.msra.mxu0 0
  %1085 = vmatpush.bf16.msra.mxu0 0
  %1086 = vmatpush.bf16.msra.mxu0 0
  %1087 = vmatpush.bf16.msra.mxu0 %v756
  %1088 = vmatmul.bf16.gmra.mxu0 %v1078
  %v1089 = vpop.f32.mrf.mxu0
  %v1090 = vadd.f32 0.0, %v1089
  %v1091 = vpop.f32.mrf.mxu0
  %v1092 = vadd.f32 0.0, %v1091
  %1093 = vdwg.mxu0
  %1094 = vmatpush.bf16.msra.mxu0 0
  %1095 = vmatpush.bf16.msra.mxu0 0
  %1096 = vmatpush.bf16.msra.mxu0 0
  %1097 = vmatpush.bf16.msra.mxu0 0
  %1098 = vmatpush.bf16.msra.mxu0 0
  %1099 = vmatpush.bf16.msra.mxu0 0
  %1100 = vmatpush.bf16.msra.mxu0 0
  %1101 = vmatpush.bf16.msra.mxu0 %v757
  %1102 = vmatmul.bf16.gmra.mxu0 %v1078
  %v1103 = vpop.f32.mrf.mxu0
  %v1104 = vadd.f32 0.0, %v1103
  %v1105 = vpop.f32.mrf.mxu0
  %v1106 = vadd.f32 0.0, %v1105
  %1107 = vdwg.mxu0
  %1108 = vmatpush.bf16.msra.mxu0 0
  %1109 = vmatpush.bf16.msra.mxu0 0
  %1110 = vmatpush.bf16.msra.mxu0 0
  %1111 = vmatpush.bf16.msra.mxu0 0
  %1112 = vmatpush.bf16.msra.mxu0 0
  %1113 = vmatpush.bf16.msra.mxu0 0
  %1114 = vmatpush.bf16.msra.mxu0 0
  %1115 = vmatpush.bf16.msra.mxu0 %v758
  %1116 = vmatmul.bf16.gmra.mxu0 %v1078
  %v1117 = vpop.f32.mrf.mxu0
  %v1118 = vadd.f32 0.0, %v1117
  %v1119 = vpop.f32.mrf.mxu0
  %v1120 = vadd.f32 0.0, %v1119
  %1121 = vdwg.mxu0
  %1122 = vmatpush.bf16.msra.mxu0 0
  %1123 = vmatpush.bf16.msra.mxu0 0
  %1124 = vmatpush.bf16.msra.mxu0 0
  %1125 = vmatpush.bf16.msra.mxu0 0
  %1126 = vmatpush.bf16.msra.mxu0 0
  %1127 = vmatpush.bf16.msra.mxu0 0
  %1128 = vmatpush.bf16.msra.mxu0 0
  %1129 = vmatpush.bf16.msra.mxu0 %v759
  %1130 = vmatmul.bf16.gmra.mxu0 %v1078
  %v1131 = vpop.f32.mrf.mxu0
  %v1132 = vadd.f32 0.0, %v1131
  %v1133 = vpop.f32.mrf.mxu0
  %v1134 = vadd.f32 0.0, %v1133
  %1135 = vdwg.mxu0
  %v1137 = vunpack.c.l.b16 %v1063
  %v1138 = vpack.c.b16 %v1137, %v1067
  %v1140 = vsel %vm764, %v1138, 0
  %1142 = vmatpush.bf16.msra.mxu0 0
  %1143 = vmatpush.bf16.msra.mxu0 0
  %1144 = vmatpush.bf16.msra.mxu0 0
  %1145 = vmatpush.bf16.msra.mxu0 0
  %1146 = vmatpush.bf16.msra.mxu0 0
  %1147 = vmatpush.bf16.msra.mxu0 0
  %1148 = vmatpush.bf16.msra.mxu0 0
  %1149 = vmatpush.bf16.msra.mxu0 %v839
  %1150 = vmatmul.bf16.gmra.mxu0 %v1140
  %v1151 = vpop.f32.mrf.mxu0
  %v1152 = vadd.f32 %v1090, %v1151
  %v1153 = vpop.f32.mrf.mxu0
  %v1154 = vadd.f32 %v1092, %v1153
  %1155 = vdwg.mxu0
  %1156 = vmatpush.bf16.msra.mxu0 0
  %1157 = vmatpush.bf16.msra.mxu0 0
  %1158 = vmatpush.bf16.msra.mxu0 0
  %1159 = vmatpush.bf16.msra.mxu0 0
  %1160 = vmatpush.bf16.msra.mxu0 0
  %1161 = vmatpush.bf16.msra.mxu0 0
  %1162 = vmatpush.bf16.msra.mxu0 0
  %1163 = vmatpush.bf16.msra.mxu0 %v840
  %1164 = vmatmul.bf16.gmra.mxu0 %v1140
  %v1165 = vpop.f32.mrf.mxu0
  %v1166 = vadd.f32 %v1104, %v1165
  %v1167 = vpop.f32.mrf.mxu0
  %v1168 = vadd.f32 %v1106, %v1167
  %1169 = vdwg.mxu0
  %1170 = vmatpush.bf16.msra.mxu0 0
  %1171 = vmatpush.bf16.msra.mxu0 0
  %1172 = vmatpush.bf16.msra.mxu0 0
  %1173 = vmatpush.bf16.msra.mxu0 0
  %1174 = vmatpush.bf16.msra.mxu0 0
  %1175 = vmatpush.bf16.msra.mxu0 0
  %1176 = vmatpush.bf16.msra.mxu0 0
  %1177 = vmatpush.bf16.msra.mxu0 %v841
  %1178 = vmatmul.bf16.gmra.mxu0 %v1140
  %v1179 = vpop.f32.mrf.mxu0
  %v1180 = vadd.f32 %v1118, %v1179
  %v1181 = vpop.f32.mrf.mxu0
  %v1182 = vadd.f32 %v1120, %v1181
  %1183 = vdwg.mxu0
  %1184 = vmatpush.bf16.msra.mxu0 0
  %1185 = vmatpush.bf16.msra.mxu0 0
  %1186 = vmatpush.bf16.msra.mxu0 0
  %1187 = vmatpush.bf16.msra.mxu0 0
  %1188 = vmatpush.bf16.msra.mxu0 0
  %1189 = vmatpush.bf16.msra.mxu0 0
  %1190 = vmatpush.bf16.msra.mxu0 0
  %1191 = vmatpush.bf16.msra.mxu0 %v842
  %1192 = vmatmul.bf16.gmra.mxu0 %v1140
  %v1193 = vpop.f32.mrf.mxu0
  %v1194 = vadd.f32 %v1132, %v1193
  %v1195 = vpop.f32.mrf.mxu0
  %v1196 = vadd.f32 %v1134, %v1195
  %1197 = vdwg.mxu0
  %v1198 = vld [vmem:[%s1061] sm:$0xe]
  %v1200 = vunpack.c.l.b16 %v1198
  %v1201 = vpack.c.b16 %v1068, %v1200
  %v1202 = vrot.slane %v1201, 1
  %v1204 = vsel %vm764, %v1202, 0
  %1206 = vmatpush.bf16.msra.mxu0 0
  %1207 = vmatpush.bf16.msra.mxu0 0
  %1208 = vmatpush.bf16.msra.mxu0 0
  %1209 = vmatpush.bf16.msra.mxu0 0
  %1210 = vmatpush.bf16.msra.mxu0 0
  %1211 = vmatpush.bf16.msra.mxu0 0
  %1212 = vmatpush.bf16.msra.mxu0 0
  %1213 = vmatpush.bf16.msra.mxu0 %v928
  %1214 = vmatmul.bf16.gmra.mxu0 %v1204
  %v1215 = vpop.f32.mrf.mxu0
  %v1216 = vadd.f32 0.0, %v1215
  %v1217 = vpop.f32.mrf.mxu0
  %v1218 = vadd.f32 0.0, %v1217
  %1219 = vdwg.mxu0
  %1220 = vmatpush.bf16.msra.mxu0 0
  %1221 = vmatpush.bf16.msra.mxu0 0
  %1222 = vmatpush.bf16.msra.mxu0 0
  %1223 = vmatpush.bf16.msra.mxu0 0
  %1224 = vmatpush.bf16.msra.mxu0 0
  %1225 = vmatpush.bf16.msra.mxu0 0
  %1226 = vmatpush.bf16.msra.mxu0 0
  %1227 = vmatpush.bf16.msra.mxu0 %v929
  %1228 = vmatmul.bf16.gmra.mxu0 %v1204
  %v1229 = vpop.f32.mrf.mxu0
  %v1230 = vadd.f32 0.0, %v1229
  %v1231 = vpop.f32.mrf.mxu0
  %v1232 = vadd.f32 0.0, %v1231
  %1233 = vdwg.mxu0
  %1234 = vmatpush.bf16.msra.mxu0 0
  %1235 = vmatpush.bf16.msra.mxu0 0
  %1236 = vmatpush.bf16.msra.mxu0 0
  %1237 = vmatpush.bf16.msra.mxu0 0
  %1238 = vmatpush.bf16.msra.mxu0 0
  %1239 = vmatpush.bf16.msra.mxu0 0
  %1240 = vmatpush.bf16.msra.mxu0 0
  %1241 = vmatpush.bf16.msra.mxu0 %v930
  %1242 = vmatmul.bf16.gmra.mxu0 %v1204
  %v1243 = vpop.f32.mrf.mxu0
  %v1244 = vadd.f32 0.0, %v1243
  %v1245 = vpop.f32.mrf.mxu0
  %v1246 = vadd.f32 0.0, %v1245
  %1247 = vdwg.mxu0
  %1248 = vmatpush.bf16.msra.mxu0 0
  %1249 = vmatpush.bf16.msra.mxu0 0
  %1250 = vmatpush.bf16.msra.mxu0 0
  %1251 = vmatpush.bf16.msra.mxu0 0
  %1252 = vmatpush.bf16.msra.mxu0 0
  %1253 = vmatpush.bf16.msra.mxu0 0
  %1254 = vmatpush.bf16.msra.mxu0 0
  %1255 = vmatpush.bf16.msra.mxu0 %v931
  %1256 = vmatmul.bf16.gmra.mxu0 %v1204
  %v1257 = vpop.f32.mrf.mxu0
  %v1258 = vadd.f32 0.0, %v1257
  %v1259 = vpop.f32.mrf.mxu0
  %v1260 = vadd.f32 0.0, %v1259
  %1261 = vdwg.mxu0
  %v1262 = vadd.f32 %v1152, %v1216
  %v1263 = vadd.f32 %v1166, %v1230
  %v1264 = vadd.f32 %v1180, %v1244
  %v1265 = vadd.f32 %v1194, %v1258
  %v1266 = vadd.f32 %v1154, %v1218
  %v1267 = vadd.f32 %v1168, %v1232
  %v1268 = vadd.f32 %v1182, %v1246
  %v1269 = vadd.f32 %v1196, %v1260
  %v1270 = vadd.f32 %v1262, %v1005
  %v1271 = vadd.f32 %v1263, %v1006
  %v1272 = vadd.f32 %v1264, %v1007
  %v1273 = vadd.f32 %v1265, %v1008
  %v1274 = vadd.f32 %v1266, %v1005
  %v1275 = vadd.f32 %v1267, %v1006
  %v1276 = vadd.f32 %v1268, %v1007
  %v1277 = vadd.f32 %v1269, %v1008
  %v1278 = vmax.f32 %v1270, 0.0
  %v1279 = vmax.f32 %v1271, 0.0
  %v1280 = vmax.f32 %v1272, 0.0
  %v1281 = vmax.f32 %v1273, 0.0
  %v1282 = vmax.f32 %v1274, 0.0
  %v1283 = vmax.f32 %v1275, 0.0
  %v1284 = vmax.f32 %v1276, 0.0
  %v1285 = vmax.f32 %v1277, 0.0
  %v1286 = vsel %vm425, %v1282, -inf
  %v1287 = vmax.f32 %v1278, %v1286
  %v1288 = vrot.slane %v1287, 4
  %v1289 = vmax.f32 %v1287, %v1288
  %v1290 = vrot.slane %v1289, 2
  %v1291 = vmax.f32 %v1289, %v1290
  %v1292 = vrot.slane %v1291, 1
  %v1293 = vmax.f32 %v1291, %v1292
  %v1294 = vsel %vm425, %v1283, -inf
  %v1295 = vmax.f32 %v1279, %v1294
  %v1296 = vrot.slane %v1295, 4
  %v1297 = vmax.f32 %v1295, %v1296
  %v1298 = vrot.slane %v1297, 2
  %v1299 = vmax.f32 %v1297, %v1298
  %v1300 = vrot.slane %v1299, 1
  %v1301 = vmax.f32 %v1299, %v1300
  %v1302 = vsel %vm425, %v1284, -inf
  %v1303 = vmax.f32 %v1280, %v1302
  %v1304 = vrot.slane %v1303, 4
  %v1305 = vmax.f32 %v1303, %v1304
  %v1306 = vrot.slane %v1305, 2
  %v1307 = vmax.f32 %v1305, %v1306
  %v1308 = vrot.slane %v1307, 1
  %v1309 = vmax.f32 %v1307, %v1308
  %v1310 = vsel %vm425, %v1285, -inf
  %v1311 = vmax.f32 %v1281, %v1310
  %v1312 = vrot.slane %v1311, 4
  %v1313 = vmax.f32 %v1311, %v1312
  %v1314 = vrot.slane %v1313, 2
  %v1315 = vmax.f32 %v1313, %v1314
  %v1316 = vrot.slane %v1315, 1
  %v1317 = vmax.f32 %v1315, %v1316
  %v1318 = vsel %vm715, %v1036, %v1293
  %v1319 = vsel %vm715, %v1044, %v1301
  %v1320 = vsel %vm715, %v1052, %v1309
  %v1321 = vsel %vm715, %v1060, %v1317
  %v1322 = vpack.c.bf16 %v716, %v716
  %v1323 = vpack.c.bf16 %v717, %v717
  %v1324 = vpack.c.bf16 %v718, %v718
  %v1325 = vpack.c.bf16 %v719, %v719
  %v1326 = vpack.c.bf16 %v1318, %v1318
  %v1327 = vpack.c.bf16 %v1319, %v1319
  %v1328 = vpack.c.bf16 %v1320, %v1320
  %v1329 = vpack.c.bf16 %v1321, %v1321
  %v1330 = vld [vmem:[%s6] sm:$0xff]
  %v1331 = vld [vmem:[%s6 + $0x8] sm:$0xf]
  %v1332 = vld [vmem:[%s6 + $0xc] sm:$0xff]
  %v1333 = vld [vmem:[%s6 + $0x14] sm:$0xf]
  %v1334 = vld [vmem:[%s6 + $0x18] sm:$0xff]
  %v1335 = vld [vmem:[%s6 + $0x20] sm:$0xf]
  %v1336 = vld [vmem:[%s6 + $0x24] sm:$0xff]
  %v1337 = vld [vmem:[%s6 + $0x2c] sm:$0xf]
  %v1338 = vld [vmem:[%s6 + $0x30] sm:$0xff]
  %v1339 = vld [vmem:[%s6 + $0x38] sm:$0xf]
  %v1340 = vld [vmem:[%s6 + $0x3c] sm:$0xff]
  %v1341 = vld [vmem:[%s6 + $0x44] sm:$0xf]
  %v1342 = vld [vmem:[%s6 + $0x48] sm:$0xff]
  %v1343 = vld [vmem:[%s6 + $0x50] sm:$0xf]
  %v1344 = vld [vmem:[%s6 + $0x54] sm:$0xff]
  %v1345 = vld [vmem:[%s6 + $0x5c] sm:$0xf]
  %v1346 = vld [vmem:[%s6 + $0x60] sm:$0xff]
  %v1347 = vld [vmem:[%s6 + $0x68] sm:$0xf]
  %v1348 = vld [vmem:[%s6 + $0x6c] sm:$0xff]
  %v1349 = vld [vmem:[%s6 + $0x74] sm:$0xf]
  %v1350 = vld [vmem:[%s6 + $0x78] sm:$0xff]
  %v1351 = vld [vmem:[%s6 + $0x80] sm:$0xf]
  %v1352 = vld [vmem:[%s6 + $0x84] sm:$0xff]
  %v1353 = vld [vmem:[%s6 + $0x8c] sm:$0xf]
  %v1354 = vld [vmem:[%s6 + $0x90] sm:$0xff]
  %v1355 = vld [vmem:[%s6 + $0x98] sm:$0xf]
  %v1356 = vld [vmem:[%s6 + $0x9c] sm:$0xff]
  %v1357 = vld [vmem:[%s6 + $0xa4] sm:$0xf]
  %v1358 = vld [vmem:[%s6 + $0xa8] sm:$0xff]
  %v1359 = vld [vmem:[%s6 + $0xb0] sm:$0xf]
  %v1360 = vld [vmem:[%s6 + $0xb4] sm:$0xff]
  %v1361 = vld [vmem:[%s6 + $0xbc] sm:$0xf]
  %v1362 = vld [vmem:[%s6 + $0xc0] sm:$0xff]
  %v1363 = vld [vmem:[%s6 + $0xc8] sm:$0xf]
  %v1364 = vld [vmem:[%s6 + $0xcc] sm:$0xff]
  %v1365 = vld [vmem:[%s6 + $0xd4] sm:$0xf]
  %v1366 = vld [vmem:[%s6 + $0xd8] sm:$0xff]
  %v1367 = vld [vmem:[%s6 + $0xe0] sm:$0xf]
  %v1368 = vld [vmem:[%s6 + $0xe4] sm:$0xff]
  %v1369 = vld [vmem:[%s6 + $0xec] sm:$0xf]
  %v1370 = vld [vmem:[%s6 + $0xf0] sm:$0xff]
  %v1371 = vld [vmem:[%s6 + $0xf8] sm:$0xf]
  %v1372 = vld [vmem:[%s6 + $0xfc] sm:$0xff]
  %v1373 = vld [vmem:[%s6 + $0x104] sm:$0xf]
  %v1374 = vld [vmem:[%s6 + $0x108] sm:$0xff]
  %v1375 = vld [vmem:[%s6 + $0x110] sm:$0xf]
  %v1376 = vld [vmem:[%s6 + $0x114] sm:$0xff]
  %v1377 = vld [vmem:[%s6 + $0x11c] sm:$0xf]
  %v1378 = vld [vmem:[%s6 + $0x120] sm:$0xff]
  %v1379 = vld [vmem:[%s6 + $0x128] sm:$0xf]
  %v1380 = vld [vmem:[%s6 + $0x12c] sm:$0xff]
  %v1381 = vld [vmem:[%s6 + $0x134] sm:$0xf]
  %v1382 = vld [vmem:[%s6 + $0x138] sm:$0xff]
  %v1383 = vld [vmem:[%s6 + $0x140] sm:$0xf]
  %v1384 = vld [vmem:[%s6 + $0x144] sm:$0xff]
  %v1385 = vld [vmem:[%s6 + $0x14c] sm:$0xf]
  %v1386 = vld [vmem:[%s6 + $0x150] sm:$0xff]
  %v1387 = vld [vmem:[%s6 + $0x158] sm:$0xf]
  %v1388 = vld [vmem:[%s6 + $0x15c] sm:$0xff]
  %v1389 = vld [vmem:[%s6 + $0x164] sm:$0xf]
  %v1390 = vld [vmem:[%s6 + $0x168] sm:$0xff]
  %v1391 = vld [vmem:[%s6 + $0x170] sm:$0xf]
  %v1392 = vld [vmem:[%s6 + $0x174] sm:$0xff]
  %v1393 = vld [vmem:[%s6 + $0x17c] sm:$0xf]
  %v1394 = vld [vmem:[%s6 + $0x180] sm:$0xff]
  %v1395 = vld [vmem:[%s6 + $0x188] sm:$0xf]
  %v1396 = vld [vmem:[%s6 + $0x18c] sm:$0xff]
  %v1397 = vld [vmem:[%s6 + $0x194] sm:$0xf]
  %v1398 = vld [vmem:[%s6 + $0x198] sm:$0xff]
  %v1399 = vld [vmem:[%s6 + $0x1a0] sm:$0xf]
  %v1400 = vld [vmem:[%s6 + $0x1a4] sm:$0xff]
  %v1401 = vld [vmem:[%s6 + $0x1ac] sm:$0xf]
  %v1402 = vld [vmem:[%s6 + $0x1b0] sm:$0xff]
  %v1403 = vld [vmem:[%s6 + $0x1b8] sm:$0xf]
  %v1404 = vld [vmem:[%s6 + $0x1bc] sm:$0xff]
  %v1405 = vld [vmem:[%s6 + $0x1c4] sm:$0xf]
  %v1406 = vld [vmem:[%s6 + $0x1c8] sm:$0xff]
  %v1407 = vld [vmem:[%s6 + $0x1d0] sm:$0xf]
  %v1408 = vld [vmem:[%s6 + $0x1d4] sm:$0xff]
  %v1409 = vld [vmem:[%s6 + $0x1dc] sm:$0xf]
  %v1410 = vld [vmem:[%s6 + $0x1e0] sm:$0xff]
  %v1411 = vld [vmem:[%s6 + $0x1e8] sm:$0xf]
  %v1412 = vld [vmem:[%s6 + $0x1ec] sm:$0xff]
  %v1413 = vld [vmem:[%s6 + $0x1f4] sm:$0xf]
  %v1414 = vld [vmem:[%s6 + $0x1f8] sm:$0xff]
  %v1415 = vld [vmem:[%s6 + $0x200] sm:$0xf]
  %v1416 = vld [vmem:[%s6 + $0x204] sm:$0xff]
  %v1417 = vld [vmem:[%s6 + $0x20c] sm:$0xf]
  %v1418 = vld [vmem:[%s6 + $0x210] sm:$0xff]
  %v1419 = vld [vmem:[%s6 + $0x218] sm:$0xf]
  %v1420 = vld [vmem:[%s6 + $0x21c] sm:$0xff]
  %v1421 = vld [vmem:[%s6 + $0x224] sm:$0xf]
  %v1422 = vld [vmem:[%s6 + $0x228] sm:$0xff]
  %v1423 = vld [vmem:[%s6 + $0x230] sm:$0xf]
  %v1424 = vld [vmem:[%s6 + $0x234] sm:$0xff]
  %v1425 = vld [vmem:[%s6 + $0x23c] sm:$0xf]
  %v1426 = vld [vmem:[%s6 + $0x240] sm:$0xff]
  %v1427 = vld [vmem:[%s6 + $0x248] sm:$0xf]
  %v1428 = vld [vmem:[%s6 + $0x24c] sm:$0xff]
  %v1429 = vld [vmem:[%s6 + $0x254] sm:$0xf]
  %v1430 = vld [vmem:[%s6 + $0x258] sm:$0xff]
  %v1431 = vld [vmem:[%s6 + $0x260] sm:$0xf]
  %v1432 = vld [vmem:[%s6 + $0x264] sm:$0xff]
  %v1433 = vld [vmem:[%s6 + $0x26c] sm:$0xf]
  %v1434 = vld [vmem:[%s6 + $0x270] sm:$0xff]
  %v1435 = vld [vmem:[%s6 + $0x278] sm:$0xf]
  %v1436 = vld [vmem:[%s6 + $0x27c] sm:$0xff]
  %v1437 = vld [vmem:[%s6 + $0x284] sm:$0xf]
  %v1438 = vld [vmem:[%s6 + $0x288] sm:$0xff]
  %v1439 = vld [vmem:[%s6 + $0x290] sm:$0xf]
  %v1440 = vld [vmem:[%s6 + $0x294] sm:$0xff]
  %v1441 = vld [vmem:[%s6 + $0x29c] sm:$0xf]
  %v1442 = vld [vmem:[%s6 + $0x2a0] sm:$0xff]
  %v1443 = vld [vmem:[%s6 + $0x2a8] sm:$0xf]
  %v1444 = vld [vmem:[%s6 + $0x2ac] sm:$0xff]
  %v1445 = vld [vmem:[%s6 + $0x2b4] sm:$0xf]
  %v1446 = vld [vmem:[%s6 + $0x2b8] sm:$0xff]
  %v1447 = vld [vmem:[%s6 + $0x2c0] sm:$0xf]
  %v1448 = vld [vmem:[%s6 + $0x2c4] sm:$0xff]
  %v1449 = vld [vmem:[%s6 + $0x2cc] sm:$0xf]
  %v1450 = vld [vmem:[%s6 + $0x2d0] sm:$0xff]
  %v1451 = vld [vmem:[%s6 + $0x2d8] sm:$0xf]
  %v1452 = vld [vmem:[%s6 + $0x2dc] sm:$0xff]
  %v1453 = vld [vmem:[%s6 + $0x2e4] sm:$0xf]
  %v1454 = vld [vmem:[%s6 + $0x2e8] sm:$0xff]
  %v1455 = vld [vmem:[%s6 + $0x2f0] sm:$0xf]
  %v1456 = vld [vmem:[%s6 + $0x2f4] sm:$0xff]
  %v1457 = vld [vmem:[%s6 + $0x2fc] sm:$0xf]
  %v1458 = vld [vmem:[%s6 + $0x300] sm:$0xff]
  %v1459 = vld [vmem:[%s6 + $0x308] sm:$0xf]
  %v1460 = vld [vmem:[%s6 + $0x30c] sm:$0xff]
  %v1461 = vld [vmem:[%s6 + $0x314] sm:$0xf]
  %v1462 = vld [vmem:[%s6 + $0x318] sm:$0xff]
  %v1463 = vld [vmem:[%s6 + $0x320] sm:$0xf]
  %v1464 = vld [vmem:[%s6 + $0x324] sm:$0xff]
  %v1465 = vld [vmem:[%s6 + $0x32c] sm:$0xf]
  %v1466 = vld [vmem:[%s6 + $0x330] sm:$0xff]
  %v1467 = vld [vmem:[%s6 + $0x338] sm:$0xf]
  %v1468 = vld [vmem:[%s6 + $0x33c] sm:$0xff]
  %v1469 = vld [vmem:[%s6 + $0x344] sm:$0xf]
  %v1470 = vld [vmem:[%s6 + $0x348] sm:$0xff]
  %v1471 = vld [vmem:[%s6 + $0x350] sm:$0xf]
  %v1472 = vld [vmem:[%s6 + $0x354] sm:$0xff]
  %v1473 = vld [vmem:[%s6 + $0x35c] sm:$0xf]
  %v1474 = vld [vmem:[%s6 + $0x360] sm:$0xff]
  %v1475 = vld [vmem:[%s6 + $0x368] sm:$0xf]
  %v1476 = vld [vmem:[%s6 + $0x36c] sm:$0xff]
  %v1477 = vld [vmem:[%s6 + $0x374] sm:$0xf]
  %v1478 = vld [vmem:[%s6 + $0x378] sm:$0xff]
  %v1479 = vld [vmem:[%s6 + $0x380] sm:$0xf]
  %v1480 = vld [vmem:[%s6 + $0x384] sm:$0xff]
  %v1481 = vld [vmem:[%s6 + $0x38c] sm:$0xf]
  %v1482 = vld [vmem:[%s6 + $0x390] sm:$0xff]
  %v1483 = vld [vmem:[%s6 + $0x398] sm:$0xf]
  %v1484 = vld [vmem:[%s6 + $0x39c] sm:$0xff]
  %v1485 = vld [vmem:[%s6 + $0x3a4] sm:$0xf]
  %v1486 = vld [vmem:[%s6 + $0x3a8] sm:$0xff]
  %v1487 = vld [vmem:[%s6 + $0x3b0] sm:$0xf]
  %v1488 = vld [vmem:[%s6 + $0x3b4] sm:$0xff]
  %v1489 = vld [vmem:[%s6 + $0x3bc] sm:$0xf]
  %v1490 = vld [vmem:[%s6 + $0x3c0] sm:$0xff]
  %v1491 = vld [vmem:[%s6 + $0x3c8] sm:$0xf]
  %v1492 = vld [vmem:[%s6 + $0x3cc] sm:$0xff]
  %v1493 = vld [vmem:[%s6 + $0x3d4] sm:$0xf]
  %v1494 = vld [vmem:[%s6 + $0x3d8] sm:$0xff]
  %v1495 = vld [vmem:[%s6 + $0x3e0] sm:$0xf]
  %v1496 = vld [vmem:[%s6 + $0x3e4] sm:$0xff]
  %v1497 = vld [vmem:[%s6 + $0x3ec] sm:$0xf]
  %v1498 = vld [vmem:[%s6 + $0x3f0] sm:$0xff]
  %v1499 = vld [vmem:[%s6 + $0x3f8] sm:$0xf]
  %v1500 = vld [vmem:[%s6 + $0x3fc] sm:$0xff]
  %v1501 = vld [vmem:[%s6 + $0x404] sm:$0xf]
  %v1502 = vld [vmem:[%s6 + $0x408] sm:$0xff]
  %v1503 = vld [vmem:[%s6 + $0x410] sm:$0xf]
  %v1504 = vld [vmem:[%s6 + $0x414] sm:$0xff]
  %v1505 = vld [vmem:[%s6 + $0x41c] sm:$0xf]
  %v1506 = vld [vmem:[%s6 + $0x420] sm:$0xff]
  %v1507 = vld [vmem:[%s6 + $0x428] sm:$0xf]
  %v1508 = vld [vmem:[%s6 + $0x42c] sm:$0xff]
  %v1509 = vld [vmem:[%s6 + $0x434] sm:$0xf]
  %v1510 = vld [vmem:[%s6 + $0x438] sm:$0xff]
  %v1511 = vld [vmem:[%s6 + $0x440] sm:$0xf]
  %v1512 = vld [vmem:[%s6 + $0x444] sm:$0xff]
  %v1513 = vld [vmem:[%s6 + $0x44c] sm:$0xf]
  %v1514 = vld [vmem:[%s6 + $0x450] sm:$0xff]
  %v1515 = vld [vmem:[%s6 + $0x458] sm:$0xf]
  %v1516 = vld [vmem:[%s6 + $0x45c] sm:$0xff]
  %v1517 = vld [vmem:[%s6 + $0x464] sm:$0xf]
  %v1518 = vld [vmem:[%s6 + $0x468] sm:$0xff]
  %v1519 = vld [vmem:[%s6 + $0x470] sm:$0xf]
  %v1520 = vld [vmem:[%s6 + $0x474] sm:$0xff]
  %v1521 = vld [vmem:[%s6 + $0x47c] sm:$0xf]
  %v1522 = vld [vmem:[%s6 + $0x480] sm:$0xff]
  %v1523 = vld [vmem:[%s6 + $0x488] sm:$0xf]
  %v1524 = vld [vmem:[%s6 + $0x48c] sm:$0xff]
  %v1525 = vld [vmem:[%s6 + $0x494] sm:$0xf]
  %v1526 = vld [vmem:[%s6 + $0x498] sm:$0xff]
  %v1527 = vld [vmem:[%s6 + $0x4a0] sm:$0xf]
  %v1528 = vld [vmem:[%s6 + $0x4a4] sm:$0xff]
  %v1529 = vld [vmem:[%s6 + $0x4ac] sm:$0xf]
  %v1530 = vld [vmem:[%s6 + $0x4b0] sm:$0xff]
  %v1531 = vld [vmem:[%s6 + $0x4b8] sm:$0xf]
  %v1532 = vld [vmem:[%s6 + $0x4bc] sm:$0xff]
  %v1533 = vld [vmem:[%s6 + $0x4c4] sm:$0xf]
  %v1534 = vld [vmem:[%s6 + $0x4c8] sm:$0xff]
  %v1535 = vld [vmem:[%s6 + $0x4d0] sm:$0xf]
  %v1536 = vld [vmem:[%s6 + $0x4d4] sm:$0xff]
  %v1537 = vld [vmem:[%s6 + $0x4dc] sm:$0xf]
  %v1538 = vld [vmem:[%s6 + $0x4e0] sm:$0xff]
  %v1539 = vld [vmem:[%s6 + $0x4e8] sm:$0xf]
  %v1540 = vld [vmem:[%s6 + $0x4ec] sm:$0xff]
  %v1541 = vld [vmem:[%s6 + $0x4f4] sm:$0xf]
  %v1542 = vld [vmem:[%s6 + $0x4f8] sm:$0xff]
  %v1543 = vld [vmem:[%s6 + $0x500] sm:$0xf]
  %v1544 = vld [vmem:[%s6 + $0x504] sm:$0xff]
  %v1545 = vld [vmem:[%s6 + $0x50c] sm:$0xf]
  %v1546 = vld [vmem:[%s6 + $0x510] sm:$0xff]
  %v1547 = vld [vmem:[%s6 + $0x518] sm:$0xf]
  %v1548 = vld [vmem:[%s6 + $0x51c] sm:$0xff]
  %v1549 = vld [vmem:[%s6 + $0x524] sm:$0xf]
  %v1550 = vld [vmem:[%s6 + $0x528] sm:$0xff]
  %v1551 = vld [vmem:[%s6 + $0x530] sm:$0xf]
  %v1552 = vld [vmem:[%s6 + $0x534] sm:$0xff]
  %v1553 = vld [vmem:[%s6 + $0x53c] sm:$0xf]
  %v1554 = vld [vmem:[%s6 + $0x540] sm:$0xff]
  %v1555 = vld [vmem:[%s6 + $0x548] sm:$0xf]
  %v1556 = vld [vmem:[%s6 + $0x54c] sm:$0xff]
  %v1557 = vld [vmem:[%s6 + $0x554] sm:$0xf]
  %v1558 = vld [vmem:[%s6 + $0x558] sm:$0xff]
  %v1559 = vld [vmem:[%s6 + $0x560] sm:$0xf]
  %v1560 = vld [vmem:[%s6 + $0x564] sm:$0xff]
  %v1561 = vld [vmem:[%s6 + $0x56c] sm:$0xf]
  %v1562 = vld [vmem:[%s6 + $0x570] sm:$0xff]
  %v1563 = vld [vmem:[%s6 + $0x578] sm:$0xf]
  %v1564 = vld [vmem:[%s6 + $0x57c] sm:$0xff]
  %v1565 = vld [vmem:[%s6 + $0x584] sm:$0xf]
  %v1566 = vld [vmem:[%s6 + $0x588] sm:$0xff]
  %v1567 = vld [vmem:[%s6 + $0x590] sm:$0xf]
  %v1568 = vld [vmem:[%s6 + $0x594] sm:$0xff]
  %v1569 = vld [vmem:[%s6 + $0x59c] sm:$0xf]
  %v1570 = vld [vmem:[%s6 + $0x5a0] sm:$0xff]
  %v1571 = vld [vmem:[%s6 + $0x5a8] sm:$0xf]
  %v1572 = vld [vmem:[%s6 + $0x5ac] sm:$0xff]
  %v1573 = vld [vmem:[%s6 + $0x5b4] sm:$0xf]
  %v1574 = vld [vmem:[%s6 + $0x5b8] sm:$0xff]
  %v1575 = vld [vmem:[%s6 + $0x5c0] sm:$0xf]
  %v1576 = vld [vmem:[%s6 + $0x5c4] sm:$0xff]
  %v1577 = vld [vmem:[%s6 + $0x5cc] sm:$0xf]
  %v1578 = vld [vmem:[%s6 + $0x5d0] sm:$0xff]
  %v1579 = vld [vmem:[%s6 + $0x5d8] sm:$0xf]
  %v1580 = vld [vmem:[%s6 + $0x5dc] sm:$0xff]
  %v1581 = vld [vmem:[%s6 + $0x5e4] sm:$0xf]
  %v1582 = vld [vmem:[%s6 + $0x5e8] sm:$0xff]
  %v1583 = vld [vmem:[%s6 + $0x5f0] sm:$0xf]
  %v1584 = vld [vmem:[%s6 + $0x5f4] sm:$0xff]
  %v1585 = vld [vmem:[%s6 + $0x5fc] sm:$0xf]
  %v1586 = vld [vmem:[%s7] sm:$0x7]
  %v1588 = vperm.slane %v1586, 0
  %v1589 = vperm.slane %v1586, 1
  %v1590 = vperm.slane %v1586, 2
  %v1850 = vunpack.c.l.b16 %v1330
  %v1851 = vunpack.c.h.b16 %v1330
  %v1852 = vunpack.c.l.b16 %v1331
  %v1853 = vunpack.c.l.b16 %v1332
  %v1854 = vunpack.c.h.b16 %v1332
  %v1855 = vunpack.c.l.b16 %v1333
  %v1856 = vunpack.c.l.b16 %v1334
  %v1857 = vunpack.c.h.b16 %v1334
  %v1858 = vunpack.c.l.b16 %v1335
  %v1859 = vunpack.c.l.b16 %v1336
  %v1860 = vunpack.c.h.b16 %v1336
  %v1861 = vunpack.c.l.b16 %v1337
  %v1862 = vunpack.c.l.b16 %v1338
  %v1863 = vunpack.c.h.b16 %v1338
  %v1864 = vunpack.c.l.b16 %v1339
  %v1865 = vunpack.c.l.b16 %v1340
  %v1866 = vunpack.c.h.b16 %v1340
  %v1867 = vunpack.c.l.b16 %v1341
  %v1868 = vunpack.c.l.b16 %v1342
  %v1869 = vunpack.c.h.b16 %v1342
  %v1870 = vunpack.c.l.b16 %v1343
  %v1871 = vunpack.c.l.b16 %v1344
  %v1872 = vunpack.c.h.b16 %v1344
  %v1873 = vunpack.c.l.b16 %v1345
  %v1874 = vunpack.c.l.b16 %v1346
  %v1875 = vunpack.c.h.b16 %v1346
  %v1876 = vunpack.c.l.b16 %v1347
  %v1877 = vunpack.c.l.b16 %v1348
  %v1878 = vunpack.c.h.b16 %v1348
  %v1879 = vunpack.c.l.b16 %v1349
  %v1880 = vunpack.c.l.b16 %v1350
  %v1881 = vunpack.c.h.b16 %v1350
  %v1882 = vunpack.c.l.b16 %v1351
  %v1883 = vunpack.c.l.b16 %v1352
  %v1884 = vunpack.c.h.b16 %v1352
  %v1885 = vunpack.c.l.b16 %v1353
  %v1886 = vunpack.c.l.b16 %v1354
  %v1887 = vunpack.c.h.b16 %v1354
  %v1888 = vunpack.c.l.b16 %v1355
  %v1889 = vunpack.c.l.b16 %v1356
  %v1890 = vunpack.c.h.b16 %v1356
  %v1891 = vunpack.c.l.b16 %v1357
  %v1892 = vunpack.c.l.b16 %v1358
  %v1893 = vunpack.c.h.b16 %v1358
  %v1894 = vunpack.c.l.b16 %v1359
  %v1895 = vunpack.c.l.b16 %v1360
  %v1896 = vunpack.c.h.b16 %v1360
  %v1897 = vunpack.c.l.b16 %v1361
  %v1898 = vunpack.c.l.b16 %v1362
  %v1899 = vunpack.c.h.b16 %v1362
  %v1900 = vunpack.c.l.b16 %v1363
  %v1901 = vunpack.c.l.b16 %v1364
  %v1902 = vunpack.c.h.b16 %v1364
  %v1903 = vunpack.c.l.b16 %v1365
  %v1904 = vunpack.c.l.b16 %v1366
  %v1905 = vunpack.c.h.b16 %v1366
  %v1906 = vunpack.c.l.b16 %v1367
  %v1907 = vunpack.c.l.b16 %v1368
  %v1908 = vunpack.c.h.b16 %v1368
  %v1909 = vunpack.c.l.b16 %v1369
  %v1910 = vunpack.c.l.b16 %v1370
  %v1911 = vunpack.c.h.b16 %v1370
  %v1912 = vunpack.c.l.b16 %v1371
  %v1913 = vunpack.c.l.b16 %v1372
  %v1914 = vunpack.c.h.b16 %v1372
  %v1915 = vunpack.c.l.b16 %v1373
  %v1916 = vunpack.c.l.b16 %v1374
  %v1917 = vunpack.c.h.b16 %v1374
  %v1918 = vunpack.c.l.b16 %v1375
  %v1919 = vunpack.c.l.b16 %v1376
  %v1920 = vunpack.c.h.b16 %v1376
  %v1921 = vunpack.c.l.b16 %v1377
  %v1922 = vunpack.c.l.b16 %v1378
  %v1923 = vunpack.c.h.b16 %v1378
  %v1924 = vunpack.c.l.b16 %v1379
  %v1925 = vunpack.c.l.b16 %v1380
  %v1926 = vunpack.c.h.b16 %v1380
  %v1927 = vunpack.c.l.b16 %v1381
  %v1928 = vunpack.c.l.b16 %v1382
  %v1929 = vunpack.c.h.b16 %v1382
  %v1930 = vunpack.c.l.b16 %v1383
  %v1931 = vunpack.c.l.b16 %v1384
  %v1932 = vunpack.c.h.b16 %v1384
  %v1933 = vunpack.c.l.b16 %v1385
  %v1934 = vunpack.c.l.b16 %v1386
  %v1935 = vunpack.c.h.b16 %v1386
  %v1936 = vunpack.c.l.b16 %v1387
  %v1937 = vunpack.c.l.b16 %v1388
  %v1938 = vunpack.c.h.b16 %v1388
  %v1939 = vunpack.c.l.b16 %v1389
  %v1940 = vunpack.c.l.b16 %v1390
  %v1941 = vunpack.c.h.b16 %v1390
  %v1942 = vunpack.c.l.b16 %v1391
  %v1943 = vunpack.c.l.b16 %v1392
  %v1944 = vunpack.c.h.b16 %v1392
  %v1945 = vunpack.c.l.b16 %v1393
  %v1946 = vunpack.c.l.b16 %v1394
  %v1947 = vunpack.c.h.b16 %v1394
  %v1948 = vunpack.c.l.b16 %v1395
  %v1949 = vunpack.c.l.b16 %v1396
  %v1950 = vunpack.c.h.b16 %v1396
  %v1951 = vunpack.c.l.b16 %v1397
  %v1952 = vunpack.c.l.b16 %v1398
  %v1953 = vunpack.c.h.b16 %v1398
  %v1954 = vunpack.c.l.b16 %v1399
  %v1955 = vunpack.c.l.b16 %v1400
  %v1956 = vunpack.c.h.b16 %v1400
  %v1957 = vunpack.c.l.b16 %v1401
  %v1958 = vunpack.c.l.b16 %v1402
  %v1959 = vunpack.c.h.b16 %v1402
  %v1960 = vunpack.c.l.b16 %v1403
  %v1961 = vunpack.c.l.b16 %v1404
  %v1962 = vunpack.c.h.b16 %v1404
  %v1963 = vunpack.c.l.b16 %v1405
  %v1964 = vunpack.c.l.b16 %v1406
  %v1965 = vunpack.c.h.b16 %v1406
  %v1966 = vunpack.c.l.b16 %v1407
  %v1967 = vunpack.c.l.b16 %v1408
  %v1968 = vunpack.c.h.b16 %v1408
  %v1969 = vunpack.c.l.b16 %v1409
  %v1970 = vunpack.c.l.b16 %v1410
  %v1971 = vunpack.c.h.b16 %v1410
  %v1972 = vunpack.c.l.b16 %v1411
  %v1973 = vunpack.c.l.b16 %v1412
  %v1974 = vunpack.c.h.b16 %v1412
  %v1975 = vunpack.c.l.b16 %v1413
  %v1976 = vunpack.c.l.b16 %v1414
  %v1977 = vunpack.c.h.b16 %v1414
  %v1978 = vunpack.c.l.b16 %v1415
  %v1979 = vunpack.c.l.b16 %v1416
  %v1980 = vunpack.c.h.b16 %v1416
  %v1981 = vunpack.c.l.b16 %v1417
  %v1982 = vunpack.c.l.b16 %v1418
  %v1983 = vunpack.c.h.b16 %v1418
  %v1984 = vunpack.c.l.b16 %v1419
  %v1985 = vunpack.c.l.b16 %v1420
  %v1986 = vunpack.c.h.b16 %v1420
  %v1987 = vunpack.c.l.b16 %v1421
  %v1988 = vunpack.c.l.b16 %v1422
  %v1989 = vunpack.c.h.b16 %v1422
  %v1990 = vunpack.c.l.b16 %v1423
  %v1991 = vunpack.c.l.b16 %v1424
  %v1992 = vunpack.c.h.b16 %v1424
  %v1993 = vunpack.c.l.b16 %v1425
  %v1994 = vunpack.c.l.b16 %v1426
  %v1995 = vunpack.c.h.b16 %v1426
  %v1996 = vunpack.c.l.b16 %v1427
  %v1997 = vunpack.c.l.b16 %v1428
  %v1998 = vunpack.c.h.b16 %v1428
  %v1999 = vunpack.c.l.b16 %v1429
  %v2000 = vunpack.c.l.b16 %v1430
  %v2001 = vunpack.c.h.b16 %v1430
  %v2002 = vunpack.c.l.b16 %v1431
  %v2003 = vunpack.c.l.b16 %v1432
  %v2004 = vunpack.c.h.b16 %v1432
  %v2005 = vunpack.c.l.b16 %v1433
  %v2006 = vunpack.c.l.b16 %v1434
  %v2007 = vunpack.c.h.b16 %v1434
  %v2008 = vunpack.c.l.b16 %v1435
  %v2009 = vunpack.c.l.b16 %v1436
  %v2010 = vunpack.c.h.b16 %v1436
  %v2011 = vunpack.c.l.b16 %v1437
  %v2012 = vunpack.c.l.b16 %v1438
  %v2013 = vunpack.c.h.b16 %v1438
  %v2014 = vunpack.c.l.b16 %v1439
  %v2015 = vunpack.c.l.b16 %v1440
  %v2016 = vunpack.c.h.b16 %v1440
  %v2017 = vunpack.c.l.b16 %v1441
  %v2018 = vunpack.c.l.b16 %v1442
  %v2019 = vunpack.c.h.b16 %v1442
  %v2020 = vunpack.c.l.b16 %v1443
  %v2021 = vunpack.c.l.b16 %v1444
  %v2022 = vunpack.c.h.b16 %v1444
  %v2023 = vunpack.c.l.b16 %v1445
  %v2024 = vunpack.c.l.b16 %v1446
  %v2025 = vunpack.c.h.b16 %v1446
  %v2026 = vunpack.c.l.b16 %v1447
  %v2027 = vunpack.c.l.b16 %v1448
  %v2028 = vunpack.c.h.b16 %v1448
  %v2029 = vunpack.c.l.b16 %v1449
  %v2030 = vunpack.c.l.b16 %v1450
  %v2031 = vunpack.c.h.b16 %v1450
  %v2032 = vunpack.c.l.b16 %v1451
  %v2033 = vunpack.c.l.b16 %v1452
  %v2034 = vunpack.c.h.b16 %v1452
  %v2035 = vunpack.c.l.b16 %v1453
  %v2036 = vunpack.c.l.b16 %v1454
  %v2037 = vunpack.c.h.b16 %v1454
  %v2038 = vunpack.c.l.b16 %v1455
  %v2039 = vunpack.c.l.b16 %v1456
  %v2040 = vunpack.c.h.b16 %v1456
  %v2041 = vunpack.c.l.b16 %v1457
  %v2042 = vunpack.c.l.b16 %v1458
  %v2043 = vunpack.c.h.b16 %v1458
  %v2044 = vunpack.c.l.b16 %v1459
  %v2045 = vunpack.c.l.b16 %v1460
  %v2046 = vunpack.c.h.b16 %v1460
  %v2047 = vunpack.c.l.b16 %v1461
  %v2048 = vunpack.c.l.b16 %v1462
  %v2049 = vunpack.c.h.b16 %v1462
  %v2050 = vunpack.c.l.b16 %v1463
  %v2051 = vunpack.c.l.b16 %v1464
  %v2052 = vunpack.c.h.b16 %v1464
  %v2053 = vunpack.c.l.b16 %v1465
  %v2054 = vunpack.c.l.b16 %v1466
  %v2055 = vunpack.c.h.b16 %v1466
  %v2056 = vunpack.c.l.b16 %v1467
  %v2057 = vunpack.c.l.b16 %v1468
  %v2058 = vunpack.c.h.b16 %v1468
  %v2059 = vunpack.c.l.b16 %v1469
  %v2060 = vunpack.c.l.b16 %v1470
  %v2061 = vunpack.c.h.b16 %v1470
  %v2062 = vunpack.c.l.b16 %v1471
  %v2063 = vunpack.c.l.b16 %v1472
  %v2064 = vunpack.c.h.b16 %v1472
  %v2065 = vunpack.c.l.b16 %v1473
  %v2066 = vunpack.c.l.b16 %v1474
  %v2067 = vunpack.c.h.b16 %v1474
  %v2068 = vunpack.c.l.b16 %v1475
  %v2069 = vunpack.c.l.b16 %v1476
  %v2070 = vunpack.c.h.b16 %v1476
  %v2071 = vunpack.c.l.b16 %v1477
  %v2072 = vunpack.c.l.b16 %v1478
  %v2073 = vunpack.c.h.b16 %v1478
  %v2074 = vunpack.c.l.b16 %v1479
  %v2075 = vunpack.c.l.b16 %v1480
  %v2076 = vunpack.c.h.b16 %v1480
  %v2077 = vunpack.c.l.b16 %v1481
  %v2078 = vunpack.c.l.b16 %v1482
  %v2079 = vunpack.c.h.b16 %v1482
  %v2080 = vunpack.c.l.b16 %v1483
  %v2081 = vunpack.c.l.b16 %v1484
  %v2082 = vunpack.c.h.b16 %v1484
  %v2083 = vunpack.c.l.b16 %v1485
  %v2084 = vunpack.c.l.b16 %v1486
  %v2085 = vunpack.c.h.b16 %v1486
  %v2086 = vunpack.c.l.b16 %v1487
  %v2087 = vunpack.c.l.b16 %v1488
  %v2088 = vunpack.c.h.b16 %v1488
  %v2089 = vunpack.c.l.b16 %v1489
  %v2090 = vunpack.c.l.b16 %v1490
  %v2091 = vunpack.c.h.b16 %v1490
  %v2092 = vunpack.c.l.b16 %v1491
  %v2093 = vunpack.c.l.b16 %v1492
  %v2094 = vunpack.c.h.b16 %v1492
  %v2095 = vunpack.c.l.b16 %v1493
  %v2096 = vunpack.c.l.b16 %v1494
  %v2097 = vunpack.c.h.b16 %v1494
  %v2098 = vunpack.c.l.b16 %v1495
  %v2099 = vunpack.c.l.b16 %v1496
  %v2100 = vunpack.c.h.b16 %v1496
  %v2101 = vunpack.c.l.b16 %v1497
  %v2102 = vunpack.c.l.b16 %v1498
  %v2103 = vunpack.c.h.b16 %v1498
  %v2104 = vunpack.c.l.b16 %v1499
  %v2105 = vunpack.c.l.b16 %v1500
  %v2106 = vunpack.c.h.b16 %v1500
  %v2107 = vunpack.c.l.b16 %v1501
  %v2108 = vunpack.c.l.b16 %v1502
  %v2109 = vunpack.c.h.b16 %v1502
  %v2110 = vunpack.c.l.b16 %v1503
  %v2111 = vunpack.c.l.b16 %v1504
  %v2112 = vunpack.c.h.b16 %v1504
  %v2113 = vunpack.c.l.b16 %v1505
  %v2114 = vunpack.c.l.b16 %v1506
  %v2115 = vunpack.c.h.b16 %v1506
  %v2116 = vunpack.c.l.b16 %v1507
  %v2117 = vunpack.c.l.b16 %v1508
  %v2118 = vunpack.c.h.b16 %v1508
  %v2119 = vunpack.c.l.b16 %v1509
  %v2120 = vunpack.c.l.b16 %v1510
  %v2121 = vunpack.c.h.b16 %v1510
  %v2122 = vunpack.c.l.b16 %v1511
  %v2123 = vunpack.c.l.b16 %v1512
  %v2124 = vunpack.c.h.b16 %v1512
  %v2125 = vunpack.c.l.b16 %v1513
  %v2126 = vunpack.c.l.b16 %v1514
  %v2127 = vunpack.c.h.b16 %v1514
  %v2128 = vunpack.c.l.b16 %v1515
  %v2129 = vunpack.c.l.b16 %v1516
  %v2130 = vunpack.c.h.b16 %v1516
  %v2131 = vunpack.c.l.b16 %v1517
  %v2132 = vunpack.c.l.b16 %v1518
  %v2133 = vunpack.c.h.b16 %v1518
  %v2134 = vunpack.c.l.b16 %v1519
  %v2135 = vunpack.c.l.b16 %v1520
  %v2136 = vunpack.c.h.b16 %v1520
  %v2137 = vunpack.c.l.b16 %v1521
  %v2138 = vunpack.c.l.b16 %v1522
  %v2139 = vunpack.c.h.b16 %v1522
  %v2140 = vunpack.c.l.b16 %v1523
  %v2141 = vunpack.c.l.b16 %v1524
  %v2142 = vunpack.c.h.b16 %v1524
  %v2143 = vunpack.c.l.b16 %v1525
  %v2144 = vunpack.c.l.b16 %v1526
  %v2145 = vunpack.c.h.b16 %v1526
  %v2146 = vunpack.c.l.b16 %v1527
  %v2147 = vunpack.c.l.b16 %v1528
  %v2148 = vunpack.c.h.b16 %v1528
  %v2149 = vunpack.c.l.b16 %v1529
  %v2150 = vunpack.c.l.b16 %v1530
  %v2151 = vunpack.c.h.b16 %v1530
  %v2152 = vunpack.c.l.b16 %v1531
  %v2153 = vunpack.c.l.b16 %v1532
  %v2154 = vunpack.c.h.b16 %v1532
  %v2155 = vunpack.c.l.b16 %v1533
  %v2156 = vunpack.c.l.b16 %v1534
  %v2157 = vunpack.c.h.b16 %v1534
  %v2158 = vunpack.c.l.b16 %v1535
  %v2159 = vunpack.c.l.b16 %v1536
  %v2160 = vunpack.c.h.b16 %v1536
  %v2161 = vunpack.c.l.b16 %v1537
  %v2162 = vunpack.c.l.b16 %v1538
  %v2163 = vunpack.c.h.b16 %v1538
  %v2164 = vunpack.c.l.b16 %v1539
  %v2165 = vunpack.c.l.b16 %v1540
  %v2166 = vunpack.c.h.b16 %v1540
  %v2167 = vunpack.c.l.b16 %v1541
  %v2168 = vunpack.c.l.b16 %v1542
  %v2169 = vunpack.c.h.b16 %v1542
  %v2170 = vunpack.c.l.b16 %v1543
  %v2171 = vunpack.c.l.b16 %v1544
  %v2172 = vunpack.c.h.b16 %v1544
  %v2173 = vunpack.c.l.b16 %v1545
  %v2174 = vunpack.c.l.b16 %v1546
  %v2175 = vunpack.c.h.b16 %v1546
  %v2176 = vunpack.c.l.b16 %v1547
  %v2177 = vunpack.c.l.b16 %v1548
  %v2178 = vunpack.c.h.b16 %v1548
  %v2179 = vunpack.c.l.b16 %v1549
  %v2180 = vunpack.c.l.b16 %v1550
  %v2181 = vunpack.c.h.b16 %v1550
  %v2182 = vunpack.c.l.b16 %v1551
  %v2183 = vunpack.c.l.b16 %v1552
  %v2184 = vunpack.c.h.b16 %v1552
  %v2185 = vunpack.c.l.b16 %v1553
  %v2186 = vunpack.c.l.b16 %v1554
  %v2187 = vunpack.c.h.b16 %v1554
  %v2188 = vunpack.c.l.b16 %v1555
  %v2189 = vunpack.c.l.b16 %v1556
  %v2190 = vunpack.c.h.b16 %v1556
  %v2191 = vunpack.c.l.b16 %v1557
  %v2192 = vunpack.c.l.b16 %v1558
  %v2193 = vunpack.c.h.b16 %v1558
  %v2194 = vunpack.c.l.b16 %v1559
  %v2195 = vunpack.c.l.b16 %v1560
  %v2196 = vunpack.c.h.b16 %v1560
  %v2197 = vunpack.c.l.b16 %v1561
  %v2198 = vunpack.c.l.b16 %v1562
  %v2199 = vunpack.c.h.b16 %v1562
  %v2200 = vunpack.c.l.b16 %v1563
  %v2201 = vunpack.c.l.b16 %v1564
  %v2202 = vunpack.c.h.b16 %v1564
  %v2203 = vunpack.c.l.b16 %v1565
  %v2204 = vunpack.c.l.b16 %v1566
  %v2205 = vunpack.c.h.b16 %v1566
  %v2206 = vunpack.c.l.b16 %v1567
  %v2207 = vunpack.c.l.b16 %v1568
  %v2208 = vunpack.c.h.b16 %v1568
  %v2209 = vunpack.c.l.b16 %v1569
  %v2210 = vunpack.c.l.b16 %v1570
  %v2211 = vunpack.c.h.b16 %v1570
  %v2212 = vunpack.c.l.b16 %v1571
  %v2213 = vunpack.c.l.b16 %v1572
  %v2214 = vunpack.c.h.b16 %v1572
  %v2215 = vunpack.c.l.b16 %v1573
  %v2216 = vunpack.c.l.b16 %v1574
  %v2217 = vunpack.c.h.b16 %v1574
  %v2218 = vunpack.c.l.b16 %v1575
  %v2219 = vunpack.c.l.b16 %v1576
  %v2220 = vunpack.c.h.b16 %v1576
  %v2221 = vunpack.c.l.b16 %v1577
  %v2222 = vunpack.c.l.b16 %v1578
  %v2223 = vunpack.c.h.b16 %v1578
  %v2224 = vunpack.c.l.b16 %v1579
  %v2225 = vunpack.c.l.b16 %v1580
  %v2226 = vunpack.c.h.b16 %v1580
  %v2227 = vunpack.c.l.b16 %v1581
  %v2228 = vunpack.c.l.b16 %v1582
  %v2229 = vunpack.c.h.b16 %v1582
  %v2230 = vunpack.c.l.b16 %v1583
  %v2231 = vunpack.c.l.b16 %v1584
  %v2232 = vunpack.c.h.b16 %v1584
  %v2233 = vunpack.c.l.b16 %v1585
  %v2234 = vpack.c.b16 %v1853, %v1850
  %v2235 = vpack.c.b16 %v1854, %v1851
  %v2236 = vpack.c.b16 %v1855, %v1852
  %v2237 = vpack.c.b16 %v1859, %v1856
  %v2238 = vpack.c.b16 %v1860, %v1857
  %v2239 = vpack.c.b16 %v1861, %v1858
  %v2240 = vpack.c.b16 %v1865, %v1862
  %v2241 = vpack.c.b16 %v1866, %v1863
  %v2242 = vpack.c.b16 %v1867, %v1864
  %v2243 = vpack.c.b16 %v1871, %v1868
  %v2244 = vpack.c.b16 %v1872, %v1869
  %v2245 = vpack.c.b16 %v1873, %v1870
  %v2246 = vpack.c.b16 %v1877, %v1874
  %v2247 = vpack.c.b16 %v1878, %v1875
  %v2248 = vpack.c.b16 %v1879, %v1876
  %v2249 = vpack.c.b16 %v1883, %v1880
  %v2250 = vpack.c.b16 %v1884, %v1881
  %v2251 = vpack.c.b16 %v1885, %v1882
  %v2252 = vpack.c.b16 %v1889, %v1886
  %v2253 = vpack.c.b16 %v1890, %v1887
  %v2254 = vpack.c.b16 %v1891, %v1888
  %v2255 = vpack.c.b16 %v1895, %v1892
  %v2256 = vpack.c.b16 %v1896, %v1893
  %v2257 = vpack.c.b16 %v1897, %v1894
  %v2258 = vpack.c.b16 %v1901, %v1898
  %v2259 = vpack.c.b16 %v1902, %v1899
  %v2260 = vpack.c.b16 %v1903, %v1900
  %v2261 = vpack.c.b16 %v1907, %v1904
  %v2262 = vpack.c.b16 %v1908, %v1905
  %v2263 = vpack.c.b16 %v1909, %v1906
  %v2264 = vpack.c.b16 %v1913, %v1910
  %v2265 = vpack.c.b16 %v1914, %v1911
  %v2266 = vpack.c.b16 %v1915, %v1912
  %v2267 = vpack.c.b16 %v1919, %v1916
  %v2268 = vpack.c.b16 %v1920, %v1917
  %v2269 = vpack.c.b16 %v1921, %v1918
  %v2270 = vpack.c.b16 %v1925, %v1922
  %v2271 = vpack.c.b16 %v1926, %v1923
  %v2272 = vpack.c.b16 %v1927, %v1924
  %v2273 = vpack.c.b16 %v1931, %v1928
  %v2274 = vpack.c.b16 %v1932, %v1929
  %v2275 = vpack.c.b16 %v1933, %v1930
  %v2276 = vpack.c.b16 %v1937, %v1934
  %v2277 = vpack.c.b16 %v1938, %v1935
  %v2278 = vpack.c.b16 %v1939, %v1936
  %v2279 = vpack.c.b16 %v1943, %v1940
  %v2280 = vpack.c.b16 %v1944, %v1941
  %v2281 = vpack.c.b16 %v1945, %v1942
  %v2282 = vpack.c.b16 %v1949, %v1946
  %v2283 = vpack.c.b16 %v1950, %v1947
  %v2284 = vpack.c.b16 %v1951, %v1948
  %v2285 = vpack.c.b16 %v1955, %v1952
  %v2286 = vpack.c.b16 %v1956, %v1953
  %v2287 = vpack.c.b16 %v1957, %v1954
  %v2288 = vpack.c.b16 %v1961, %v1958
  %v2289 = vpack.c.b16 %v1962, %v1959
  %v2290 = vpack.c.b16 %v1963, %v1960
  %v2291 = vpack.c.b16 %v1967, %v1964
  %v2292 = vpack.c.b16 %v1968, %v1965
  %v2293 = vpack.c.b16 %v1969, %v1966
  %v2294 = vpack.c.b16 %v1973, %v1970
  %v2295 = vpack.c.b16 %v1974, %v1971
  %v2296 = vpack.c.b16 %v1975, %v1972
  %v2297 = vpack.c.b16 %v1979, %v1976
  %v2298 = vpack.c.b16 %v1980, %v1977
  %v2299 = vpack.c.b16 %v1981, %v1978
  %v2300 = vpack.c.b16 %v1985, %v1982
  %v2301 = vpack.c.b16 %v1986, %v1983
  %v2302 = vpack.c.b16 %v1987, %v1984
  %v2303 = vpack.c.b16 %v1991, %v1988
  %v2304 = vpack.c.b16 %v1992, %v1989
  %v2305 = vpack.c.b16 %v1993, %v1990
  %v2306 = vpack.c.b16 %v1997, %v1994
  %v2307 = vpack.c.b16 %v1998, %v1995
  %v2308 = vpack.c.b16 %v1999, %v1996
  %v2309 = vpack.c.b16 %v2003, %v2000
  %v2310 = vpack.c.b16 %v2004, %v2001
  %v2311 = vpack.c.b16 %v2005, %v2002
  %v2312 = vpack.c.b16 %v2009, %v2006
  %v2313 = vpack.c.b16 %v2010, %v2007
  %v2314 = vpack.c.b16 %v2011, %v2008
  %v2315 = vpack.c.b16 %v2015, %v2012
  %v2316 = vpack.c.b16 %v2016, %v2013
  %v2317 = vpack.c.b16 %v2017, %v2014
  %v2318 = vpack.c.b16 %v2021, %v2018
  %v2319 = vpack.c.b16 %v2022, %v2019
  %v2320 = vpack.c.b16 %v2023, %v2020
  %v2321 = vpack.c.b16 %v2027, %v2024
  %v2322 = vpack.c.b16 %v2028, %v2025
  %v2323 = vpack.c.b16 %v2029, %v2026
  %v2324 = vpack.c.b16 %v2033, %v2030
  %v2325 = vpack.c.b16 %v2034, %v2031
  %v2326 = vpack.c.b16 %v2035, %v2032
  %v2327 = vpack.c.b16 %v2039, %v2036
  %v2328 = vpack.c.b16 %v2040, %v2037
  %v2329 = vpack.c.b16 %v2041, %v2038
  %v2330 = vpack.c.b16 %v2045, %v2042
  %v2331 = vpack.c.b16 %v2046, %v2043
  %v2332 = vpack.c.b16 %v2047, %v2044
  %v2333 = vpack.c.b16 %v2051, %v2048
  %v2334 = vpack.c.b16 %v2052, %v2049
  %v2335 = vpack.c.b16 %v2053, %v2050
  %v2336 = vpack.c.b16 %v2057, %v2054
  %v2337 = vpack.c.b16 %v2058, %v2055
  %v2338 = vpack.c.b16 %v2059, %v2056
  %v2339 = vpack.c.b16 %v2063, %v2060
  %v2340 = vpack.c.b16 %v2064, %v2061
  %v2341 = vpack.c.b16 %v2065, %v2062
  %v2342 = vpack.c.b16 %v2069, %v2066
  %v2343 = vpack.c.b16 %v2070, %v2067
  %v2344 = vpack.c.b16 %v2071, %v2068
  %v2345 = vpack.c.b16 %v2075, %v2072
  %v2346 = vpack.c.b16 %v2076, %v2073
  %v2347 = vpack.c.b16 %v2077, %v2074
  %v2348 = vpack.c.b16 %v2081, %v2078
  %v2349 = vpack.c.b16 %v2082, %v2079
  %v2350 = vpack.c.b16 %v2083, %v2080
  %v2351 = vpack.c.b16 %v2087, %v2084
  %v2352 = vpack.c.b16 %v2088, %v2085
  %v2353 = vpack.c.b16 %v2089, %v2086
  %v2354 = vpack.c.b16 %v2093, %v2090
  %v2355 = vpack.c.b16 %v2094, %v2091
  %v2356 = vpack.c.b16 %v2095, %v2092
  %v2357 = vpack.c.b16 %v2099, %v2096
  %v2358 = vpack.c.b16 %v2100, %v2097
  %v2359 = vpack.c.b16 %v2101, %v2098
  %v2360 = vpack.c.b16 %v2105, %v2102
  %v2361 = vpack.c.b16 %v2106, %v2103
  %v2362 = vpack.c.b16 %v2107, %v2104
  %v2363 = vpack.c.b16 %v2111, %v2108
  %v2364 = vpack.c.b16 %v2112, %v2109
  %v2365 = vpack.c.b16 %v2113, %v2110
  %v2366 = vpack.c.b16 %v2117, %v2114
  %v2367 = vpack.c.b16 %v2118, %v2115
  %v2368 = vpack.c.b16 %v2119, %v2116
  %v2369 = vpack.c.b16 %v2123, %v2120
  %v2370 = vpack.c.b16 %v2124, %v2121
  %v2371 = vpack.c.b16 %v2125, %v2122
  %v2372 = vpack.c.b16 %v2129, %v2126
  %v2373 = vpack.c.b16 %v2130, %v2127
  %v2374 = vpack.c.b16 %v2131, %v2128
  %v2375 = vpack.c.b16 %v2135, %v2132
  %v2376 = vpack.c.b16 %v2136, %v2133
  %v2377 = vpack.c.b16 %v2137, %v2134
  %v2378 = vpack.c.b16 %v2141, %v2138
  %v2379 = vpack.c.b16 %v2142, %v2139
  %v2380 = vpack.c.b16 %v2143, %v2140
  %v2381 = vpack.c.b16 %v2147, %v2144
  %v2382 = vpack.c.b16 %v2148, %v2145
  %v2383 = vpack.c.b16 %v2149, %v2146
  %v2384 = vpack.c.b16 %v2153, %v2150
  %v2385 = vpack.c.b16 %v2154, %v2151
  %v2386 = vpack.c.b16 %v2155, %v2152
  %v2387 = vpack.c.b16 %v2159, %v2156
  %v2388 = vpack.c.b16 %v2160, %v2157
  %v2389 = vpack.c.b16 %v2161, %v2158
  %v2390 = vpack.c.b16 %v2165, %v2162
  %v2391 = vpack.c.b16 %v2166, %v2163
  %v2392 = vpack.c.b16 %v2167, %v2164
  %v2393 = vpack.c.b16 %v2171, %v2168
  %v2394 = vpack.c.b16 %v2172, %v2169
  %v2395 = vpack.c.b16 %v2173, %v2170
  %v2396 = vpack.c.b16 %v2177, %v2174
  %v2397 = vpack.c.b16 %v2178, %v2175
  %v2398 = vpack.c.b16 %v2179, %v2176
  %v2399 = vpack.c.b16 %v2183, %v2180
  %v2400 = vpack.c.b16 %v2184, %v2181
  %v2401 = vpack.c.b16 %v2185, %v2182
  %v2402 = vpack.c.b16 %v2189, %v2186
  %v2403 = vpack.c.b16 %v2190, %v2187
  %v2404 = vpack.c.b16 %v2191, %v2188
  %v2405 = vpack.c.b16 %v2195, %v2192
  %v2406 = vpack.c.b16 %v2196, %v2193
  %v2407 = vpack.c.b16 %v2197, %v2194
  %v2408 = vpack.c.b16 %v2201, %v2198
  %v2409 = vpack.c.b16 %v2202, %v2199
  %v2410 = vpack.c.b16 %v2203, %v2200
  %v2411 = vpack.c.b16 %v2207, %v2204
  %v2412 = vpack.c.b16 %v2208, %v2205
  %v2413 = vpack.c.b16 %v2209, %v2206
  %v2414 = vpack.c.b16 %v2213, %v2210
  %v2415 = vpack.c.b16 %v2214, %v2211
  %v2416 = vpack.c.b16 %v2215, %v2212
  %v2417 = vpack.c.b16 %v2219, %v2216
  %v2418 = vpack.c.b16 %v2220, %v2217
  %v2419 = vpack.c.b16 %v2221, %v2218
  %v2420 = vpack.c.b16 %v2225, %v2222
  %v2421 = vpack.c.b16 %v2226, %v2223
  %v2422 = vpack.c.b16 %v2227, %v2224
  %v2423 = vpack.c.b16 %v2231, %v2228
  %v2424 = vpack.c.b16 %v2232, %v2229
  %v2425 = vpack.c.b16 %v2233, %v2230
  %2618 = vmatpush.bf16.msra.mxu0 %v2255
  %2619 = vmatpush.bf16.msra.mxu0 %v2252
  %2620 = vmatpush.bf16.msra.mxu0 %v2249
  %2621 = vmatpush.bf16.msra.mxu0 %v2246
  %2622 = vmatpush.bf16.msra.mxu0 %v2243
  %2623 = vmatpush.bf16.msra.mxu0 %v2240
  %2624 = vmatpush.bf16.msra.mxu0 %v2237
  %2625 = vmatpush.bf16.msra.mxu0 %v2234
  %2626 = vmatmul.bf16.gmra.mxu0 %v1322
  %v2627 = vpop.f32.mrf.mxu0
  %v2628 = vadd.f32 %v1588, %v2627
  %v2629 = vpop.f32.mrf.mxu0
  %2630 = vdwg.mxu0
  %2631 = vmatpush.bf16.msra.mxu0 %v2279
  %2632 = vmatpush.bf16.msra.mxu0 %v2276
  %2633 = vmatpush.bf16.msra.mxu0 %v2273
  %2634 = vmatpush.bf16.msra.mxu0 %v2270
  %2635 = vmatpush.bf16.msra.mxu0 %v2267
  %2636 = vmatpush.bf16.msra.mxu0 %v2264
  %2637 = vmatpush.bf16.msra.mxu0 %v2261
  %2638 = vmatpush.bf16.msra.mxu0 %v2258
  %2639 = vmatmul.bf16.gmra.mxu0 %v1323
  %v2640 = vpop.f32.mrf.mxu0
  %v2641 = vadd.f32 %v2628, %v2640
  %v2642 = vpop.f32.mrf.mxu0
  %2643 = vdwg.mxu0
  %2644 = vmatpush.bf16.msra.mxu0 %v2303
  %2645 = vmatpush.bf16.msra.mxu0 %v2300
  %2646 = vmatpush.bf16.msra.mxu0 %v2297
  %2647 = vmatpush.bf16.msra.mxu0 %v2294
  %2648 = vmatpush.bf16.msra.mxu0 %v2291
  %2649 = vmatpush.bf16.msra.mxu0 %v2288
  %2650 = vmatpush.bf16.msra.mxu0 %v2285
  %2651 = vmatpush.bf16.msra.mxu0 %v2282
  %2652 = vmatmul.bf16.gmra.mxu0 %v1324
  %v2653 = vpop.f32.mrf.mxu0
  %v2654 = vadd.f32 %v2641, %v2653
  %v2655 = vpop.f32.mrf.mxu0
  %2656 = vdwg.mxu0
  %2657 = vmatpush.bf16.msra.mxu0 %v2327
  %2658 = vmatpush.bf16.msra.mxu0 %v2324
  %2659 = vmatpush.bf16.msra.mxu0 %v2321
  %2660 = vmatpush.bf16.msra.mxu0 %v2318
  %2661 = vmatpush.bf16.msra.mxu0 %v2315
  %2662 = vmatpush.bf16.msra.mxu0 %v2312
  %2663 = vmatpush.bf16.msra.mxu0 %v2309
  %2664 = vmatpush.bf16.msra.mxu0 %v2306
  %2665 = vmatmul.bf16.gmra.mxu0 %v1325
  %v2666 = vpop.f32.mrf.mxu0
  %v2667 = vadd.f32 %v2654, %v2666
  %v2668 = vpop.f32.mrf.mxu0
  %2669 = vdwg.mxu0
  %2670 = vmatpush.bf16.msra.mxu0 %v2351
  %2671 = vmatpush.bf16.msra.mxu0 %v2348
  %2672 = vmatpush.bf16.msra.mxu0 %v2345
  %2673 = vmatpush.bf16.msra.mxu0 %v2342
  %2674 = vmatpush.bf16.msra.mxu0 %v2339
  %2675 = vmatpush.bf16.msra.mxu0 %v2336
  %2676 = vmatpush.bf16.msra.mxu0 %v2333
  %2677 = vmatpush.bf16.msra.mxu0 %v2330
  %2678 = vmatmul.bf16.gmra.mxu0 %v1326
  %v2679 = vpop.f32.mrf.mxu0
  %v2680 = vadd.f32 %v2667, %v2679
  %v2681 = vpop.f32.mrf.mxu0
  %2682 = vdwg.mxu0
  %2683 = vmatpush.bf16.msra.mxu0 %v2375
  %2684 = vmatpush.bf16.msra.mxu0 %v2372
  %2685 = vmatpush.bf16.msra.mxu0 %v2369
  %2686 = vmatpush.bf16.msra.mxu0 %v2366
  %2687 = vmatpush.bf16.msra.mxu0 %v2363
  %2688 = vmatpush.bf16.msra.mxu0 %v2360
  %2689 = vmatpush.bf16.msra.mxu0 %v2357
  %2690 = vmatpush.bf16.msra.mxu0 %v2354
  %2691 = vmatmul.bf16.gmra.mxu0 %v1327
  %v2692 = vpop.f32.mrf.mxu0
  %v2693 = vadd.f32 %v2680, %v2692
  %v2694 = vpop.f32.mrf.mxu0
  %2695 = vdwg.mxu0
  %2696 = vmatpush.bf16.msra.mxu0 %v2399
  %2697 = vmatpush.bf16.msra.mxu0 %v2396
  %2698 = vmatpush.bf16.msra.mxu0 %v2393
  %2699 = vmatpush.bf16.msra.mxu0 %v2390
  %2700 = vmatpush.bf16.msra.mxu0 %v2387
  %2701 = vmatpush.bf16.msra.mxu0 %v2384
  %2702 = vmatpush.bf16.msra.mxu0 %v2381
  %2703 = vmatpush.bf16.msra.mxu0 %v2378
  %2704 = vmatmul.bf16.gmra.mxu0 %v1328
  %v2705 = vpop.f32.mrf.mxu0
  %v2706 = vadd.f32 %v2693, %v2705
  %v2707 = vpop.f32.mrf.mxu0
  %2708 = vdwg.mxu0
  %2709 = vmatpush.bf16.msra.mxu0 %v2423
  %2710 = vmatpush.bf16.msra.mxu0 %v2420
  %2711 = vmatpush.bf16.msra.mxu0 %v2417
  %2712 = vmatpush.bf16.msra.mxu0 %v2414
  %2713 = vmatpush.bf16.msra.mxu0 %v2411
  %2714 = vmatpush.bf16.msra.mxu0 %v2408
  %2715 = vmatpush.bf16.msra.mxu0 %v2405
  %2716 = vmatpush.bf16.msra.mxu0 %v2402
  %2717 = vmatmul.bf16.gmra.mxu0 %v1329
  %v2718 = vpop.f32.mrf.mxu0
  %v2719 = vadd.f32 %v2706, %v2718
  %v2720 = vpop.f32.mrf.mxu0
  %2721 = vdwg.mxu0
  %2722 = vmatpush.bf16.msra.mxu0 %v2256
  %2723 = vmatpush.bf16.msra.mxu0 %v2253
  %2724 = vmatpush.bf16.msra.mxu0 %v2250
  %2725 = vmatpush.bf16.msra.mxu0 %v2247
  %2726 = vmatpush.bf16.msra.mxu0 %v2244
  %2727 = vmatpush.bf16.msra.mxu0 %v2241
  %2728 = vmatpush.bf16.msra.mxu0 %v2238
  %2729 = vmatpush.bf16.msra.mxu0 %v2235
  %2730 = vmatmul.bf16.gmra.mxu0 %v1322
  %v2731 = vpop.f32.mrf.mxu0
  %v2732 = vadd.f32 %v1589, %v2731
  %v2733 = vpop.f32.mrf.mxu0
  %2734 = vdwg.mxu0
  %2735 = vmatpush.bf16.msra.mxu0 %v2280
  %2736 = vmatpush.bf16.msra.mxu0 %v2277
  %2737 = vmatpush.bf16.msra.mxu0 %v2274
  %2738 = vmatpush.bf16.msra.mxu0 %v2271
  %2739 = vmatpush.bf16.msra.mxu0 %v2268
  %2740 = vmatpush.bf16.msra.mxu0 %v2265
  %2741 = vmatpush.bf16.msra.mxu0 %v2262
  %2742 = vmatpush.bf16.msra.mxu0 %v2259
  %2743 = vmatmul.bf16.gmra.mxu0 %v1323
  %v2744 = vpop.f32.mrf.mxu0
  %v2745 = vadd.f32 %v2732, %v2744
  %v2746 = vpop.f32.mrf.mxu0
  %2747 = vdwg.mxu0
  %2748 = vmatpush.bf16.msra.mxu0 %v2304
  %2749 = vmatpush.bf16.msra.mxu0 %v2301
  %2750 = vmatpush.bf16.msra.mxu0 %v2298
  %2751 = vmatpush.bf16.msra.mxu0 %v2295
  %2752 = vmatpush.bf16.msra.mxu0 %v2292
  %2753 = vmatpush.bf16.msra.mxu0 %v2289
  %2754 = vmatpush.bf16.msra.mxu0 %v2286
  %2755 = vmatpush.bf16.msra.mxu0 %v2283
  %2756 = vmatmul.bf16.gmra.mxu0 %v1324
  %v2757 = vpop.f32.mrf.mxu0
  %v2758 = vadd.f32 %v2745, %v2757
  %v2759 = vpop.f32.mrf.mxu0
  %2760 = vdwg.mxu0
  %2761 = vmatpush.bf16.msra.mxu0 %v2328
  %2762 = vmatpush.bf16.msra.mxu0 %v2325
  %2763 = vmatpush.bf16.msra.mxu0 %v2322
  %2764 = vmatpush.bf16.msra.mxu0 %v2319
  %2765 = vmatpush.bf16.msra.mxu0 %v2316
  %2766 = vmatpush.bf16.msra.mxu0 %v2313
  %2767 = vmatpush.bf16.msra.mxu0 %v2310
  %2768 = vmatpush.bf16.msra.mxu0 %v2307
  %2769 = vmatmul.bf16.gmra.mxu0 %v1325
  %v2770 = vpop.f32.mrf.mxu0
  %v2771 = vadd.f32 %v2758, %v2770
  %v2772 = vpop.f32.mrf.mxu0
  %2773 = vdwg.mxu0
  %2774 = vmatpush.bf16.msra.mxu0 %v2352
  %2775 = vmatpush.bf16.msra.mxu0 %v2349
  %2776 = vmatpush.bf16.msra.mxu0 %v2346
  %2777 = vmatpush.bf16.msra.mxu0 %v2343
  %2778 = vmatpush.bf16.msra.mxu0 %v2340
  %2779 = vmatpush.bf16.msra.mxu0 %v2337
  %2780 = vmatpush.bf16.msra.mxu0 %v2334
  %2781 = vmatpush.bf16.msra.mxu0 %v2331
  %2782 = vmatmul.bf16.gmra.mxu0 %v1326
  %v2783 = vpop.f32.mrf.mxu0
  %v2784 = vadd.f32 %v2771, %v2783
  %v2785 = vpop.f32.mrf.mxu0
  %2786 = vdwg.mxu0
  %2787 = vmatpush.bf16.msra.mxu0 %v2376
  %2788 = vmatpush.bf16.msra.mxu0 %v2373
  %2789 = vmatpush.bf16.msra.mxu0 %v2370
  %2790 = vmatpush.bf16.msra.mxu0 %v2367
  %2791 = vmatpush.bf16.msra.mxu0 %v2364
  %2792 = vmatpush.bf16.msra.mxu0 %v2361
  %2793 = vmatpush.bf16.msra.mxu0 %v2358
  %2794 = vmatpush.bf16.msra.mxu0 %v2355
  %2795 = vmatmul.bf16.gmra.mxu0 %v1327
  %v2796 = vpop.f32.mrf.mxu0
  %v2797 = vadd.f32 %v2784, %v2796
  %v2798 = vpop.f32.mrf.mxu0
  %2799 = vdwg.mxu0
  %2800 = vmatpush.bf16.msra.mxu0 %v2400
  %2801 = vmatpush.bf16.msra.mxu0 %v2397
  %2802 = vmatpush.bf16.msra.mxu0 %v2394
  %2803 = vmatpush.bf16.msra.mxu0 %v2391
  %2804 = vmatpush.bf16.msra.mxu0 %v2388
  %2805 = vmatpush.bf16.msra.mxu0 %v2385
  %2806 = vmatpush.bf16.msra.mxu0 %v2382
  %2807 = vmatpush.bf16.msra.mxu0 %v2379
  %2808 = vmatmul.bf16.gmra.mxu0 %v1328
  %v2809 = vpop.f32.mrf.mxu0
  %v2810 = vadd.f32 %v2797, %v2809
  %v2811 = vpop.f32.mrf.mxu0
  %2812 = vdwg.mxu0
  %2813 = vmatpush.bf16.msra.mxu0 %v2424
  %2814 = vmatpush.bf16.msra.mxu0 %v2421
  %2815 = vmatpush.bf16.msra.mxu0 %v2418
  %2816 = vmatpush.bf16.msra.mxu0 %v2415
  %2817 = vmatpush.bf16.msra.mxu0 %v2412
  %2818 = vmatpush.bf16.msra.mxu0 %v2409
  %2819 = vmatpush.bf16.msra.mxu0 %v2406
  %2820 = vmatpush.bf16.msra.mxu0 %v2403
  %2821 = vmatmul.bf16.gmra.mxu0 %v1329
  %v2822 = vpop.f32.mrf.mxu0
  %v2823 = vadd.f32 %v2810, %v2822
  %v2824 = vpop.f32.mrf.mxu0
  %2825 = vdwg.mxu0
  %2826 = vmatpush.bf16.msra.mxu0 %v2257
  %2827 = vmatpush.bf16.msra.mxu0 %v2254
  %2828 = vmatpush.bf16.msra.mxu0 %v2251
  %2829 = vmatpush.bf16.msra.mxu0 %v2248
  %2830 = vmatpush.bf16.msra.mxu0 %v2245
  %2831 = vmatpush.bf16.msra.mxu0 %v2242
  %2832 = vmatpush.bf16.msra.mxu0 %v2239
  %2833 = vmatpush.bf16.msra.mxu0 %v2236
  %2834 = vmatmul.bf16.gmra.mxu0 %v1322
  %v2835 = vpop.f32.mrf.mxu0
  %v2836 = vadd.f32 %v1590, %v2835
  %v2837 = vpop.f32.mrf.mxu0
  %2838 = vdwg.mxu0
  %2839 = vmatpush.bf16.msra.mxu0 %v2281
  %2840 = vmatpush.bf16.msra.mxu0 %v2278
  %2841 = vmatpush.bf16.msra.mxu0 %v2275
  %2842 = vmatpush.bf16.msra.mxu0 %v2272
  %2843 = vmatpush.bf16.msra.mxu0 %v2269
  %2844 = vmatpush.bf16.msra.mxu0 %v2266
  %2845 = vmatpush.bf16.msra.mxu0 %v2263
  %2846 = vmatpush.bf16.msra.mxu0 %v2260
  %2847 = vmatmul.bf16.gmra.mxu0 %v1323
  %v2848 = vpop.f32.mrf.mxu0
  %v2849 = vadd.f32 %v2836, %v2848
  %v2850 = vpop.f32.mrf.mxu0
  %2851 = vdwg.mxu0
  %2852 = vmatpush.bf16.msra.mxu0 %v2305
  %2853 = vmatpush.bf16.msra.mxu0 %v2302
  %2854 = vmatpush.bf16.msra.mxu0 %v2299
  %2855 = vmatpush.bf16.msra.mxu0 %v2296
  %2856 = vmatpush.bf16.msra.mxu0 %v2293
  %2857 = vmatpush.bf16.msra.mxu0 %v2290
  %2858 = vmatpush.bf16.msra.mxu0 %v2287
  %2859 = vmatpush.bf16.msra.mxu0 %v2284
  %2860 = vmatmul.bf16.gmra.mxu0 %v1324
  %v2861 = vpop.f32.mrf.mxu0
  %v2862 = vadd.f32 %v2849, %v2861
  %v2863 = vpop.f32.mrf.mxu0
  %2864 = vdwg.mxu0
  %2865 = vmatpush.bf16.msra.mxu0 %v2329
  %2866 = vmatpush.bf16.msra.mxu0 %v2326
  %2867 = vmatpush.bf16.msra.mxu0 %v2323
  %2868 = vmatpush.bf16.msra.mxu0 %v2320
  %2869 = vmatpush.bf16.msra.mxu0 %v2317
  %2870 = vmatpush.bf16.msra.mxu0 %v2314
  %2871 = vmatpush.bf16.msra.mxu0 %v2311
  %2872 = vmatpush.bf16.msra.mxu0 %v2308
  %2873 = vmatmul.bf16.gmra.mxu0 %v1325
  %v2874 = vpop.f32.mrf.mxu0
  %v2875 = vadd.f32 %v2862, %v2874
  %v2876 = vpop.f32.mrf.mxu0
  %2877 = vdwg.mxu0
  %2878 = vmatpush.bf16.msra.mxu0 %v2353
  %2879 = vmatpush.bf16.msra.mxu0 %v2350
  %2880 = vmatpush.bf16.msra.mxu0 %v2347
  %2881 = vmatpush.bf16.msra.mxu0 %v2344
  %2882 = vmatpush.bf16.msra.mxu0 %v2341
  %2883 = vmatpush.bf16.msra.mxu0 %v2338
  %2884 = vmatpush.bf16.msra.mxu0 %v2335
  %2885 = vmatpush.bf16.msra.mxu0 %v2332
  %2886 = vmatmul.bf16.gmra.mxu0 %v1326
  %v2887 = vpop.f32.mrf.mxu0
  %v2888 = vadd.f32 %v2875, %v2887
  %v2889 = vpop.f32.mrf.mxu0
  %2890 = vdwg.mxu0
  %2891 = vmatpush.bf16.msra.mxu0 %v2377
  %2892 = vmatpush.bf16.msra.mxu0 %v2374
  %2893 = vmatpush.bf16.msra.mxu0 %v2371
  %2894 = vmatpush.bf16.msra.mxu0 %v2368
  %2895 = vmatpush.bf16.msra.mxu0 %v2365
  %2896 = vmatpush.bf16.msra.mxu0 %v2362
  %2897 = vmatpush.bf16.msra.mxu0 %v2359
  %2898 = vmatpush.bf16.msra.mxu0 %v2356
  %2899 = vmatmul.bf16.gmra.mxu0 %v1327
  %v2900 = vpop.f32.mrf.mxu0
  %v2901 = vadd.f32 %v2888, %v2900
  %v2902 = vpop.f32.mrf.mxu0
  %2903 = vdwg.mxu0
  %2904 = vmatpush.bf16.msra.mxu0 %v2401
  %2905 = vmatpush.bf16.msra.mxu0 %v2398
  %2906 = vmatpush.bf16.msra.mxu0 %v2395
  %2907 = vmatpush.bf16.msra.mxu0 %v2392
  %2908 = vmatpush.bf16.msra.mxu0 %v2389
  %2909 = vmatpush.bf16.msra.mxu0 %v2386
  %2910 = vmatpush.bf16.msra.mxu0 %v2383
  %2911 = vmatpush.bf16.msra.mxu0 %v2380
  %2912 = vmatmul.bf16.gmra.mxu0 %v1328
  %v2913 = vpop.f32.mrf.mxu0
  %v2914 = vadd.f32 %v2901, %v2913
  %v2915 = vpop.f32.mrf.mxu0
  %2916 = vdwg.mxu0
  %2917 = vmatpush.bf16.msra.mxu0 %v2425
  %2918 = vmatpush.bf16.msra.mxu0 %v2422
  %2919 = vmatpush.bf16.msra.mxu0 %v2419
  %2920 = vmatpush.bf16.msra.mxu0 %v2416
  %2921 = vmatpush.bf16.msra.mxu0 %v2413
  %2922 = vmatpush.bf16.msra.mxu0 %v2410
  %2923 = vmatpush.bf16.msra.mxu0 %v2407
  %2924 = vmatpush.bf16.msra.mxu0 %v2404
  %2925 = vmatmul.bf16.gmra.mxu0 %v1329
  %v2926 = vpop.f32.mrf.mxu0
  %v2927 = vadd.f32 %v2914, %v2926
  %v2928 = vpop.f32.mrf.mxu0
  %2929 = vdwg.mxu0
  %v2930 = vxor.u32 %v2719, 2147483648
  %v2931 = vxor.u32 %v2823, 2147483648
  %v2932 = vxor.u32 %v2927, 2147483648
  %v2933 = vmul.f32 %v2930, 1.442695
  %v2934 = vpow.pop %v2933
  %v2935 = vmul.f32 %v2931, 1.442695
  %v2936 = vpow.pop %v2935
  %v2937 = vmul.f32 %v2932, 1.442695
  %v2938 = vpow.pop %v2937
  %v2939 = vadd.f32 %v2934, 1.0
  %v2940 = vadd.f32 %v2936, 1.0
  %v2941 = vadd.f32 %v2938, 1.0
  %v2942 = vrcp.pop %v2939
  %v2943 = vmul.f32 %v2939, %v2942
  %v2944 = vsub.f32 1.0, %v2943
  %v2945 = vmul.f32 %v2942, %v2944
  %v2946 = vadd.f32 %v2942, %v2945
  %vm2947 = vweird.f32 %v2939
  %vm2948 = vweird.f32 %v2942
  %vm2949 = vmor %vm2947, %vm2948
  %v2950 = vsel %vm2949, %v2942, %v2946
  %v2951 = vand.u32 2147483647, %v2939
  %vm2952 = vcmp.eq.f32.partialorder %v2951, 8.507059e+37
  %v2953 = vand.u32 %v2939, 2147483648
  %v2954 = vor.u32 1.1754944e-38, %v2953
  %v2955 = vsel %vm2952, %v2954, %v2950
  %v2956 = vmul.f32 1.0, %v2955
  %v2957 = vrcp.pop %v2940
  %v2958 = vmul.f32 %v2940, %v2957
  %v2959 = vsub.f32 1.0, %v2958
  %v2960 = vmul.f32 %v2957, %v2959
  %v2961 = vadd.f32 %v2957, %v2960
  %vm2962 = vweird.f32 %v2940
  %vm2963 = vweird.f32 %v2957
  %vm2964 = vmor %vm2962, %vm2963
  %v2965 = vsel %vm2964, %v2957, %v2961
  %v2966 = vand.u32 2147483647, %v2940
  %vm2967 = vcmp.eq.f32.partialorder %v2966, 8.507059e+37
  %v2968 = vand.u32 %v2940, 2147483648
  %v2969 = vor.u32 1.1754944e-38, %v2968
  %v2970 = vsel %vm2967, %v2969, %v2965
  %v2971 = vmul.f32 1.0, %v2970
  %v2972 = vrcp.pop %v2941
  %v2973 = vmul.f32 %v2941, %v2972
  %v2974 = vsub.f32 1.0, %v2973
  %v2975 = vmul.f32 %v2972, %v2974
  %v2976 = vadd.f32 %v2972, %v2975
  %vm2977 = vweird.f32 %v2941
  %vm2978 = vweird.f32 %v2972
  %vm2979 = vmor %vm2977, %vm2978
  %v2980 = vsel %vm2979, %v2972, %v2976
  %v2981 = vand.u32 2147483647, %v2941
  %vm2982 = vcmp.eq.f32.partialorder %v2981, 8.507059e+37
  %v2983 = vand.u32 %v2941, 2147483648
  %v2984 = vor.u32 1.1754944e-38, %v2983
  %v2985 = vsel %vm2982, %v2984, %v2980
  %v2986 = vmul.f32 1.0, %v2985
  %v2987 = vpack.c.bf16 %v2956, %v2956
  %v2988 = vpack.c.bf16 %v2971, %v2971
  %v2989 = vpack.c.bf16 %v2986, %v2986
  %v2990 = vld [vmem:[%s8] sm:$0xff]
  %v2991 = vld [vmem:[%s8 + $0x8] sm:$0xf]
  %v2992 = vld [vmem:[%s8 + $0xc] sm:$0xff]
  %v2993 = vld [vmem:[%s8 + $0x14] sm:$0xf]
  %v2994 = vld [vmem:[%s8 + $0x18] sm:$0xff]
  %v2995 = vld [vmem:[%s8 + $0x20] sm:$0xf]
  %v2996 = vld [vmem:[%s8 + $0x24] sm:$0xff]
  %v2997 = vld [vmem:[%s8 + $0x2c] sm:$0xf]
  %v2998 = vld [vmem:[%s8 + $0x30] sm:$0xff]
  %v2999 = vld [vmem:[%s8 + $0x38] sm:$0xf]
  %v3000 = vld [vmem:[%s8 + $0x3c] sm:$0xff]
  %v3001 = vld [vmem:[%s8 + $0x44] sm:$0xf]
  %v3002 = vld [vmem:[%s8 + $0x48] sm:$0xff]
  %v3003 = vld [vmem:[%s8 + $0x50] sm:$0xf]
  %v3004 = vld [vmem:[%s8 + $0x54] sm:$0xff]
  %v3005 = vld [vmem:[%s8 + $0x5c] sm:$0xf]
  %v3006 = vld [vmem:[%s8 + $0x60] sm:$0xff]
  %v3007 = vld [vmem:[%s8 + $0x68] sm:$0xf]
  %v3008 = vld [vmem:[%s8 + $0x6c] sm:$0xff]
  %v3009 = vld [vmem:[%s8 + $0x74] sm:$0xf]
  %v3010 = vld [vmem:[%s8 + $0x78] sm:$0xff]
  %v3011 = vld [vmem:[%s8 + $0x80] sm:$0xf]
  %v3012 = vld [vmem:[%s8 + $0x84] sm:$0xff]
  %v3013 = vld [vmem:[%s8 + $0x8c] sm:$0xf]
  %v3014 = vld [vmem:[%s8 + $0x90] sm:$0xff]
  %v3015 = vld [vmem:[%s8 + $0x98] sm:$0xf]
  %v3016 = vld [vmem:[%s8 + $0x9c] sm:$0xff]
  %v3017 = vld [vmem:[%s8 + $0xa4] sm:$0xf]
  %v3018 = vld [vmem:[%s8 + $0xa8] sm:$0xff]
  %v3019 = vld [vmem:[%s8 + $0xb0] sm:$0xf]
  %v3020 = vld [vmem:[%s8 + $0xb4] sm:$0xff]
  %v3021 = vld [vmem:[%s8 + $0xbc] sm:$0xf]
  %v3022 = vld [vmem:[%s8 + $0xc0] sm:$0xff]
  %v3023 = vld [vmem:[%s8 + $0xc8] sm:$0xf]
  %v3024 = vld [vmem:[%s8 + $0xcc] sm:$0xff]
  %v3025 = vld [vmem:[%s8 + $0xd4] sm:$0xf]
  %v3026 = vld [vmem:[%s8 + $0xd8] sm:$0xff]
  %v3027 = vld [vmem:[%s8 + $0xe0] sm:$0xf]
  %v3028 = vld [vmem:[%s8 + $0xe4] sm:$0xff]
  %v3029 = vld [vmem:[%s8 + $0xec] sm:$0xf]
  %v3030 = vld [vmem:[%s8 + $0xf0] sm:$0xff]
  %v3031 = vld [vmem:[%s8 + $0xf8] sm:$0xf]
  %v3032 = vld [vmem:[%s8 + $0xfc] sm:$0xff]
  %v3033 = vld [vmem:[%s8 + $0x104] sm:$0xf]
  %v3034 = vld [vmem:[%s8 + $0x108] sm:$0xff]
  %v3035 = vld [vmem:[%s8 + $0x110] sm:$0xf]
  %v3036 = vld [vmem:[%s8 + $0x114] sm:$0xff]
  %v3037 = vld [vmem:[%s8 + $0x11c] sm:$0xf]
  %v3038 = vld [vmem:[%s8 + $0x120] sm:$0xff]
  %v3039 = vld [vmem:[%s8 + $0x128] sm:$0xf]
  %v3040 = vld [vmem:[%s8 + $0x12c] sm:$0xff]
  %v3041 = vld [vmem:[%s8 + $0x134] sm:$0xf]
  %v3042 = vld [vmem:[%s8 + $0x138] sm:$0xff]
  %v3043 = vld [vmem:[%s8 + $0x140] sm:$0xf]
  %v3044 = vld [vmem:[%s8 + $0x144] sm:$0xff]
  %v3045 = vld [vmem:[%s8 + $0x14c] sm:$0xf]
  %v3046 = vld [vmem:[%s8 + $0x150] sm:$0xff]
  %v3047 = vld [vmem:[%s8 + $0x158] sm:$0xf]
  %v3048 = vld [vmem:[%s8 + $0x15c] sm:$0xff]
  %v3049 = vld [vmem:[%s8 + $0x164] sm:$0xf]
  %v3050 = vld [vmem:[%s8 + $0x168] sm:$0xff]
  %v3051 = vld [vmem:[%s8 + $0x170] sm:$0xf]
  %v3052 = vld [vmem:[%s8 + $0x174] sm:$0xff]
  %v3053 = vld [vmem:[%s8 + $0x17c] sm:$0xf]
  %v3054 = vld [vmem:[%s8 + $0x180] sm:$0xff]
  %v3055 = vld [vmem:[%s8 + $0x188] sm:$0xf]
  %v3056 = vld [vmem:[%s8 + $0x18c] sm:$0xff]
  %v3057 = vld [vmem:[%s8 + $0x194] sm:$0xf]
  %v3058 = vld [vmem:[%s8 + $0x198] sm:$0xff]
  %v3059 = vld [vmem:[%s8 + $0x1a0] sm:$0xf]
  %v3060 = vld [vmem:[%s8 + $0x1a4] sm:$0xff]
  %v3061 = vld [vmem:[%s8 + $0x1ac] sm:$0xf]
  %v3062 = vld [vmem:[%s8 + $0x1b0] sm:$0xff]
  %v3063 = vld [vmem:[%s8 + $0x1b8] sm:$0xf]
  %v3064 = vld [vmem:[%s8 + $0x1bc] sm:$0xff]
  %v3065 = vld [vmem:[%s8 + $0x1c4] sm:$0xf]
  %v3066 = vld [vmem:[%s8 + $0x1c8] sm:$0xff]
  %v3067 = vld [vmem:[%s8 + $0x1d0] sm:$0xf]
  %v3068 = vld [vmem:[%s8 + $0x1d4] sm:$0xff]
  %v3069 = vld [vmem:[%s8 + $0x1dc] sm:$0xf]
  %v3070 = vld [vmem:[%s8 + $0x1e0] sm:$0xff]
  %v3071 = vld [vmem:[%s8 + $0x1e8] sm:$0xf]
  %v3072 = vld [vmem:[%s8 + $0x1ec] sm:$0xff]
  %v3073 = vld [vmem:[%s8 + $0x1f4] sm:$0xf]
  %v3074 = vld [vmem:[%s8 + $0x1f8] sm:$0xff]
  %v3075 = vld [vmem:[%s8 + $0x200] sm:$0xf]
  %v3076 = vld [vmem:[%s8 + $0x204] sm:$0xff]
  %v3077 = vld [vmem:[%s8 + $0x20c] sm:$0xf]
  %v3078 = vld [vmem:[%s8 + $0x210] sm:$0xff]
  %v3079 = vld [vmem:[%s8 + $0x218] sm:$0xf]
  %v3080 = vld [vmem:[%s8 + $0x21c] sm:$0xff]
  %v3081 = vld [vmem:[%s8 + $0x224] sm:$0xf]
  %v3082 = vld [vmem:[%s8 + $0x228] sm:$0xff]
  %v3083 = vld [vmem:[%s8 + $0x230] sm:$0xf]
  %v3084 = vld [vmem:[%s8 + $0x234] sm:$0xff]
  %v3085 = vld [vmem:[%s8 + $0x23c] sm:$0xf]
  %v3086 = vld [vmem:[%s9] sm:$0x7]
  %v3088 = vperm.slane %v3086, 0
  %v3089 = vperm.slane %v3086, 1
  %v3090 = vperm.slane %v3086, 2
  %v3190 = vunpack.c.l.b16 %v2990
  %v3191 = vunpack.c.h.b16 %v2990
  %v3192 = vunpack.c.l.b16 %v2991
  %v3193 = vunpack.c.l.b16 %v2992
  %v3194 = vunpack.c.h.b16 %v2992
  %v3195 = vunpack.c.l.b16 %v2993
  %v3196 = vunpack.c.l.b16 %v2994
  %v3197 = vunpack.c.h.b16 %v2994
  %v3198 = vunpack.c.l.b16 %v2995
  %v3199 = vunpack.c.l.b16 %v2996
  %v3200 = vunpack.c.h.b16 %v2996
  %v3201 = vunpack.c.l.b16 %v2997
  %v3202 = vunpack.c.l.b16 %v2998
  %v3203 = vunpack.c.h.b16 %v2998
  %v3204 = vunpack.c.l.b16 %v2999
  %v3205 = vunpack.c.l.b16 %v3000
  %v3206 = vunpack.c.h.b16 %v3000
  %v3207 = vunpack.c.l.b16 %v3001
  %v3208 = vunpack.c.l.b16 %v3002
  %v3209 = vunpack.c.h.b16 %v3002
  %v3210 = vunpack.c.l.b16 %v3003
  %v3211 = vunpack.c.l.b16 %v3004
  %v3212 = vunpack.c.h.b16 %v3004
  %v3213 = vunpack.c.l.b16 %v3005
  %v3214 = vunpack.c.l.b16 %v3006
  %v3215 = vunpack.c.h.b16 %v3006
  %v3216 = vunpack.c.l.b16 %v3007
  %v3217 = vunpack.c.l.b16 %v3008
  %v3218 = vunpack.c.h.b16 %v3008
  %v3219 = vunpack.c.l.b16 %v3009
  %v3220 = vunpack.c.l.b16 %v3010
  %v3221 = vunpack.c.h.b16 %v3010
  %v3222 = vunpack.c.l.b16 %v3011
  %v3223 = vunpack.c.l.b16 %v3012
  %v3224 = vunpack.c.h.b16 %v3012
  %v3225 = vunpack.c.l.b16 %v3013
  %v3226 = vunpack.c.l.b16 %v3014
  %v3227 = vunpack.c.h.b16 %v3014
  %v3228 = vunpack.c.l.b16 %v3015
  %v3229 = vunpack.c.l.b16 %v3016
  %v3230 = vunpack.c.h.b16 %v3016
  %v3231 = vunpack.c.l.b16 %v3017
  %v3232 = vunpack.c.l.b16 %v3018
  %v3233 = vunpack.c.h.b16 %v3018
  %v3234 = vunpack.c.l.b16 %v3019
  %v3235 = vunpack.c.l.b16 %v3020
  %v3236 = vunpack.c.h.b16 %v3020
  %v3237 = vunpack.c.l.b16 %v3021
  %v3238 = vunpack.c.l.b16 %v3022
  %v3239 = vunpack.c.h.b16 %v3022
  %v3240 = vunpack.c.l.b16 %v3023
  %v3241 = vunpack.c.l.b16 %v3024
  %v3242 = vunpack.c.h.b16 %v3024
  %v3243 = vunpack.c.l.b16 %v3025
  %v3244 = vunpack.c.l.b16 %v3026
  %v3245 = vunpack.c.h.b16 %v3026
  %v3246 = vunpack.c.l.b16 %v3027
  %v3247 = vunpack.c.l.b16 %v3028
  %v3248 = vunpack.c.h.b16 %v3028
  %v3249 = vunpack.c.l.b16 %v3029
  %v3250 = vunpack.c.l.b16 %v3030
  %v3251 = vunpack.c.h.b16 %v3030
  %v3252 = vunpack.c.l.b16 %v3031
  %v3253 = vunpack.c.l.b16 %v3032
  %v3254 = vunpack.c.h.b16 %v3032
  %v3255 = vunpack.c.l.b16 %v3033
  %v3256 = vunpack.c.l.b16 %v3034
  %v3257 = vunpack.c.h.b16 %v3034
  %v3258 = vunpack.c.l.b16 %v3035
  %v3259 = vunpack.c.l.b16 %v3036
  %v3260 = vunpack.c.h.b16 %v3036
  %v3261 = vunpack.c.l.b16 %v3037
  %v3262 = vunpack.c.l.b16 %v3038
  %v3263 = vunpack.c.h.b16 %v3038
  %v3264 = vunpack.c.l.b16 %v3039
  %v3265 = vunpack.c.l.b16 %v3040
  %v3266 = vunpack.c.h.b16 %v3040
  %v3267 = vunpack.c.l.b16 %v3041
  %v3268 = vunpack.c.l.b16 %v3042
  %v3269 = vunpack.c.h.b16 %v3042
  %v3270 = vunpack.c.l.b16 %v3043
  %v3271 = vunpack.c.l.b16 %v3044
  %v3272 = vunpack.c.h.b16 %v3044
  %v3273 = vunpack.c.l.b16 %v3045
  %v3274 = vunpack.c.l.b16 %v3046
  %v3275 = vunpack.c.h.b16 %v3046
  %v3276 = vunpack.c.l.b16 %v3047
  %v3277 = vunpack.c.l.b16 %v3048
  %v3278 = vunpack.c.h.b16 %v3048
  %v3279 = vunpack.c.l.b16 %v3049
  %v3280 = vunpack.c.l.b16 %v3050
  %v3281 = vunpack.c.h.b16 %v3050
  %v3282 = vunpack.c.l.b16 %v3051
  %v3283 = vunpack.c.l.b16 %v3052
  %v3284 = vunpack.c.h.b16 %v3052
  %v3285 = vunpack.c.l.b16 %v3053
  %v3286 = vunpack.c.l.b16 %v3054
  %v3287 = vunpack.c.h.b16 %v3054
  %v3288 = vunpack.c.l.b16 %v3055
  %v3289 = vunpack.c.l.b16 %v3056
  %v3290 = vunpack.c.h.b16 %v3056
  %v3291 = vunpack.c.l.b16 %v3057
  %v3292 = vunpack.c.l.b16 %v3058
  %v3293 = vunpack.c.h.b16 %v3058
  %v3294 = vunpack.c.l.b16 %v3059
  %v3295 = vunpack.c.l.b16 %v3060
  %v3296 = vunpack.c.h.b16 %v3060
  %v3297 = vunpack.c.l.b16 %v3061
  %v3298 = vunpack.c.l.b16 %v3062
  %v3299 = vunpack.c.h.b16 %v3062
  %v3300 = vunpack.c.l.b16 %v3063
  %v3301 = vunpack.c.l.b16 %v3064
  %v3302 = vunpack.c.h.b16 %v3064
  %v3303 = vunpack.c.l.b16 %v3065
  %v3304 = vunpack.c.l.b16 %v3066
  %v3305 = vunpack.c.h.b16 %v3066
  %v3306 = vunpack.c.l.b16 %v3067
  %v3307 = vunpack.c.l.b16 %v3068
  %v3308 = vunpack.c.h.b16 %v3068
  %v3309 = vunpack.c.l.b16 %v3069
  %v3310 = vunpack.c.l.b16 %v3070
  %v3311 = vunpack.c.h.b16 %v3070
  %v3312 = vunpack.c.l.b16 %v3071
  %v3313 = vunpack.c.l.b16 %v3072
  %v3314 = vunpack.c.h.b16 %v3072
  %v3315 = vunpack.c.l.b16 %v3073
  %v3316 = vunpack.c.l.b16 %v3074
  %v3317 = vunpack.c.h.b16 %v3074
  %v3318 = vunpack.c.l.b16 %v3075
  %v3319 = vunpack.c.l.b16 %v3076
  %v3320 = vunpack.c.h.b16 %v3076
  %v3321 = vunpack.c.l.b16 %v3077
  %v3322 = vunpack.c.l.b16 %v3078
  %v3323 = vunpack.c.h.b16 %v3078
  %v3324 = vunpack.c.l.b16 %v3079
  %v3325 = vunpack.c.l.b16 %v3080
  %v3326 = vunpack.c.h.b16 %v3080
  %v3327 = vunpack.c.l.b16 %v3081
  %v3328 = vunpack.c.l.b16 %v3082
  %v3329 = vunpack.c.h.b16 %v3082
  %v3330 = vunpack.c.l.b16 %v3083
  %v3331 = vunpack.c.l.b16 %v3084
  %v3332 = vunpack.c.h.b16 %v3084
  %v3333 = vunpack.c.l.b16 %v3085
  %v3334 = vpack.c.b16 %v3193, %v3190
  %v3335 = vpack.c.b16 %v3194, %v3191
  %v3336 = vpack.c.b16 %v3195, %v3192
  %v3337 = vpack.c.b16 %v3199, %v3196
  %v3338 = vpack.c.b16 %v3200, %v3197
  %v3339 = vpack.c.b16 %v3201, %v3198
  %v3340 = vpack.c.b16 %v3205, %v3202
  %v3341 = vpack.c.b16 %v3206, %v3203
  %v3342 = vpack.c.b16 %v3207, %v3204
  %v3343 = vpack.c.b16 %v3211, %v3208
  %v3344 = vpack.c.b16 %v3212, %v3209
  %v3345 = vpack.c.b16 %v3213, %v3210
  %v3346 = vpack.c.b16 %v3217, %v3214
  %v3347 = vpack.c.b16 %v3218, %v3215
  %v3348 = vpack.c.b16 %v3219, %v3216
  %v3349 = vpack.c.b16 %v3223, %v3220
  %v3350 = vpack.c.b16 %v3224, %v3221
  %v3351 = vpack.c.b16 %v3225, %v3222
  %v3352 = vpack.c.b16 %v3229, %v3226
  %v3353 = vpack.c.b16 %v3230, %v3227
  %v3354 = vpack.c.b16 %v3231, %v3228
  %v3355 = vpack.c.b16 %v3235, %v3232
  %v3356 = vpack.c.b16 %v3236, %v3233
  %v3357 = vpack.c.b16 %v3237, %v3234
  %v3358 = vpack.c.b16 %v3241, %v3238
  %v3359 = vpack.c.b16 %v3242, %v3239
  %v3360 = vpack.c.b16 %v3243, %v3240
  %v3361 = vpack.c.b16 %v3247, %v3244
  %v3362 = vpack.c.b16 %v3248, %v3245
  %v3363 = vpack.c.b16 %v3249, %v3246
  %v3364 = vpack.c.b16 %v3253, %v3250
  %v3365 = vpack.c.b16 %v3254, %v3251
  %v3366 = vpack.c.b16 %v3255, %v3252
  %v3367 = vpack.c.b16 %v3259, %v3256
  %v3368 = vpack.c.b16 %v3260, %v3257
  %v3369 = vpack.c.b16 %v3261, %v3258
  %v3370 = vpack.c.b16 %v3265, %v3262
  %v3371 = vpack.c.b16 %v3266, %v3263
  %v3372 = vpack.c.b16 %v3267, %v3264
  %v3373 = vpack.c.b16 %v3271, %v3268
  %v3374 = vpack.c.b16 %v3272, %v3269
  %v3375 = vpack.c.b16 %v3273, %v3270
  %v3376 = vpack.c.b16 %v3277, %v3274
  %v3377 = vpack.c.b16 %v3278, %v3275
  %v3378 = vpack.c.b16 %v3279, %v3276
  %v3379 = vpack.c.b16 %v3283, %v3280
  %v3380 = vpack.c.b16 %v3284, %v3281
  %v3381 = vpack.c.b16 %v3285, %v3282
  %v3382 = vpack.c.b16 %v3289, %v3286
  %v3383 = vpack.c.b16 %v3290, %v3287
  %v3384 = vpack.c.b16 %v3291, %v3288
  %v3385 = vpack.c.b16 %v3295, %v3292
  %v3386 = vpack.c.b16 %v3296, %v3293
  %v3387 = vpack.c.b16 %v3297, %v3294
  %v3388 = vpack.c.b16 %v3301, %v3298
  %v3389 = vpack.c.b16 %v3302, %v3299
  %v3390 = vpack.c.b16 %v3303, %v3300
  %v3391 = vpack.c.b16 %v3307, %v3304
  %v3392 = vpack.c.b16 %v3308, %v3305
  %v3393 = vpack.c.b16 %v3309, %v3306
  %v3394 = vpack.c.b16 %v3313, %v3310
  %v3395 = vpack.c.b16 %v3314, %v3311
  %v3396 = vpack.c.b16 %v3315, %v3312
  %v3397 = vpack.c.b16 %v3319, %v3316
  %v3398 = vpack.c.b16 %v3320, %v3317
  %v3399 = vpack.c.b16 %v3321, %v3318
  %v3400 = vpack.c.b16 %v3325, %v3322
  %v3401 = vpack.c.b16 %v3326, %v3323
  %v3402 = vpack.c.b16 %v3327, %v3324
  %v3403 = vpack.c.b16 %v3331, %v3328
  %v3404 = vpack.c.b16 %v3332, %v3329
  %v3405 = vpack.c.b16 %v3333, %v3330
  %3478 = vmatpush.bf16.msra.mxu0 %v3355
  %3479 = vmatpush.bf16.msra.mxu0 %v3352
  %3480 = vmatpush.bf16.msra.mxu0 %v3349
  %3481 = vmatpush.bf16.msra.mxu0 %v3346
  %3482 = vmatpush.bf16.msra.mxu0 %v3343
  %3483 = vmatpush.bf16.msra.mxu0 %v3340
  %3484 = vmatpush.bf16.msra.mxu0 %v3337
  %3485 = vmatpush.bf16.msra.mxu0 %v3334
  %3486 = vmatmul.bf16.gmra.mxu0 %v2987
  %v3487 = vpop.f32.mrf.mxu0
  %v3488 = vadd.f32 %v3088, %v3487
  %v3489 = vpop.f32.mrf.mxu0
  %3490 = vdwg.mxu0
  %3491 = vmatpush.bf16.msra.mxu0 %v3379
  %3492 = vmatpush.bf16.msra.mxu0 %v3376
  %3493 = vmatpush.bf16.msra.mxu0 %v3373
  %3494 = vmatpush.bf16.msra.mxu0 %v3370
  %3495 = vmatpush.bf16.msra.mxu0 %v3367
  %3496 = vmatpush.bf16.msra.mxu0 %v3364
  %3497 = vmatpush.bf16.msra.mxu0 %v3361
  %3498 = vmatpush.bf16.msra.mxu0 %v3358
  %3499 = vmatmul.bf16.gmra.mxu0 %v2988
  %v3500 = vpop.f32.mrf.mxu0
  %v3501 = vadd.f32 %v3488, %v3500
  %v3502 = vpop.f32.mrf.mxu0
  %3503 = vdwg.mxu0
  %3504 = vmatpush.bf16.msra.mxu0 %v3403
  %3505 = vmatpush.bf16.msra.mxu0 %v3400
  %3506 = vmatpush.bf16.msra.mxu0 %v3397
  %3507 = vmatpush.bf16.msra.mxu0 %v3394
  %3508 = vmatpush.bf16.msra.mxu0 %v3391
  %3509 = vmatpush.bf16.msra.mxu0 %v3388
  %3510 = vmatpush.bf16.msra.mxu0 %v3385
  %3511 = vmatpush.bf16.msra.mxu0 %v3382
  %3512 = vmatmul.bf16.gmra.mxu0 %v2989
  %v3513 = vpop.f32.mrf.mxu0
  %v3514 = vadd.f32 %v3501, %v3513
  %v3515 = vpop.f32.mrf.mxu0
  %3516 = vdwg.mxu0
  %3517 = vmatpush.bf16.msra.mxu0 %v3356
  %3518 = vmatpush.bf16.msra.mxu0 %v3353
  %3519 = vmatpush.bf16.msra.mxu0 %v3350
  %3520 = vmatpush.bf16.msra.mxu0 %v3347
  %3521 = vmatpush.bf16.msra.mxu0 %v3344
  %3522 = vmatpush.bf16.msra.mxu0 %v3341
  %3523 = vmatpush.bf16.msra.mxu0 %v3338
  %3524 = vmatpush.bf16.msra.mxu0 %v3335
  %3525 = vmatmul.bf16.gmra.mxu0 %v2987
  %v3526 = vpop.f32.mrf.mxu0
  %v3527 = vadd.f32 %v3089, %v3526
  %v3528 = vpop.f32.mrf.mxu0
  %3529 = vdwg.mxu0
  %3530 = vmatpush.bf16.msra.mxu0 %v3380
  %3531 = vmatpush.bf16.msra.mxu0 %v3377
  %3532 = vmatpush.bf16.msra.mxu0 %v3374
  %3533 = vmatpush.bf16.msra.mxu0 %v3371
  %3534 = vmatpush.bf16.msra.mxu0 %v3368
  %3535 = vmatpush.bf16.msra.mxu0 %v3365
  %3536 = vmatpush.bf16.msra.mxu0 %v3362
  %3537 = vmatpush.bf16.msra.mxu0 %v3359
  %3538 = vmatmul.bf16.gmra.mxu0 %v2988
  %v3539 = vpop.f32.mrf.mxu0
  %v3540 = vadd.f32 %v3527, %v3539
  %v3541 = vpop.f32.mrf.mxu0
  %3542 = vdwg.mxu0
  %3543 = vmatpush.bf16.msra.mxu0 %v3404
  %3544 = vmatpush.bf16.msra.mxu0 %v3401
  %3545 = vmatpush.bf16.msra.mxu0 %v3398
  %3546 = vmatpush.bf16.msra.mxu0 %v3395
  %3547 = vmatpush.bf16.msra.mxu0 %v3392
  %3548 = vmatpush.bf16.msra.mxu0 %v3389
  %3549 = vmatpush.bf16.msra.mxu0 %v3386
  %3550 = vmatpush.bf16.msra.mxu0 %v3383
  %3551 = vmatmul.bf16.gmra.mxu0 %v2989
  %v3552 = vpop.f32.mrf.mxu0
  %v3553 = vadd.f32 %v3540, %v3552
  %v3554 = vpop.f32.mrf.mxu0
  %3555 = vdwg.mxu0
  %3556 = vmatpush.bf16.msra.mxu0 %v3357
  %3557 = vmatpush.bf16.msra.mxu0 %v3354
  %3558 = vmatpush.bf16.msra.mxu0 %v3351
  %3559 = vmatpush.bf16.msra.mxu0 %v3348
  %3560 = vmatpush.bf16.msra.mxu0 %v3345
  %3561 = vmatpush.bf16.msra.mxu0 %v3342
  %3562 = vmatpush.bf16.msra.mxu0 %v3339
  %3563 = vmatpush.bf16.msra.mxu0 %v3336
  %3564 = vmatmul.bf16.gmra.mxu0 %v2987
  %v3565 = vpop.f32.mrf.mxu0
  %v3566 = vadd.f32 %v3090, %v3565
  %v3567 = vpop.f32.mrf.mxu0
  %3568 = vdwg.mxu0
  %3569 = vmatpush.bf16.msra.mxu0 %v3381
  %3570 = vmatpush.bf16.msra.mxu0 %v3378
  %3571 = vmatpush.bf16.msra.mxu0 %v3375
  %3572 = vmatpush.bf16.msra.mxu0 %v3372
  %3573 = vmatpush.bf16.msra.mxu0 %v3369
  %3574 = vmatpush.bf16.msra.mxu0 %v3366
  %3575 = vmatpush.bf16.msra.mxu0 %v3363
  %3576 = vmatpush.bf16.msra.mxu0 %v3360
  %3577 = vmatmul.bf16.gmra.mxu0 %v2988
  %v3578 = vpop.f32.mrf.mxu0
  %v3579 = vadd.f32 %v3566, %v3578
  %v3580 = vpop.f32.mrf.mxu0
  %3581 = vdwg.mxu0
  %3582 = vmatpush.bf16.msra.mxu0 %v3405
  %3583 = vmatpush.bf16.msra.mxu0 %v3402
  %3584 = vmatpush.bf16.msra.mxu0 %v3399
  %3585 = vmatpush.bf16.msra.mxu0 %v3396
  %3586 = vmatpush.bf16.msra.mxu0 %v3393
  %3587 = vmatpush.bf16.msra.mxu0 %v3390
  %3588 = vmatpush.bf16.msra.mxu0 %v3387
  %3589 = vmatpush.bf16.msra.mxu0 %v3384
  %3590 = vmatmul.bf16.gmra.mxu0 %v2989
  %v3591 = vpop.f32.mrf.mxu0
  %v3592 = vadd.f32 %v3579, %v3591
  %v3593 = vpop.f32.mrf.mxu0
  %3594 = vdwg.mxu0
  %v3595 = vxor.u32 %v3514, 2147483648
  %v3596 = vxor.u32 %v3553, 2147483648
  %v3597 = vxor.u32 %v3592, 2147483648
  %v3598 = vmul.f32 %v3595, 1.442695
  %v3599 = vpow.pop %v3598
  %v3600 = vmul.f32 %v3596, 1.442695
  %v3601 = vpow.pop %v3600
  %v3602 = vmul.f32 %v3597, 1.442695
  %v3603 = vpow.pop %v3602
  %v3604 = vadd.f32 %v3599, 1.0
  %v3605 = vadd.f32 %v3601, 1.0
  %v3606 = vadd.f32 %v3603, 1.0
  %v3607 = vrcp.pop %v3604
  %v3608 = vmul.f32 %v3604, %v3607
  %v3609 = vsub.f32 1.0, %v3608
  %v3610 = vmul.f32 %v3607, %v3609
  %v3611 = vadd.f32 %v3607, %v3610
  %vm3612 = vweird.f32 %v3604
  %vm3613 = vweird.f32 %v3607
  %vm3614 = vmor %vm3612, %vm3613
  %v3615 = vsel %vm3614, %v3607, %v3611
  %v3616 = vand.u32 2147483647, %v3604
  %vm3617 = vcmp.eq.f32.partialorder %v3616, 8.507059e+37
  %v3618 = vand.u32 %v3604, 2147483648
  %v3619 = vor.u32 1.1754944e-38, %v3618
  %v3620 = vsel %vm3617, %v3619, %v3615
  %v3621 = vmul.f32 1.0, %v3620
  %v3622 = vrcp.pop %v3605
  %v3623 = vmul.f32 %v3605, %v3622
  %v3624 = vsub.f32 1.0, %v3623
  %v3625 = vmul.f32 %v3622, %v3624
  %v3626 = vadd.f32 %v3622, %v3625
  %vm3627 = vweird.f32 %v3605
  %vm3628 = vweird.f32 %v3622
  %vm3629 = vmor %vm3627, %vm3628
  %v3630 = vsel %vm3629, %v3622, %v3626
  %v3631 = vand.u32 2147483647, %v3605
  %vm3632 = vcmp.eq.f32.partialorder %v3631, 8.507059e+37
  %v3633 = vand.u32 %v3605, 2147483648
  %v3634 = vor.u32 1.1754944e-38, %v3633
  %v3635 = vsel %vm3632, %v3634, %v3630
  %v3636 = vmul.f32 1.0, %v3635
  %v3637 = vrcp.pop %v3606
  %v3638 = vmul.f32 %v3606, %v3637
  %v3639 = vsub.f32 1.0, %v3638
  %v3640 = vmul.f32 %v3637, %v3639
  %v3641 = vadd.f32 %v3637, %v3640
  %vm3642 = vweird.f32 %v3606
  %vm3643 = vweird.f32 %v3637
  %vm3644 = vmor %vm3642, %vm3643
  %v3645 = vsel %vm3644, %v3637, %v3641
  %v3646 = vand.u32 2147483647, %v3606
  %vm3647 = vcmp.eq.f32.partialorder %v3646, 8.507059e+37
  %v3648 = vand.u32 %v3606, 2147483648
  %v3649 = vor.u32 1.1754944e-38, %v3648
  %v3650 = vsel %vm3647, %v3649, %v3645
  %v3651 = vmul.f32 1.0, %v3650
  %v3652 = vld [vmem:[%s10] sm:$0x7]
  %v3654 = vperm.slane %v3652, 0
  %v3655 = vperm.slane %v3652, 1
  %v3656 = vperm.slane %v3652, 2
  %v3660 = vmul.f32 %v3621, %v3654
  %v3661 = vmul.f32 %v3636, %v3655
  %v3662 = vmul.f32 %v3651, %v3656
  %vm3663 = vcmask 1041408
  %v3664 = vsel %vm3663, %v3660, 0.0
  %v3665 = vsel %vm3663, %v3661, 0.0
  %v3666 = vadd.f32 %v3664, %v3665
  %v3667 = vsel %vm3663, %v3662, 0.0
  %v3668 = vadd.f32 %v3666, %v3667
  %3669 = vadd.xlane.f32.xlu0 %v3668
  %v3670 = vpop.xlane.xlu0 %3669
  %v3671 = vld [vmem:[#allocation2] sm:$0x1]
  %v3673 = vperm.slane %v3671, 0
  %v3675 = vadd.f32 %v3670, %v3673
  %v3676 = vxor.u32 %v3675, 2147483648
  %v3677 = vmul.f32 %v3676, 1.442695
  %v3678 = vpow.pop %v3677
  %v3679 = vadd.f32 %v3678, 1.0
  %v3680 = vrcp.pop %v3679
  %v3681 = vmul.f32 %v3679, %v3680
  %v3682 = vsub.f32 1.0, %v3681
  %v3683 = vmul.f32 %v3680, %v3682
  %v3684 = vadd.f32 %v3680, %v3683
  %vm3685 = vweird.f32 %v3679
  %vm3686 = vweird.f32 %v3680
  %vm3687 = vmor %vm3685, %vm3686
  %v3688 = vsel %vm3687, %v3680, %v3684
  %v3689 = vand.u32 2147483647, %v3679
  %vm3690 = vcmp.eq.f32.partialorder %v3689, 8.507059e+37
  %v3691 = vand.u32 %v3679, 2147483648
  %v3692 = vor.u32 1.1754944e-38, %v3691
  %v3693 = vsel %vm3690, %v3692, %v3688
  %v3694 = vmul.f32 1.0, %v3693
  %vm3695 = vcmask 1024
  %3696 = vst.msk [vmem:[%s12] sm:$0x3] %vm3695, %v3694
  // Predicated region
  $region50: #{suggestion_classifier.1} parent=0 // pred_check
    _
  $region51: #{suggestion_classifier.1} parent=0 // pred_check_branch
    %3698 = sbr.rel (0) target = $region53
  $region52: #{suggestion_classifier.1} parent=0 // pred_region
    _
  $region53: #{suggestion_classifier.1} parent=0 // pred_fallthru
    _
  // Predicated region
  $region54: #{suggestion_classifier.1} parent=0 // pred_check
    _
  $region55: #{suggestion_classifier.1} parent=0 // pred_check_branch
    %3700 = sbr.rel (0) target = $region57
  $region56: #{suggestion_classifier.1} parent=0 // pred_region
    _
  $region57: #{suggestion_classifier.1} parent=0 // pred_fallthru
    _

</llo_original>
